<compile_context>
chip_gen: v7x
topology: tpu7x:2x2x1
jax: 0.10.0
libtpu: 0.0.40
codegen_flags: <defaults>
</compile_context>

<pallas_src>
import functools

import numpy as np
import jax
import jax.numpy as jnp
from jax.experimental import pallas as pl
from jax.experimental.pallas import tpu as pltpu


def _round_up(x, m):
    return ((x + m - 1) // m) * m


def _pad_channels(c):
    """Lane-dense channel padding: 128 for small, 256-multiples for large."""
    return 128 if c <= 128 else _round_up(c, 256)


# ---------------------------------------------------------------------------
# Fused BottleNeck kernel
# ---------------------------------------------------------------------------
def _make_bottleneck_kernel(W, Mr, use_res):
    """W: spatial width, Mr = th*(W+2) output rows per band, use_res: shortcut."""
    Wp = W + 2

    def kernel(xb_ref, mask_ref, w1_ref, s1_ref, b1_ref,
               w2_ref, s2_ref, b2_ref, *rest):
        if use_res:
            res_ref, o_ref, y1_ref = rest
        else:
            o_ref, y1_ref = rest

        # ---- conv1 (1x1) + folded BN1 + SiLU on the full halo band --------
        # Only at j == 0; the result persists in the y1 VMEM scratch across
        # the (arbitrary) Cout-block axis.
        @pl.when(pl.program_id(1) == 0)
        def _():
            z = jnp.dot(xb_ref[...], w1_ref[...],
                        preferred_element_type=jnp.float32)
            z = z * s1_ref[...] + b1_ref[...]
            z = z * jax.nn.sigmoid(z)                       # SiLU
            # conv2 must see ZERO-padded y1, not conv1(zero-padded x):
            # mask is 0 at spatial-padding positions, 1 elsewhere.
            y1_ref[...] = (z * mask_ref[...]).astype(y1_ref.dtype)

        # ---- conv2 (3x3, stride 1, pad 1): 9 constant-offset matmuls -------
        tn = o_ref.shape[-1]
        acc = jnp.zeros((Mr, tn), jnp.float32)
        for kh in range(3):
            for kw in range(3):
                tap = y1_ref[pl.ds(kh * Wp + kw, Mr), :]     # [Mr, Cp] bf16
                acc = acc + jnp.dot(tap, w2_ref[kh * 3 + kw],
                                    preferred_element_type=jnp.float32)

        # ---- folded BN2 + SiLU (+ fused residual) epilogue -----------------
        y = acc * s2_ref[...] + b2_ref[...]
        y = y * jax.nn.sigmoid(y)
        if use_res:
            y = y + res_ref[...]
        o_ref[...] = y.astype(o_ref.dtype)

    return kernel


# ---------------------------------------------------------------------------
# Wrapper: layout prep (all small, single-pass), pallas_call, unpack
# ---------------------------------------------------------------------------
def bottleneck_forward(x_nchw, params, *, shortcut=True, eps=1e-5,
                       rows_per_band=512):
    """BottleNeck.forward: x + conv2(conv1(x)) (eval-mode BN folded)."""
    N, Cin, H, W = x_nchw.shape
    Cmid = params["w1"].shape[0]
    Cout = params["w2"].shape[0]
    use_res = bool(shortcut) and (Cin == Cout)

    # ---- static geometry ---------------------------------------------------
    Wp = W + 2                                    # padded row width
    th = max(1, min(H, max(8, rows_per_band // Wp)))   # image rows per band
    HB = -(-H // th)                              # bands per image
    T = N * HB                                    # grid "band" axis
    Mr = th * Wp                                  # matmul rows per band
    R = (th + 3) * Wp                             # halo band rows (>= Mr+2*Wp+2)
    PH = HB * th + 3                              # padded image height we build

    CXP = _round_up(Cin, 128)                     # conv1 K (lane dim of x)
    Cp = _pad_channels(Cmid)                      # mid channels (lane dense)
    Np = _pad_channels(Cout)                      # out channels (lane dense)
    tn = min(Np, 256)
    J = Np // tn

    x_nhwc = jnp.transpose(x_nchw, (0, 2, 3, 1))  # NCHW -> NHWC

    # ---- overlapped halo layout of x: [T, R, CXP] bf16 ---------------------
    xpad = jnp.pad(x_nhwc.astype(jnp.bfloat16),
                   ((0, 0), (1, PH - 1 - H), (1, 1), (0, CXP - Cin)))
    bands = [xpad[:, hb * th: hb * th + th + 3] for hb in range(HB)]
    xb = jnp.stack(bands, axis=1).reshape(T, R, CXP)

    # ---- spatial-validity mask per band: [T, R, 1] f32 (static numpy) ------
    rr = np.arange(R)
    hh_loc = rr // Wp
    wc = rr % Wp
    mask_np = np.zeros((HB, R, 1), np.float32)
    for hb in range(HB):
        ghh = hb * th + hh_loc                    # padded-image row index
        mask_np[hb, :, 0] = ((ghh >= 1) & (ghh <= H) & (wc >= 1) & (wc <= W))
    mask = jnp.asarray(np.tile(mask_np, (N, 1, 1)))

    # ---- weights + folded eval-mode BatchNorm ------------------------------
    w1 = params["w1"].reshape(Cmid, Cin).T                      # [Cin, Cmid]
    w1 = jnp.pad(w1, ((0, CXP - Cin), (0, Cp - Cmid))).astype(jnp.bfloat16)
    inv1 = 1.0 / jnp.sqrt(params["v1"] + eps)
    s1 = jnp.pad(params["g1"] * inv1, (0, Cp - Cmid)).reshape(1, Cp)
    b1 = jnp.pad(params["b1"] - params["m1"] * params["g1"] * inv1,
                 (0, Cp - Cmid)).reshape(1, Cp)

    w2 = jnp.transpose(params["w2"], (2, 3, 1, 0)).reshape(9, Cmid, Cout)
    w2 = jnp.pad(w2, ((0, 0), (0, Cp - Cmid),
                      (0, Np - Cout))).astype(jnp.bfloat16)
    inv2 = 1.0 / jnp.sqrt(params["v2"] + eps)
    s2 = jnp.pad(params["g2"] * inv2, (0, Np - Cout)).reshape(1, Np)
    b2 = jnp.pad(params["b2"] - params["m2"] * params["g2"] * inv2,
                 (0, Np - Cout)).reshape(1, Np)

    s1, b1 = s1.astype(jnp.float32), b1.astype(jnp.float32)
    s2, b2 = s2.astype(jnp.float32), b2.astype(jnp.float32)

    args = [xb, mask, w1, s1, b1, w2, s2, b2]
    in_specs = [
        pl.BlockSpec((None, R, CXP), lambda t, j: (t, 0, 0)),   # x halo band
        pl.BlockSpec((None, R, 1), lambda t, j: (t, 0, 0)),     # validity mask
        pl.BlockSpec((CXP, Cp), lambda t, j: (0, 0)),           # w1
        pl.BlockSpec((1, Cp), lambda t, j: (0, 0)),             # bn1 scale
        pl.BlockSpec((1, Cp), lambda t, j: (0, 0)),             # bn1 shift
        pl.BlockSpec((9, Cp, tn), lambda t, j: (0, 0, j)),      # w2 (9 taps)
        pl.BlockSpec((1, tn), lambda t, j: (0, j)),             # bn2 scale
        pl.BlockSpec((1, tn), lambda t, j: (0, j)),             # bn2 shift
    ]
    if use_res:
        # Residual x in the padded-row output layout [T, Mr, Np] (f32).
        res = jnp.pad(x_nhwc, ((0, 0), (0, HB * th - H), (0, 2),
                               (0, Np - Cout))).astype(jnp.float32)
        res = res.reshape(T, Mr, Np)
        args.append(res)
        in_specs.append(pl.BlockSpec((None, Mr, tn), lambda t, j: (t, 0, j)))

    kernel = _make_bottleneck_kernel(W, Mr, use_res)

    # ---- explicit VMEM sizing (v7x has only 64 MiB / TC) -------------------
    fp = 2 * (R * CXP * 2 + R * 4 + CXP * Cp * 2 + 2 * Cp * 4
              + 9 * Cp * tn * 2 + 2 * tn * 4 + Mr * tn * 2
              + (Mr * tn * 4 if use_res else 0))
    fp += R * Cp * 2 + Mr * tn * 4                 # y1 scratch + live acc
    vmem_limit = int(min(56 * 1024 * 1024, max(24 * 1024 * 1024, 2 * fp)))

    out = pl.pallas_call(
        kernel,
        out_shape=jax.ShapeDtypeStruct((T, Mr, Np), jnp.bfloat16),
        grid_spec=pltpu.PrefetchScalarGridSpec(
            num_scalar_prefetch=0,
            grid=(T, J),
            in_specs=in_specs,
            out_specs=pl.BlockSpec((None, Mr, tn), lambda t, j: (t, 0, j)),
            scratch_shapes=[pltpu.VMEM((R, Cp), jnp.bfloat16)],   # y1 band
        ),
        compiler_params=pltpu.CompilerParams(
            dimension_semantics=("parallel", "arbitrary"),
            vmem_limit_bytes=vmem_limit,
        ),
        cost_estimate=pl.CostEstimate(
            flops=2 * T * (R * CXP * Cp + J * 9 * Mr * Cp * tn),
            transcendentals=T * (R * Cp + J * Mr * tn),
            bytes_accessed=(T * R * CXP * 2 + T * Mr * Np * 2
                            + T * J * 9 * Cp * tn * 2
                            + (T * Mr * Np * 4 if use_res else 0)),
        ),
    )(*args)

    # ---- unpack: [T, Mr, Np] -> [N, H, W, Cout] -> NCHW ---------------------
    y = out.reshape(N, HB * th, Wp, Np)[:, :H, :W, :Cout]
    return jnp.transpose(y, (0, 3, 1, 2)).astype(x_nchw.dtype)


# ---------------------------------------------------------------------------
# Pure-JAX reference (sanity check)
# ---------------------------------------------------------------------------
def _conv_bn_silu_ref(x, w, g, b, m, v, *, stride, pad, eps=1e-5):
    y = jax.lax.conv_general_dilated(
        x, w, window_strides=(stride, stride),
        padding=((pad, pad), (pad, pad)),
        dimension_numbers=("NCHW", "OIHW", "NCHW"))
    inv_std = 1.0 / jnp.sqrt(v + eps)
    y = y * (g * inv_std).reshape(1, -1, 1, 1) \
        + (b - m * g * inv_std).reshape(1, -1, 1, 1)
    return y * jax.nn.sigmoid(y)


def bottleneck_ref(x, params, *, shortcut=True, eps=1e-5):
    y = _conv_bn_silu_ref(x, params["w1"], params["g1"], params["b1"],
                          params["m1"], params["v1"], stride=1, pad=0, eps=eps)
    y = _conv_bn_silu_ref(y, params["w2"], params["g2"], params["b2"],
                          params["m2"], params["v2"], stride=1, pad=1, eps=eps)
    if shortcut and x.shape[1] == y.shape[1]:
        y = x + y
    return y


if __name__ == "__main__":
    # BottleNeck(ch_in=4, ch_out=4, ch_=8, shortcut=True) -> residual active
    ch_in, ch_out, ch_ = 4, 4, 8
    N, H, W = 2, 16, 16

    key = jax.random.PRNGKey(0)
    keys = jax.random.split(key, 11)

    x = jax.random.normal(keys[0], (N, ch_in, H, W), dtype=jnp.float32)

    params = dict(
        w1=jax.random.normal(keys[1], (ch_, ch_in, 1, 1), jnp.float32) * 0.1,
        g1=jax.random.uniform(keys[2], (ch_,), minval=0.5, maxval=1.5),
        b1=jax.random.normal(keys[3], (ch_,)) * 0.1,
        m1=jax.random.normal(keys[4], (ch_,)) * 0.1,
        v1=jax.random.uniform(keys[5], (ch_,), minval=0.5, maxval=1.5),
        w2=jax.random.normal(keys[6], (ch_out, ch_, 3, 3), jnp.float32) * 0.1,
        g2=jax.random.uniform(keys[7], (ch_out,), minval=0.5, maxval=1.5),
        b2=jax.random.normal(keys[8], (ch_out,)) * 0.1,
        m2=jax.random.normal(keys[9], (ch_out,)) * 0.1,
        v2=jax.random.uniform(keys[10], (ch_out,), minval=0.5, maxval=1.5),
    )

    ref = bottleneck_ref(x, params, shortcut=True)
    ref_nosc = bottleneck_ref(x, params, shortcut=False)

    def _check(out, want, tag):
        assert out.shape == want.shape, (tag, out.shape, want.shape)
        max_err = float(jnp.max(jnp.abs(out - want)))
        assert jnp.allclose(out, want, atol=6e-2, rtol=5e-2), \
            f"{tag}: mismatch vs reference, max|err|={max_err}"

    # 1) main path: shortcut fused into the epilogue (single band per image)
    fwd = jax.jit(functools.partial(bottleneck_forward, shortcut=True))
    out = jax.block_until_ready(fwd(x, params))
    _check(out, ref, "shortcut")

    # 2) multi-band path: force HB >= 2 to exercise the halo-band machinery
    fwd_mb = jax.jit(functools.partial(bottleneck_forward, shortcut=True,
                                       rows_per_band=128))
    out_mb = jax.block_until_ready(fwd_mb(x, params))
    _check(out_mb, ref, "shortcut/multi-band")

    # 3) no-shortcut kernel variant
    fwd_ns = jax.jit(functools.partial(bottleneck_forward, shortcut=False))
    out_ns = jax.block_until_ready(fwd_ns(x, params))
    _check(out_ns, ref_nosc, "no-shortcut")

    print("KERNEL_OK")
</pallas_src>

<mosaic_0001>
module attributes {stable_mosaic.version = 11 : i64} {
  func.func @kernel(%arg0: i32, %arg1: i32, %arg2: memref<1x342x128xbf16, #tpu.memory_space<vmem>>, %arg3: memref<1x342x1xf32, #tpu.memory_space<vmem>>, %arg4: memref<128x128xbf16, #tpu.memory_space<vmem>>, %arg5: memref<1x128xf32, #tpu.memory_space<vmem>>, %arg6: memref<1x128xf32, #tpu.memory_space<vmem>>, %arg7: memref<9x128x128xbf16, #tpu.memory_space<vmem>>, %arg8: memref<1x128xf32, #tpu.memory_space<vmem>>, %arg9: memref<1x128xf32, #tpu.memory_space<vmem>>, %arg10: memref<1x288x128xf32, #tpu.memory_space<vmem>>, %arg11: memref<1x288x128xbf16, #tpu.memory_space<vmem>>, %arg12: memref<342x128xbf16, #tpu.memory_space<vmem>>) attributes {dimension_semantics = [#tpu.dimension_semantics<parallel>, #tpu.dimension_semantics<arbitrary>], iteration_bounds = array<i64: 2, 1>, scalar_prefetch = 0 : i64, scratch_operands = 1 : i64, tpu.core_type = #tpu.core_type<tc>, window_params = [{transform_indices = @transform_0, window_bounds = array<i64: 1, 342, 128>}, {transform_indices = @transform_1, window_bounds = array<i64: 1, 342, 1>}, {pipeline_mode = #tpu.pipeline_mode<synchronous>, transform_indices = @transform_2, window_bounds = array<i64: 128, 128>}, {pipeline_mode = #tpu.pipeline_mode<synchronous>, transform_indices = @transform_3, window_bounds = array<i64: 1, 128>}, {pipeline_mode = #tpu.pipeline_mode<synchronous>, transform_indices = @transform_4, window_bounds = array<i64: 1, 128>}, {transform_indices = @transform_5, window_bounds = array<i64: 9, 128, 128>}, {transform_indices = @transform_6, window_bounds = array<i64: 1, 128>}, {transform_indices = @transform_7, window_bounds = array<i64: 1, 128>}, {transform_indices = @transform_8, window_bounds = array<i64: 1, 288, 128>}, {transform_indices = @transform_9, window_bounds = array<i64: 1, 288, 128>}]} {
    %c0_i32 = arith.constant 0 : i32
    %0 = arith.cmpi eq, %arg1, %c0_i32 : i32
    %1 = arith.extui %0 : i1 to i32
    %c0_i32_0 = arith.constant 0 : i32
    %2 = arith.cmpi ne, %1, %c0_i32_0 : i32
    scf.if %2 {
      %c0_51 = arith.constant 0 : index
      %c0_52 = arith.constant 0 : index
      %c0_53 = arith.constant 0 : index
      %68 = vector.load %arg2[%c0_51, %c0_52, %c0_53] : memref<1x342x128xbf16, #tpu.memory_space<vmem>>, vector<1x342x128xbf16>
      %69 = vector.shape_cast %68 : vector<1x342x128xbf16> to vector<342x128xbf16>
      %c0_54 = arith.constant 0 : index
      %c0_55 = arith.constant 0 : index
      %70 = vector.load %arg4[%c0_54, %c0_55] : memref<128x128xbf16, #tpu.memory_space<vmem>>, vector<128x128xbf16>
      %cst_56 = arith.constant dense<0.000000e+00> : vector<342x128xf32>
      %71 = tpu.matmul %69, %70, %cst_56 {dimension_numbers = #tpu.dot_dimension_numbers<[1], [0], [0], [1], [0, 0, 1, 1], [], []>} : vector<342x128xbf16>, vector<128x128xbf16>, vector<342x128xf32> -> vector<342x128xf32>
      %c0_57 = arith.constant 0 : index
      %c0_58 = arith.constant 0 : index
      %72 = vector.load %arg5[%c0_57, %c0_58] : memref<1x128xf32, #tpu.memory_space<vmem>>, vector<1x128xf32>
      %73 = vector.broadcast %72 : vector<1x128xf32> to vector<342x128xf32>
      %74 = arith.mulf %71, %73 : vector<342x128xf32>
      %c0_59 = arith.constant 0 : index
      %c0_60 = arith.constant 0 : index
      %75 = vector.load %arg6[%c0_59, %c0_60] : memref<1x128xf32, #tpu.memory_space<vmem>>, vector<1x128xf32>
      %76 = vector.broadcast %75 : vector<1x128xf32> to vector<342x128xf32>
      %77 = arith.addf %74, %76 : vector<342x128xf32>
      %78 = arith.negf %77 : vector<342x128xf32>
      %79 = math.exp %78 : vector<342x128xf32>
      %cst_61 = arith.constant 1.000000e+00 : f32
      %80 = vector.broadcast %cst_61 : f32 to vector<342x128xf32>
      %81 = arith.addf %80, %79 : vector<342x128xf32>
      %82 = arith.divf %80, %81 : vector<342x128xf32>
      %83 = arith.mulf %77, %82 : vector<342x128xf32>
      %c0_62 = arith.constant 0 : index
      %c0_63 = arith.constant 0 : index
      %c0_64 = arith.constant 0 : index
      %84 = vector.load %arg3[%c0_62, %c0_63, %c0_64] : memref<1x342x1xf32, #tpu.memory_space<vmem>>, vector<1x342x1xf32>
      %85 = vector.shape_cast %84 : vector<1x342x1xf32> to vector<342x1xf32>
      %86 = vector.broadcast %85 : vector<342x1xf32> to vector<342x128xf32>
      %87 = arith.mulf %83, %86 : vector<342x128xf32>
      %88 = arith.truncf %87 : vector<342x128xf32> to vector<342x128xbf16>
      %c0_65 = arith.constant 0 : index
      %c0_66 = arith.constant 0 : index
      %89 = vector.load %arg12[%c0_65, %c0_66] : memref<342x128xbf16, #tpu.memory_space<vmem>>, vector<342x128xbf16>
      tpu.vector_store %arg12[%c0_65, %c0_66], %88 {strides = array<i32>} : memref<342x128xbf16, #tpu.memory_space<vmem>>, vector<342x128xbf16>,
    } else {
    }
    %cst = arith.constant 0.000000e+00 : f32
    %3 = vector.broadcast %cst : f32 to vector<288x128xf32>
    %c0 = arith.constant 0 : index
    %c0_1 = arith.constant 0 : index
    %4 = vector.load %arg12[%c0, %c0_1] : memref<342x128xbf16, #tpu.memory_space<vmem>>, vector<288x128xbf16>
    %c0_2 = arith.constant 0 : index
    %c0_3 = arith.constant 0 : index
    %c0_4 = arith.constant 0 : index
    %5 = vector.load %arg7[%c0_2, %c0_3, %c0_4] : memref<9x128x128xbf16, #tpu.memory_space<vmem>>, vector<1x128x128xbf16>
    %6 = vector.shape_cast %5 : vector<1x128x128xbf16> to vector<128x128xbf16>
    %cst_5 = arith.constant dense<0.000000e+00> : vector<288x128xf32>
    %7 = tpu.matmul %4, %6, %cst_5 {dimension_numbers = #tpu.dot_dimension_numbers<[1], [0], [0], [1], [0, 0, 1, 1], [], []>} : vector<288x128xbf16>, vector<128x128xbf16>, vector<288x128xf32> -> vector<288x128xf32>
    %8 = arith.addf %3, %7 : vector<288x128xf32>
    %c1 = arith.constant 1 : index
    %c0_6 = arith.constant 0 : index
    %9 = vector.load %arg12[%c1, %c0_6] : memref<342x128xbf16, #tpu.memory_space<vmem>>, vector<288x128xbf16>
    %c1_7 = arith.constant 1 : index
    %c0_8 = arith.constant 0 : index
    %c0_9 = arith.constant 0 : index
    %10 = vector.load %arg7[%c1_7, %c0_8, %c0_9] : memref<9x128x128xbf16, #tpu.memory_space<vmem>>, vector<1x128x128xbf16>
    %11 = vector.shape_cast %10 : vector<1x128x128xbf16> to vector<128x128xbf16>
    %cst_10 = arith.constant dense<0.000000e+00> : vector<288x128xf32>
    %12 = tpu.matmul %9, %11, %cst_10 {dimension_numbers = #tpu.dot_dimension_numbers<[1], [0], [0], [1], [0, 0, 1, 1], [], []>} : vector<288x128xbf16>, vector<128x128xbf16>, vector<288x128xf32> -> vector<288x128xf32>
    %13 = arith.addf %8, %12 : vector<288x128xf32>
    %c2 = arith.constant 2 : index
    %c0_11 = arith.constant 0 : index
    %14 = vector.load %arg12[%c2, %c0_11] : memref<342x128xbf16, #tpu.memory_space<vmem>>, vector<288x128xbf16>
    %c2_12 = arith.constant 2 : index
    %c0_13 = arith.constant 0 : index
    %c0_14 = arith.constant 0 : index
    %15 = vector.load %arg7[%c2_12, %c0_13, %c0_14] : memref<9x128x128xbf16, #tpu.memory_space<vmem>>, vector<1x128x128xbf16>
    %16 = vector.shape_cast %15 : vector<1x128x128xbf16> to vector<128x128xbf16>
    %cst_15 = arith.constant dense<0.000000e+00> : vector<288x128xf32>
    %17 = tpu.matmul %14, %16, %cst_15 {dimension_numbers = #tpu.dot_dimension_numbers<[1], [0], [0], [1], [0, 0, 1, 1], [], []>} : vector<288x128xbf16>, vector<128x128xbf16>, vector<288x128xf32> -> vector<288x128xf32>
    %18 = arith.addf %13, %17 : vector<288x128xf32>
    %c18 = arith.constant 18 : index
    %c0_16 = arith.constant 0 : index
    %19 = vector.load %arg12[%c18, %c0_16] : memref<342x128xbf16, #tpu.memory_space<vmem>>, vector<288x128xbf16>
    %c3 = arith.constant 3 : index
    %c0_17 = arith.constant 0 : index
    %c0_18 = arith.constant 0 : index
    %20 = vector.load %arg7[%c3, %c0_17, %c0_18] : memref<9x128x128xbf16, #tpu.memory_space<vmem>>, vector<1x128x128xbf16>
    %21 = vector.shape_cast %20 : vector<1x128x128xbf16> to vector<128x128xbf16>
    %cst_19 = arith.constant dense<0.000000e+00> : vector<288x128xf32>
    %22 = tpu.matmul %19, %21, %cst_19 {dimension_numbers = #tpu.dot_dimension_numbers<[1], [0], [0], [1], [0, 0, 1, 1], [], []>} : vector<288x128xbf16>, vector<128x128xbf16>, vector<288x128xf32> -> vector<288x128xf32>
    %23 = arith.addf %18, %22 : vector<288x128xf32>
    %c19 = arith.constant 19 : index
    %c0_20 = arith.constant 0 : index
    %24 = vector.load %arg12[%c19, %c0_20] : memref<342x128xbf16, #tpu.memory_space<vmem>>, vector<288x128xbf16>
    %c4 = arith.constant 4 : index
    %c0_21 = arith.constant 0 : index
    %c0_22 = arith.constant 0 : index
    %25 = vector.load %arg7[%c4, %c0_21, %c0_22] : memref<9x128x128xbf16, #tpu.memory_space<vmem>>, vector<1x128x128xbf16>
    %26 = vector.shape_cast %25 : vector<1x128x128xbf16> to vector<128x128xbf16>
    %cst_23 = arith.constant dense<0.000000e+00> : vector<288x128xf32>
    %27 = tpu.matmul %24, %26, %cst_23 {dimension_numbers = #tpu.dot_dimension_numbers<[1], [0], [0], [1], [0, 0, 1, 1], [], []>} : vector<288x128xbf16>, vector<128x128xbf16>, vector<288x128xf32> -> vector<288x128xf32>
    %28 = arith.addf %23, %27 : vector<288x128xf32>
    %c20 = arith.constant 20 : index
    %c0_24 = arith.constant 0 : index
    %29 = vector.load %arg12[%c20, %c0_24] : memref<342x128xbf16, #tpu.memory_space<vmem>>, vector<288x128xbf16>
    %c5 = arith.constant 5 : index
    %c0_25 = arith.constant 0 : index
    %c0_26 = arith.constant 0 : index
    %30 = vector.load %arg7[%c5, %c0_25, %c0_26] : memref<9x128x128xbf16, #tpu.memory_space<vmem>>, vector<1x128x128xbf16>
    %31 = vector.shape_cast %30 : vector<1x128x128xbf16> to vector<128x128xbf16>
    %cst_27 = arith.constant dense<0.000000e+00> : vector<288x128xf32>
    %32 = tpu.matmul %29, %31, %cst_27 {dimension_numbers = #tpu.dot_dimension_numbers<[1], [0], [0], [1], [0, 0, 1, 1], [], []>} : vector<288x128xbf16>, vector<128x128xbf16>, vector<288x128xf32> -> vector<288x128xf32>
    %33 = arith.addf %28, %32 : vector<288x128xf32>
    %c36 = arith.constant 36 : index
    %c0_28 = arith.constant 0 : index
    %34 = vector.load %arg12[%c36, %c0_28] : memref<342x128xbf16, #tpu.memory_space<vmem>>, vector<288x128xbf16>
    %c6 = arith.constant 6 : index
    %c0_29 = arith.constant 0 : index
    %c0_30 = arith.constant 0 : index
    %35 = vector.load %arg7[%c6, %c0_29, %c0_30] : memref<9x128x128xbf16, #tpu.memory_space<vmem>>, vector<1x128x128xbf16>
    %36 = vector.shape_cast %35 : vector<1x128x128xbf16> to vector<128x128xbf16>
    %cst_31 = arith.constant dense<0.000000e+00> : vector<288x128xf32>
    %37 = tpu.matmul %34, %36, %cst_31 {dimension_numbers = #tpu.dot_dimension_numbers<[1], [0], [0], [1], [0, 0, 1, 1], [], []>} : vector<288x128xbf16>, vector<128x128xbf16>, vector<288x128xf32> -> vector<288x128xf32>
    %38 = arith.addf %33, %37 : vector<288x128xf32>
    %c37 = arith.constant 37 : index
    %c0_32 = arith.constant 0 : index
    %39 = vector.load %arg12[%c37, %c0_32] : memref<342x128xbf16, #tpu.memory_space<vmem>>, vector<288x128xbf16>
    %c7 = arith.constant 7 : index
    %c0_33 = arith.constant 0 : index
    %c0_34 = arith.constant 0 : index
    %40 = vector.load %arg7[%c7, %c0_33, %c0_34] : memref<9x128x128xbf16, #tpu.memory_space<vmem>>, vector<1x128x128xbf16>
    %41 = vector.shape_cast %40 : vector<1x128x128xbf16> to vector<128x128xbf16>
    %cst_35 = arith.constant dense<0.000000e+00> : vector<288x128xf32>
    %42 = tpu.matmul %39, %41, %cst_35 {dimension_numbers = #tpu.dot_dimension_numbers<[1], [0], [0], [1], [0, 0, 1, 1], [], []>} : vector<288x128xbf16>, vector<128x128xbf16>, vector<288x128xf32> -> vector<288x128xf32>
    %43 = arith.addf %38, %42 : vector<288x128xf32>
    %c38 = arith.constant 38 : index
    %c0_36 = arith.constant 0 : index
    %44 = vector.load %arg12[%c38, %c0_36] : memref<342x128xbf16, #tpu.memory_space<vmem>>, vector<288x128xbf16>
    %c8 = arith.constant 8 : index
    %c0_37 = arith.constant 0 : index
    %c0_38 = arith.constant 0 : index
    %45 = vector.load %arg7[%c8, %c0_37, %c0_38] : memref<9x128x128xbf16, #tpu.memory_space<vmem>>, vector<1x128x128xbf16>
    %46 = vector.shape_cast %45 : vector<1x128x128xbf16> to vector<128x128xbf16>
    %cst_39 = arith.constant dense<0.000000e+00> : vector<288x128xf32>
    %47 = tpu.matmul %44, %46, %cst_39 {dimension_numbers = #tpu.dot_dimension_numbers<[1], [0], [0], [1], [0, 0, 1, 1], [], []>} : vector<288x128xbf16>, vector<128x128xbf16>, vector<288x128xf32> -> vector<288x128xf32>
    %48 = arith.addf %43, %47 : vector<288x128xf32>
    %c0_40 = arith.constant 0 : index
    %c0_41 = arith.constant 0 : index
    %49 = vector.load %arg8[%c0_40, %c0_41] : memref<1x128xf32, #tpu.memory_space<vmem>>, vector<1x128xf32>
    %50 = vector.broadcast %49 : vector<1x128xf32> to vector<288x128xf32>
    %51 = arith.mulf %48, %50 : vector<288x128xf32>
    %c0_42 = arith.constant 0 : index
    %c0_43 = arith.constant 0 : index
    %52 = vector.load %arg9[%c0_42, %c0_43] : memref<1x128xf32, #tpu.memory_space<vmem>>, vector<1x128xf32>
    %53 = vector.broadcast %52 : vector<1x128xf32> to vector<288x128xf32>
    %54 = arith.addf %51, %53 : vector<288x128xf32>
    %55 = arith.negf %54 : vector<288x128xf32>
    %56 = math.exp %55 : vector<288x128xf32>
    %cst_44 = arith.constant 1.000000e+00 : f32
    %57 = vector.broadcast %cst_44 : f32 to vector<288x128xf32>
    %58 = arith.addf %57, %56 : vector<288x128xf32>
    %59 = arith.divf %57, %58 : vector<288x128xf32>
    %60 = arith.mulf %54, %59 : vector<288x128xf32>
    %c0_45 = arith.constant 0 : index
    %c0_46 = arith.constant 0 : index
    %c0_47 = arith.constant 0 : index
    %61 = vector.load %arg10[%c0_45, %c0_46, %c0_47] : memref<1x288x128xf32, #tpu.memory_space<vmem>>, vector<1x288x128xf32>
    %62 = vector.shape_cast %61 : vector<1x288x128xf32> to vector<288x128xf32>
    %63 = arith.addf %60, %62 : vector<288x128xf32>
    %64 = arith.truncf %63 : vector<288x128xf32> to vector<288x128xbf16>
    %c0_48 = arith.constant 0 : index
    %c0_49 = arith.constant 0 : index
    %c0_50 = arith.constant 0 : index
    %65 = vector.load %arg11[%c0_48, %c0_49, %c0_50] : memref<1x288x128xbf16, #tpu.memory_space<vmem>>, vector<1x288x128xbf16>
    %66 = vector.shape_cast %65 : vector<1x288x128xbf16> to vector<288x128xbf16>
    %67 = vector.shape_cast %64 : vector<288x128xbf16> to vector<1x288x128xbf16>
    tpu.vector_store %arg11[%c0_48, %c0_49, %c0_50], %67 {strides = array<i32>} : memref<1x288x128xbf16, #tpu.memory_space<vmem>>, vector<1x288x128xbf16>,
    return
  }
  func.func @transform_0(%arg0: i32, %arg1: i32) -> (i32, i32, i32) {
    %c0_i32 = arith.constant 0 : i32
    %c0_i32_0 = arith.constant 0 : i32
    %c0_i32_1 = arith.constant 0 : i32
    return %arg0, %c0_i32, %c0_i32_0 : i32, i32, i32
  }
  func.func @transform_1(%arg0: i32, %arg1: i32) -> (i32, i32, i32) {
    %c0_i32 = arith.constant 0 : i32
    %c0_i32_0 = arith.constant 0 : i32
    %c0_i32_1 = arith.constant 0 : i32
    return %arg0, %c0_i32, %c0_i32_0 : i32, i32, i32
  }
  func.func @transform_2(%arg0: i32, %arg1: i32) -> (i32, i32) {
    %c0_i32 = arith.constant 0 : i32
    %c0_i32_0 = arith.constant 0 : i32
    %c0_i32_1 = arith.constant 0 : i32
    return %c0_i32, %c0_i32_0 : i32, i32
  }
  func.func @transform_3(%arg0: i32, %arg1: i32) -> (i32, i32) {
    %c0_i32 = arith.constant 0 : i32
    %c0_i32_0 = arith.constant 0 : i32
    %c0_i32_1 = arith.constant 0 : i32
    return %c0_i32, %c0_i32_0 : i32, i32
  }
  func.func @transform_4(%arg0: i32, %arg1: i32) -> (i32, i32) {
    %c0_i32 = arith.constant 0 : i32
    %c0_i32_0 = arith.constant 0 : i32
    %c0_i32_1 = arith.constant 0 : i32
    return %c0_i32, %c0_i32_0 : i32, i32
  }
  func.func @transform_5(%arg0: i32, %arg1: i32) -> (i32, i32, i32) {
    %c0_i32 = arith.constant 0 : i32
    %c0_i32_0 = arith.constant 0 : i32
    %c0_i32_1 = arith.constant 0 : i32
    return %c0_i32, %c0_i32_0, %arg1 : i32, i32, i32
  }
  func.func @transform_6(%arg0: i32, %arg1: i32) -> (i32, i32) {
    %c0_i32 = arith.constant 0 : i32
    %c0_i32_0 = arith.constant 0 : i32
    return %c0_i32, %arg1 : i32, i32
  }
  func.func @transform_7(%arg0: i32, %arg1: i32) -> (i32, i32) {
    %c0_i32 = arith.constant 0 : i32
    %c0_i32_0 = arith.constant 0 : i32
    return %c0_i32, %arg1 : i32, i32
  }
  func.func @transform_8(%arg0: i32, %arg1: i32) -> (i32, i32, i32) {
    %c0_i32 = arith.constant 0 : i32
    %c0_i32_0 = arith.constant 0 : i32
    return %arg0, %c0_i32, %arg1 : i32, i32, i32
  }
  func.func @transform_9(%arg0: i32, %arg1: i32) -> (i32, i32, i32) {
    %c0_i32 = arith.constant 0 : i32
    %c0_i32_0 = arith.constant 0 : i32
    return %arg0, %c0_i32, %arg1 : i32, i32, i32
  }
}

</mosaic_0001>

<llo_original>
// kernel: bottleneck_forward.1
$region0: #{bottleneck_forward.1}
  #allocation0 [shape = 'u32[]', space=smem, size = 0x4, offset = 0x4, fixed_abs, tag = 'smem constant byte address 0x4 - core index']
  #allocation1 [shape = 'u32[144,128]{1,0:T(1,128)}', space=vmem, size = 0x12000, scoped, tag = 'internal scratch']
  #allocation2 [shape = 'bf16[342,128]{1,0:T(8,128)(2,1)}', space=vmem, size = 0x15800, scoped, tag = 'scratch operand']
  %s0 = inlined_call_operand.vmem [shape: bf16[2,342,128], index: 0, kind: input, shape index: {}]
  %s1 = inlined_call_operand.vmem [shape: f32[2,342,1], index: 1, kind: input, shape index: {}]
  %s2 = inlined_call_operand.vmem [shape: bf16[128,128], index: 2, kind: input, shape index: {}]
  %s3 = inlined_call_operand.vmem [shape: f32[1,128], index: 3, kind: input, shape index: {}]
  %s4 = inlined_call_operand.vmem [shape: f32[1,128], index: 4, kind: input, shape index: {}]
  %s5 = inlined_call_operand.vmem [shape: bf16[9,128,128], index: 5, kind: input, shape index: {}]
  %s6 = inlined_call_operand.vmem [shape: f32[1,128], index: 6, kind: input, shape index: {}]
  %s7 = inlined_call_operand.vmem [shape: f32[1,128], index: 7, kind: input, shape index: {}]
  %s8 = inlined_call_operand.vmem [shape: f32[2,288,128], index: 8, kind: input, shape index: {}]
  %s9 = inlined_call_operand.vmem [shape: bf16[2,288,128], index: 9, kind: output, shape index: {}]
  %s10 = sld [smem:[#allocation0]]
  $region73: #{bottleneck_forward.1} parent=0
    _
  %s12 = ssub.s32 1, %s10
  %s13 = scalar_select 0, %s12, %s10
  loop: start=0, step=1, limit=4
  $region2: #{bottleneck_forward.1} parent=0 // loop_pre_header
    _
  $region3: #{bottleneck_forward.1} parent=0 // loop_header
    %s15 = sphi 0, %s19
    %p16 = scmp.ge.s32.totalorder %s15, 4
    %s22 = sphi 0, %s34
    %s23 = sphi 0, %s30
    %s24 = sphi 0, %s22
    %s25 = sphi 0, %s23
    %s26 = sphi 0, %s24
    %s27 = sphi 0, %s25
    %s37 = sphi 0, %s39
    %s40 = sphi 0, %s37
    %s41 = sphi 0, %s40
    %s57 = sphi 0, %s41
    %s63 = sphi 0, %s65
    %s66 = sphi 0, %s63
    %s67 = sphi 0, %s66
    %s83 = sphi 0, %s67
    %s87 = sphi 0, %s87
    %s89 = sphi 0, %s87
    %s90 = sphi 0, %s89
    %s104 = sphi 0, %s90
    %s108 = sphi 0, %s108
    %s110 = sphi 0, %s108
    %s111 = sphi 0, %s110
    %s125 = sphi 0, %s111
    %s129 = sphi 0, %s129
    %s131 = sphi 0, %s129
    %s132 = sphi 0, %s131
    %s146 = sphi 0, %s132
    %s152 = sphi 0, %s154
    %s155 = sphi 0, %s152
    %s156 = sphi 0, %s155
    %s172 = sphi 0, %s156
    %s178 = sphi 0, %s180
    %s181 = sphi 0, %s178
    %s182 = sphi 0, %s181
    %s198 = sphi 0, %s182
    %s204 = sphi 0, %s206
    %s207 = sphi 0, %s204
    %s208 = sphi 0, %s207
    %s224 = sphi 0, %s208
    %s232 = sphi 0, %s234
    %s235 = sphi 0, %s232
    %s236 = sphi 0, %s235
    %s252 = sphi 0, %s236
    %s260 = sphi 0, %s262
    %s263 = sphi 0, %s260
    %s264 = sphi 0, %s263
    %s280 = sphi 0, %s264
  $region4: #{bottleneck_forward.1} parent=0 // loop_header_branch
    %18 = sbr.rel (%p16) target = $region8
  $region5: #{bottleneck_forward.1} parent=0 // loop_body
    %s20 = ssub.s32 %s15, 1
    %s21 = ssub.s32 %s15, 2
    %s28 = sadd.s32 1, %s23
    %p29 = scmp.ge.s32.totalorder %s28, 1
    %s30 = scalar_select %p29, 0, %s28
    %s31 = sadd.s32 1, %s22
    %s32 = scalar_select %p29, %s31, %s22
    %p33 = scmp.ge.s32.totalorder %s32, 2
    %s34 = scalar_select %p33, 0, %s32
    %s35 = ssub.s32 %s22, %s34
    %p36 = scmp.eq.s32.totalorder %s35, 0
    %s38 = sadd.s32 %s37, 1
    %s39 = scalar_select %p36, %s37, %s38
    %p42 = pneg %p36
    %p43 = scmp.eq.s32.totalorder %s15, 1
    %p44 = por %p42, %p43
    %p45 = scmp.ne.s32.totalorder %s37, %s40
    %p46 = scmp.eq.s32.totalorder %s15, 0
    %p47 = por %p45, %p46
    %p48 = scmp.ne.s32.totalorder %s37, %s40
    %p49 = scmp.eq.s32.totalorder %s20, 1
    %p50 = por %p48, %p49
    %p51 = scmp.ne.s32.totalorder %s40, %s41
    %p52 = scmp.eq.s32.totalorder %s20, 0
    %p53 = por %p51, %p52
    %p54 = scmp.ne.s32.totalorder %s40, %s41
    %p55 = scmp.eq.s32.totalorder %s21, 1
    %p56 = por %p54, %p55
    %p58 = scmp.ne.s32.totalorder %s41, %s57
    %p59 = scmp.eq.s32.totalorder %s21, 0
    %p60 = por %p58, %p59
    %s61 = ssub.s32 %s22, %s34
    %p62 = scmp.eq.s32.totalorder %s61, 0
    %s64 = sadd.s32 %s63, 1
    %s65 = scalar_select %p62, %s63, %s64
    %p68 = pneg %p62
    %p69 = scmp.eq.s32.totalorder %s15, 1
    %p70 = por %p68, %p69
    %p71 = scmp.ne.s32.totalorder %s63, %s66
    %p72 = scmp.eq.s32.totalorder %s15, 0
    %p73 = por %p71, %p72
    %p74 = scmp.ne.s32.totalorder %s63, %s66
    %p75 = scmp.eq.s32.totalorder %s20, 1
    %p76 = por %p74, %p75
    %p77 = scmp.ne.s32.totalorder %s66, %s67
    %p78 = scmp.eq.s32.totalorder %s20, 0
    %p79 = por %p77, %p78
    %p80 = scmp.ne.s32.totalorder %s66, %s67
    %p81 = scmp.eq.s32.totalorder %s21, 1
    %p82 = por %p80, %p81
    %p84 = scmp.ne.s32.totalorder %s67, %s83
    %p85 = scmp.eq.s32.totalorder %s21, 0
    %p86 = por %p84, %p85
    %s88 = sadd.s32 %s87, 1
    %p91 = scmp.eq.s32.totalorder %s15, 1
    %p92 = scmp.ne.s32.totalorder %s87, %s89
    %p93 = scmp.eq.s32.totalorder %s15, 0
    %p94 = por %p92, %p93
    %p95 = scmp.ne.s32.totalorder %s87, %s89
    %p96 = scmp.eq.s32.totalorder %s20, 1
    %p97 = por %p95, %p96
    %p98 = scmp.ne.s32.totalorder %s89, %s90
    %p99 = scmp.eq.s32.totalorder %s20, 0
    %p100 = por %p98, %p99
    %p101 = scmp.ne.s32.totalorder %s89, %s90
    %p102 = scmp.eq.s32.totalorder %s21, 1
    %p103 = por %p101, %p102
    %p105 = scmp.ne.s32.totalorder %s90, %s104
    %p106 = scmp.eq.s32.totalorder %s21, 0
    %p107 = por %p105, %p106
    %s109 = sadd.s32 %s108, 1
    %p112 = scmp.eq.s32.totalorder %s15, 1
    %p113 = scmp.ne.s32.totalorder %s108, %s110
    %p114 = scmp.eq.s32.totalorder %s15, 0
    %p115 = por %p113, %p114
    %p116 = scmp.ne.s32.totalorder %s108, %s110
    %p117 = scmp.eq.s32.totalorder %s20, 1
    %p118 = por %p116, %p117
    %p119 = scmp.ne.s32.totalorder %s110, %s111
    %p120 = scmp.eq.s32.totalorder %s20, 0
    %p121 = por %p119, %p120
    %p122 = scmp.ne.s32.totalorder %s110, %s111
    %p123 = scmp.eq.s32.totalorder %s21, 1
    %p124 = por %p122, %p123
    %p126 = scmp.ne.s32.totalorder %s111, %s125
    %p127 = scmp.eq.s32.totalorder %s21, 0
    %p128 = por %p126, %p127
    %s130 = sadd.s32 %s129, 1
    %p133 = scmp.eq.s32.totalorder %s15, 1
    %p134 = scmp.ne.s32.totalorder %s129, %s131
    %p135 = scmp.eq.s32.totalorder %s15, 0
    %p136 = por %p134, %p135
    %p137 = scmp.ne.s32.totalorder %s129, %s131
    %p138 = scmp.eq.s32.totalorder %s20, 1
    %p139 = por %p137, %p138
    %p140 = scmp.ne.s32.totalorder %s131, %s132
    %p141 = scmp.eq.s32.totalorder %s20, 0
    %p142 = por %p140, %p141
    %p143 = scmp.ne.s32.totalorder %s131, %s132
    %p144 = scmp.eq.s32.totalorder %s21, 1
    %p145 = por %p143, %p144
    %p147 = scmp.ne.s32.totalorder %s132, %s146
    %p148 = scmp.eq.s32.totalorder %s21, 0
    %p149 = por %p147, %p148
    %s150 = ssub.s32 %s23, %s30
    %p151 = scmp.eq.s32.totalorder %s150, 0
    %s153 = sadd.s32 %s152, 1
    %s154 = scalar_select %p151, %s152, %s153
    %p157 = pneg %p151
    %p158 = scmp.eq.s32.totalorder %s15, 1
    %p159 = por %p157, %p158
    %p160 = scmp.ne.s32.totalorder %s152, %s155
    %p161 = scmp.eq.s32.totalorder %s15, 0
    %p162 = por %p160, %p161
    %p163 = scmp.ne.s32.totalorder %s152, %s155
    %p164 = scmp.eq.s32.totalorder %s20, 1
    %p165 = por %p163, %p164
    %p166 = scmp.ne.s32.totalorder %s155, %s156
    %p167 = scmp.eq.s32.totalorder %s20, 0
    %p168 = por %p166, %p167
    %p169 = scmp.ne.s32.totalorder %s155, %s156
    %p170 = scmp.eq.s32.totalorder %s21, 1
    %p171 = por %p169, %p170
    %p173 = scmp.ne.s32.totalorder %s156, %s172
    %p174 = scmp.eq.s32.totalorder %s21, 0
    %p175 = por %p173, %p174
    %s176 = ssub.s32 %s23, %s30
    %p177 = scmp.eq.s32.totalorder %s176, 0
    %s179 = sadd.s32 %s178, 1
    %s180 = scalar_select %p177, %s178, %s179
    %p183 = pneg %p177
    %p184 = scmp.eq.s32.totalorder %s15, 1
    %p185 = por %p183, %p184
    %p186 = scmp.ne.s32.totalorder %s178, %s181
    %p187 = scmp.eq.s32.totalorder %s15, 0
    %p188 = por %p186, %p187
    %p189 = scmp.ne.s32.totalorder %s178, %s181
    %p190 = scmp.eq.s32.totalorder %s20, 1
    %p191 = por %p189, %p190
    %p192 = scmp.ne.s32.totalorder %s181, %s182
    %p193 = scmp.eq.s32.totalorder %s20, 0
    %p194 = por %p192, %p193
    %p195 = scmp.ne.s32.totalorder %s181, %s182
    %p196 = scmp.eq.s32.totalorder %s21, 1
    %p197 = por %p195, %p196
    %p199 = scmp.ne.s32.totalorder %s182, %s198
    %p200 = scmp.eq.s32.totalorder %s21, 0
    %p201 = por %p199, %p200
    %s202 = ssub.s32 %s23, %s30
    %p203 = scmp.eq.s32.totalorder %s202, 0
    %s205 = sadd.s32 %s204, 1
    %s206 = scalar_select %p203, %s204, %s205
    %p209 = pneg %p203
    %p210 = scmp.eq.s32.totalorder %s15, 1
    %p211 = por %p209, %p210
    %p212 = scmp.ne.s32.totalorder %s204, %s207
    %p213 = scmp.eq.s32.totalorder %s15, 0
    %p214 = por %p212, %p213
    %p215 = scmp.ne.s32.totalorder %s204, %s207
    %p216 = scmp.eq.s32.totalorder %s20, 1
    %p217 = por %p215, %p216
    %p218 = scmp.ne.s32.totalorder %s207, %s208
    %p219 = scmp.eq.s32.totalorder %s20, 0
    %p220 = por %p218, %p219
    %p221 = scmp.ne.s32.totalorder %s207, %s208
    %p222 = scmp.eq.s32.totalorder %s21, 1
    %p223 = por %p221, %p222
    %p225 = scmp.ne.s32.totalorder %s208, %s224
    %p226 = scmp.eq.s32.totalorder %s21, 0
    %p227 = por %p225, %p226
    %s228 = ssub.s32 %s22, %s34
    %s229 = ssub.s32 %s23, %s30
    %s230 = sor.u32 %s228, %s229
    %p231 = scmp.eq.s32.totalorder %s230, 0
    %s233 = sadd.s32 %s232, 1
    %s234 = scalar_select %p231, %s232, %s233
    %p237 = pneg %p231
    %p238 = scmp.eq.s32.totalorder %s15, 1
    %p239 = por %p237, %p238
    %p240 = scmp.ne.s32.totalorder %s232, %s235
    %p241 = scmp.eq.s32.totalorder %s15, 0
    %p242 = por %p240, %p241
    %p243 = scmp.ne.s32.totalorder %s232, %s235
    %p244 = scmp.eq.s32.totalorder %s20, 1
    %p245 = por %p243, %p244
    %p246 = scmp.ne.s32.totalorder %s235, %s236
    %p247 = scmp.eq.s32.totalorder %s20, 0
    %p248 = por %p246, %p247
    %p249 = scmp.ne.s32.totalorder %s235, %s236
    %p250 = scmp.eq.s32.totalorder %s21, 1
    %p251 = por %p249, %p250
    %p253 = scmp.ne.s32.totalorder %s236, %s252
    %p254 = scmp.eq.s32.totalorder %s21, 0
    %p255 = por %p253, %p254
    %s256 = ssub.s32 %s22, %s34
    %s257 = ssub.s32 %s23, %s30
    %s258 = sor.u32 %s256, %s257
    %p259 = scmp.eq.s32.totalorder %s258, 0
    %s261 = sadd.s32 %s260, 1
    %s262 = scalar_select %p259, %s260, %s261
    %p265 = pneg %p259
    %p266 = scmp.eq.s32.totalorder %s15, 1
    %p267 = por %p265, %p266
    %p268 = scmp.ne.s32.totalorder %s260, %s263
    %p269 = scmp.eq.s32.totalorder %s15, 0
    %p270 = por %p268, %p269
    %p271 = scmp.ne.s32.totalorder %s260, %s263
    %p272 = scmp.eq.s32.totalorder %s20, 1
    %p273 = por %p271, %p272
    %p274 = scmp.ne.s32.totalorder %s263, %s264
    %p275 = scmp.eq.s32.totalorder %s20, 0
    %p276 = por %p274, %p275
    %p277 = scmp.ne.s32.totalorder %s263, %s264
    %p278 = scmp.eq.s32.totalorder %s21, 1
    %p279 = por %p277, %p278
    %p281 = scmp.ne.s32.totalorder %s264, %s280
    %p282 = scmp.eq.s32.totalorder %s21, 0
    %p283 = por %p281, %p282
    %p284 = scmp.le.s32.totalorder 1, %s15
    %p285 = scmp.lt.s32.totalorder %s15, 3
    %p286 = pnand %p284, %p285
    %p287 = pneg %p286
    // Predicated region
    $region9: #{bottleneck_forward.1} parent=5 // pred_check
      _
    $region10: #{bottleneck_forward.1} parent=5 // pred_check_branch
      %289 = sbr.rel (%p286) target = $region12
    $region11: #{bottleneck_forward.1} parent=5 // pred_region
      %s290 = ssub.s32 %s15, 1
      // Predicated region
      $region13: #{bottleneck_forward.1} parent=11 // pred_check
        %p291 = pneg %p100
      $region14: #{bottleneck_forward.1} parent=11 // pred_check_branch
        %293 = sbr.rel (%p291) target = $region16
      $region15: #{bottleneck_forward.1} parent=11 // pred_region
        _
      $region16: #{bottleneck_forward.1} parent=11 // pred_fallthru
        _
      // Predicated region
      $region17: #{bottleneck_forward.1} parent=11 // pred_check
        %p294 = pneg %p121
      $region18: #{bottleneck_forward.1} parent=11 // pred_check_branch
        %296 = sbr.rel (%p294) target = $region20
      $region19: #{bottleneck_forward.1} parent=11 // pred_region
        _
      $region20: #{bottleneck_forward.1} parent=11 // pred_fallthru
        _
      // Predicated region
      $region21: #{bottleneck_forward.1} parent=11 // pred_check
        %p297 = pneg %p142
      $region22: #{bottleneck_forward.1} parent=11 // pred_check_branch
        %299 = sbr.rel (%p297) target = $region24
      $region23: #{bottleneck_forward.1} parent=11 // pred_region
        _
      $region24: #{bottleneck_forward.1} parent=11 // pred_fallthru
        _
      // Predicated region
      $region25: #{bottleneck_forward.1} parent=11 // pred_check
        %p300 = pneg %p168
      $region26: #{bottleneck_forward.1} parent=11 // pred_check_branch
        %302 = sbr.rel (%p300) target = $region28
      $region27: #{bottleneck_forward.1} parent=11 // pred_region
        %p303 = scmp.lt.s32.totalorder %s25, 0
        %s304 = scalar_select %p303, %s25, 0
        %s305 = smul.addr %s304, 4
        %s306 = scalar_lea.vmem %s5, %s305
      $region28: #{bottleneck_forward.1} parent=11 // pred_fallthru
        _
      // Predicated region
      $region29: #{bottleneck_forward.1} parent=11 // pred_check
        %p307 = pneg %p194
      $region30: #{bottleneck_forward.1} parent=11 // pred_check_branch
        %309 = sbr.rel (%p307) target = $region32
      $region31: #{bottleneck_forward.1} parent=11 // pred_region
        %p310 = scmp.lt.s32.totalorder %s25, 0
        %s311 = scalar_select %p310, %s25, 0
        %s312 = scalar_lea.vmem %s6, %s311
      $region32: #{bottleneck_forward.1} parent=11 // pred_fallthru
        _
      // Predicated region
      $region33: #{bottleneck_forward.1} parent=11 // pred_check
        %p313 = pneg %p220
      $region34: #{bottleneck_forward.1} parent=11 // pred_check_branch
        %315 = sbr.rel (%p313) target = $region36
      $region35: #{bottleneck_forward.1} parent=11 // pred_region
        %p316 = scmp.lt.s32.totalorder %s25, 0
        %s317 = scalar_select %p316, %s25, 0
        %s318 = scalar_lea.vmem %s7, %s317
      $region36: #{bottleneck_forward.1} parent=11 // pred_fallthru
        _
    $region12: #{bottleneck_forward.1} parent=5 // pred_fallthru
      _
    %p319 = scmp.lt.s32.totalorder %s15, 2
    // Predicated region
    $region37: #{bottleneck_forward.1} parent=5 // pred_check
      %p320 = pneg %p319
    $region38: #{bottleneck_forward.1} parent=5 // pred_check_branch
      %322 = sbr.rel (%p320) target = $region40
    $region39: #{bottleneck_forward.1} parent=5 // pred_region
      // Predicated region
      $region41: #{bottleneck_forward.1} parent=39 // pred_check
        %p323 = pneg %p47
      $region42: #{bottleneck_forward.1} parent=39 // pred_check_branch
        %325 = sbr.rel (%p323) target = $region44
      $region43: #{bottleneck_forward.1} parent=39 // pred_region
        %p326 = scmp.lt.s32.totalorder %s22, 1
        %s327 = scalar_select %p326, %s22, 1
        %s328 = smul.addr %s327, 43
        %s329 = smul.addr %s328, 4
        %s330 = scalar_lea.vmem %s0, %s329
      $region44: #{bottleneck_forward.1} parent=39 // pred_fallthru
        _
      // Predicated region
      $region45: #{bottleneck_forward.1} parent=39 // pred_check
        %p331 = pneg %p73
      $region46: #{bottleneck_forward.1} parent=39 // pred_check_branch
        %333 = sbr.rel (%p331) target = $region48
      $region47: #{bottleneck_forward.1} parent=39 // pred_region
        %p334 = scmp.lt.s32.totalorder %s22, 1
        %s335 = scalar_select %p334, %s22, 1
        %s336 = smul.addr %s335, 43
        %s337 = smul.addr %s336, 8
        %s338 = scalar_lea.vmem %s1, %s337
      $region48: #{bottleneck_forward.1} parent=39 // pred_fallthru
        _
      // Predicated region
      $region49: #{bottleneck_forward.1} parent=39 // pred_check
        %p339 = pneg %p242
      $region50: #{bottleneck_forward.1} parent=39 // pred_check_branch
        %341 = sbr.rel (%p339) target = $region52
      $region51: #{bottleneck_forward.1} parent=39 // pred_region
        %p342 = scmp.lt.s32.totalorder %s22, 1
        %s343 = scalar_select %p342, %s22, 1
        %p344 = scmp.lt.s32.totalorder %s23, 0
        %s345 = scalar_select %p344, %s23, 0
        %s346 = smul.addr %s343, 36
        %s347 = sadd.s32 %s345, %s346
        %s348 = smul.addr %s347, 8
        %s349 = scalar_lea.vmem %s8, %s348
      $region52: #{bottleneck_forward.1} parent=39 // pred_fallthru
        _
    $region40: #{bottleneck_forward.1} parent=5 // pred_fallthru
      _
    %p350 = scmp.le.s32.totalorder 1, %s15
    %p351 = scmp.lt.s32.totalorder %s15, 3
    %p352 = pnand %p350, %p351
    %p353 = pneg %p352
    // Predicated region
    $region53: #{bottleneck_forward.1} parent=5 // pred_check
      _
    $region54: #{bottleneck_forward.1} parent=5 // pred_check_branch
      %355 = sbr.rel (%p352) target = $region56
    $region55: #{bottleneck_forward.1} parent=5 // pred_region
      %s356 = ssub.s32 %s15, 1
      %p357 = scmp.lt.s32.totalorder %s24, 1
      %s358 = scalar_select %p357, %s24, 1
      %s359 = smul.addr %s358, 43
      %s360 = smul.addr %s359, 4
      %s361 = scalar_lea.vmem %s0, %s360
      %p362 = pneg %p53
      %p363 = pneg %p50
      %p364 = scmp.lt.s32.totalorder %s24, 1
      %s365 = scalar_select %p364, %s24, 1
      %s366 = smul.addr %s365, 43
      %s367 = smul.addr %s366, 8
      %s368 = scalar_lea.vmem %s1, %s367
      %p369 = pneg %p79
      %p370 = pneg %p76
      %p371 = pneg %p100
      %p372 = pneg %p97
      %p373 = pneg %p121
      %p374 = pneg %p118
      %p375 = pneg %p142
      %p376 = pneg %p139
      %p377 = scmp.lt.s32.totalorder %s25, 0
      %s378 = scalar_select %p377, %s25, 0
      %s379 = smul.addr %s378, 4
      %s380 = scalar_lea.vmem %s5, %s379
      %p381 = pneg %p168
      %p382 = pneg %p165
      %p383 = scmp.lt.s32.totalorder %s25, 0
      %s384 = scalar_select %p383, %s25, 0
      %s385 = scalar_lea.vmem %s6, %s384
      %p386 = pneg %p194
      %p387 = pneg %p191
      %p388 = scmp.lt.s32.totalorder %s25, 0
      %s389 = scalar_select %p388, %s25, 0
      %s390 = scalar_lea.vmem %s7, %s389
      %p391 = pneg %p220
      %p392 = pneg %p217
      %p393 = scmp.lt.s32.totalorder %s24, 1
      %s394 = scalar_select %p393, %s24, 1
      %p395 = scmp.lt.s32.totalorder %s25, 0
      %s396 = scalar_select %p395, %s25, 0
      %s397 = smul.addr %s394, 36
      %s398 = sadd.s32 %s396, %s397
      %s399 = smul.addr %s398, 8
      %s400 = scalar_lea.vmem %s8, %s399
      %p401 = pneg %p248
      %p402 = pneg %p245
      %p403 = pneg %p276
      %p404 = pneg %p273
      %p405 = scmp.lt.s32.totalorder %s24, 1
      %s406 = scalar_select %p405, %s24, 1
      %p407 = scmp.lt.s32.totalorder %s25, 0
      %s408 = scalar_select %p407, %s25, 0
      %s409 = smul.addr %s406, 36
      %s410 = sadd.s32 %s408, %s409
      %s411 = smul.addr %s410, 4
      %s412 = scalar_lea.vmem %s9, %s411
      %p413 = scmp.lt.s32.totalorder %s24, 1
      %s414 = scalar_select %p413, %s24, 1
      %s415 = smul.addr %s414, 43
      %s416 = smul.addr %s415, 4
      %s417 = scalar_lea.vmem %s0, %s416
      %p418 = scmp.lt.s32.totalorder %s24, 1
      %s419 = scalar_select %p418, %s24, 1
      %s420 = smul.addr %s419, 43
      %s421 = smul.addr %s420, 8
      %s422 = scalar_lea.vmem %s1, %s421
      %p423 = scmp.lt.s32.totalorder %s25, 0
      %s424 = scalar_select %p423, %s25, 0
      %s425 = smul.addr %s424, 4
      %s426 = scalar_lea.vmem %s5, %s425
      %p427 = scmp.lt.s32.totalorder %s25, 0
      %s428 = scalar_select %p427, %s25, 0
      %s429 = scalar_lea.vmem %s6, %s428
      %p430 = scmp.lt.s32.totalorder %s25, 0
      %s431 = scalar_select %p430, %s25, 0
      %s432 = scalar_lea.vmem %s7, %s431
      %p433 = scmp.lt.s32.totalorder %s24, 1
      %s434 = scalar_select %p433, %s24, 1
      %p435 = scmp.lt.s32.totalorder %s25, 0
      %s436 = scalar_select %p435, %s25, 0
      %s437 = smul.addr %s434, 36
      %s438 = sadd.s32 %s436, %s437
      %s439 = smul.addr %s438, 8
      %s440 = scalar_lea.vmem %s8, %s439
      %p441 = scmp.lt.s32.totalorder %s24, 1
      %s442 = scalar_select %p441, %s24, 1
      %p443 = scmp.lt.s32.totalorder %s25, 0
      %s444 = scalar_select %p443, %s25, 0
      %s445 = smul.addr %s442, 36
      %s446 = sadd.s32 %s444, %s445
      %s447 = smul.addr %s446, 4
      %s448 = scalar_lea.vmem %s9, %s447
      %p450 = scmp.eq.s32.totalorder %s25, 0
      // Predicated region
      $region57: #{bottleneck_forward.1} parent=55 // pred_check
        %p451 = pneg %p450
      $region58: #{bottleneck_forward.1} parent=55 // pred_check_branch
        %453 = sbr.rel (%p451) target = $region60
      $region59: #{bottleneck_forward.1} parent=55 // pred_region
        %v454 = vld [vmem:[%s417] sm:$0xf]
        %v455 = vld [vmem:[%s417 + $0x4] sm:$0xf]
        %v456 = vld [vmem:[%s417 + $0x8] sm:$0xf]
        %v457 = vld [vmem:[%s417 + $0xc] sm:$0xf]
        %v458 = vld [vmem:[%s417 + $0x10] sm:$0xf]
        %v459 = vld [vmem:[%s417 + $0x14] sm:$0xf]
        %v460 = vld [vmem:[%s417 + $0x18] sm:$0xf]
        %v461 = vld [vmem:[%s417 + $0x1c] sm:$0xf]
        %v462 = vld [vmem:[%s417 + $0x20] sm:$0xf]
        %v463 = vld [vmem:[%s417 + $0x24] sm:$0xf]
        %v464 = vld [vmem:[%s417 + $0x28] sm:$0xf]
        %v465 = vld [vmem:[%s417 + $0x2c] sm:$0xf]
        %v466 = vld [vmem:[%s417 + $0x30] sm:$0xf]
        %v467 = vld [vmem:[%s417 + $0x34] sm:$0xf]
        %v468 = vld [vmem:[%s417 + $0x38] sm:$0xf]
        %v469 = vld [vmem:[%s417 + $0x3c] sm:$0xf]
        %v470 = vld [vmem:[%s417 + $0x40] sm:$0xf]
        %v471 = vld [vmem:[%s417 + $0x44] sm:$0xf]
        %v472 = vld [vmem:[%s417 + $0x48] sm:$0xf]
        %v473 = vld [vmem:[%s417 + $0x4c] sm:$0xf]
        %v474 = vld [vmem:[%s417 + $0x50] sm:$0xf]
        %v475 = vld [vmem:[%s417 + $0x54] sm:$0xf]
        %v476 = vld [vmem:[%s417 + $0x58] sm:$0xf]
        %v477 = vld [vmem:[%s417 + $0x5c] sm:$0xf]
        %v478 = vld [vmem:[%s417 + $0x60] sm:$0xf]
        %v479 = vld [vmem:[%s417 + $0x64] sm:$0xf]
        %v480 = vld [vmem:[%s417 + $0x68] sm:$0xf]
        %v481 = vld [vmem:[%s417 + $0x6c] sm:$0xf]
        %v482 = vld [vmem:[%s417 + $0x70] sm:$0xf]
        %v483 = vld [vmem:[%s417 + $0x74] sm:$0xf]
        %v484 = vld [vmem:[%s417 + $0x78] sm:$0xf]
        %v485 = vld [vmem:[%s417 + $0x7c] sm:$0xf]
        %v486 = vld [vmem:[%s417 + $0x80] sm:$0xf]
        %v487 = vld [vmem:[%s417 + $0x84] sm:$0xf]
        %v488 = vld [vmem:[%s417 + $0x88] sm:$0xf]
        %v489 = vld [vmem:[%s417 + $0x8c] sm:$0xf]
        %v490 = vld [vmem:[%s417 + $0x90] sm:$0xf]
        %v491 = vld [vmem:[%s417 + $0x94] sm:$0xf]
        %v492 = vld [vmem:[%s417 + $0x98] sm:$0xf]
        %v493 = vld [vmem:[%s417 + $0x9c] sm:$0xf]
        %v494 = vld [vmem:[%s417 + $0xa0] sm:$0xf]
        %v495 = vld [vmem:[%s417 + $0xa4] sm:$0xf]
        %v496 = vld [vmem:[%s417 + $0xa8] sm:$0x7]
        %v497 = vld [vmem:[%s2] sm:$0xf]
        %v498 = vld [vmem:[%s2 + $0x4] sm:$0xf]
        %v499 = vld [vmem:[%s2 + $0x8] sm:$0xf]
        %v500 = vld [vmem:[%s2 + $0xc] sm:$0xf]
        %v501 = vld [vmem:[%s2 + $0x10] sm:$0xf]
        %v502 = vld [vmem:[%s2 + $0x14] sm:$0xf]
        %v503 = vld [vmem:[%s2 + $0x18] sm:$0xf]
        %v504 = vld [vmem:[%s2 + $0x1c] sm:$0xf]
        %v505 = vld [vmem:[%s2 + $0x20] sm:$0xf]
        %v506 = vld [vmem:[%s2 + $0x24] sm:$0xf]
        %v507 = vld [vmem:[%s2 + $0x28] sm:$0xf]
        %v508 = vld [vmem:[%s2 + $0x2c] sm:$0xf]
        %v509 = vld [vmem:[%s2 + $0x30] sm:$0xf]
        %v510 = vld [vmem:[%s2 + $0x34] sm:$0xf]
        %v511 = vld [vmem:[%s2 + $0x38] sm:$0xf]
        %v512 = vld [vmem:[%s2 + $0x3c] sm:$0xf]
        %v556 = vunpack.c.l.b16 %v454
        %v557 = vunpack.c.l.b16 %v455
        %v558 = vunpack.c.l.b16 %v456
        %v559 = vunpack.c.l.b16 %v457
        %v560 = vunpack.c.l.b16 %v458
        %v561 = vunpack.c.l.b16 %v459
        %v562 = vunpack.c.l.b16 %v460
        %v563 = vunpack.c.l.b16 %v461
        %v564 = vunpack.c.l.b16 %v462
        %v565 = vunpack.c.l.b16 %v463
        %v566 = vunpack.c.l.b16 %v464
        %v567 = vunpack.c.l.b16 %v465
        %v568 = vunpack.c.l.b16 %v466
        %v569 = vunpack.c.l.b16 %v467
        %v570 = vunpack.c.l.b16 %v468
        %v571 = vunpack.c.l.b16 %v469
        %v572 = vunpack.c.l.b16 %v470
        %v573 = vunpack.c.l.b16 %v471
        %v574 = vunpack.c.l.b16 %v472
        %v575 = vunpack.c.l.b16 %v473
        %v576 = vunpack.c.l.b16 %v474
        %v577 = vunpack.c.l.b16 %v475
        %v578 = vunpack.c.l.b16 %v476
        %v579 = vunpack.c.l.b16 %v477
        %v580 = vunpack.c.l.b16 %v478
        %v581 = vunpack.c.l.b16 %v479
        %v582 = vunpack.c.l.b16 %v480
        %v583 = vunpack.c.l.b16 %v481
        %v584 = vunpack.c.l.b16 %v482
        %v585 = vunpack.c.l.b16 %v483
        %v586 = vunpack.c.l.b16 %v484
        %v587 = vunpack.c.l.b16 %v485
        %v588 = vunpack.c.l.b16 %v486
        %v589 = vunpack.c.l.b16 %v487
        %v590 = vunpack.c.l.b16 %v488
        %v591 = vunpack.c.l.b16 %v489
        %v592 = vunpack.c.l.b16 %v490
        %v593 = vunpack.c.l.b16 %v491
        %v594 = vunpack.c.l.b16 %v492
        %v595 = vunpack.c.l.b16 %v493
        %v596 = vunpack.c.l.b16 %v494
        %v597 = vunpack.c.l.b16 %v495
        %v598 = vunpack.c.l.b16 %v496
        %v599 = vpack.c.b16 %v557, %v556
        %v600 = vpack.c.b16 %v559, %v558
        %v601 = vpack.c.b16 %v561, %v560
        %v602 = vpack.c.b16 %v563, %v562
        %v603 = vpack.c.b16 %v565, %v564
        %v604 = vpack.c.b16 %v567, %v566
        %v605 = vpack.c.b16 %v569, %v568
        %v606 = vpack.c.b16 %v571, %v570
        %v607 = vpack.c.b16 %v573, %v572
        %v608 = vpack.c.b16 %v575, %v574
        %v609 = vpack.c.b16 %v577, %v576
        %v610 = vpack.c.b16 %v579, %v578
        %v611 = vpack.c.b16 %v581, %v580
        %v612 = vpack.c.b16 %v583, %v582
        %v613 = vpack.c.b16 %v585, %v584
        %v614 = vpack.c.b16 %v587, %v586
        %v615 = vpack.c.b16 %v589, %v588
        %v616 = vpack.c.b16 %v591, %v590
        %v617 = vpack.c.b16 %v593, %v592
        %v618 = vpack.c.b16 %v595, %v594
        %v619 = vpack.c.b16 %v597, %v596
        %v620 = vpack.c.b16 %v598, %v598
        %v659 = vunpack.c.l.b16 %v497
        %v660 = vunpack.c.l.b16 %v498
        %v661 = vunpack.c.l.b16 %v499
        %v662 = vunpack.c.l.b16 %v500
        %v663 = vunpack.c.l.b16 %v501
        %v664 = vunpack.c.l.b16 %v502
        %v665 = vunpack.c.l.b16 %v503
        %v666 = vunpack.c.l.b16 %v504
        %v667 = vunpack.c.l.b16 %v505
        %v668 = vunpack.c.l.b16 %v506
        %v669 = vunpack.c.l.b16 %v507
        %v670 = vunpack.c.l.b16 %v508
        %v671 = vunpack.c.l.b16 %v509
        %v672 = vunpack.c.l.b16 %v510
        %v673 = vunpack.c.l.b16 %v511
        %v674 = vunpack.c.l.b16 %v512
        %v675 = vpack.c.b16 %v660, %v659
        %v676 = vpack.c.b16 %v662, %v661
        %v677 = vpack.c.b16 %v664, %v663
        %v678 = vpack.c.b16 %v666, %v665
        %v679 = vpack.c.b16 %v668, %v667
        %v680 = vpack.c.b16 %v670, %v669
        %v681 = vpack.c.b16 %v672, %v671
        %v682 = vpack.c.b16 %v674, %v673
        %691 = vmatprep.subr.bf16.mxu0 0
        %692 = vmatpush1.bf16.msra.mxu0 %v675
        %693 = vmatprep.subr.bf16.mxu0 0
        %694 = vmatpush1.bf16.msra.mxu0 %v676
        %695 = vmatprep.subr.bf16.mxu0 0
        %696 = vmatpush1.bf16.msra.mxu0 %v677
        %697 = vmatprep.subr.bf16.mxu0 0
        %698 = vmatpush1.bf16.msra.mxu0 %v678
        %699 = vmatprep.subr.bf16.mxu0 0
        %700 = vmatpush1.bf16.msra.mxu0 %v679
        %701 = vmatprep.subr.bf16.mxu0 0
        %702 = vmatpush1.bf16.msra.mxu0 %v680
        %703 = vmatprep.subr.bf16.mxu0 0
        %704 = vmatpush1.bf16.msra.mxu0 %v681
        %705 = vmatprep.subr.bf16.mxu0 0
        %706 = vmatpush1.bf16.msra.mxu0 %v682
        %707 = vmatprep.subr.bf16.mxu0 0
        %708 = vmatpush1.bf16.msra.mxu0 0
        %709 = vmatprep.subr.bf16.mxu0 0
        %710 = vmatpush1.bf16.msra.mxu0 0
        %711 = vmatprep.subr.bf16.mxu0 0
        %712 = vmatpush1.bf16.msra.mxu0 0
        %713 = vmatprep.subr.bf16.mxu0 0
        %714 = vmatpush1.bf16.msra.mxu0 0
        %715 = vmatprep.subr.bf16.mxu0 0
        %716 = vmatpush1.bf16.msra.mxu0 0
        %717 = vmatprep.subr.bf16.mxu0 0
        %718 = vmatpush1.bf16.msra.mxu0 0
        %719 = vmatprep.subr.bf16.mxu0 0
        %720 = vmatpush1.bf16.msra.mxu0 0
        %721 = vmatprep.subr.bf16.mxu0 0
        %722 = vmatpush1.bf16.msra.mxu0 0
        %723 = vmatprep.mubr.bf16.mxu0 0
        %724 = vmatmul.mubr.bf16.gmra.mrb[0].mxu0 %v599
        %v725 = vpop.f32.mrb[0].mxu0
        %v726 = vadd.f32 0.0, %v725
        %v727 = vpop.f32.mrb[0].mxu0
        %v728 = vpop.f32.mrb[0].mxu0
        %v729 = vadd.f32 0.0, %v728
        %v730 = vpop.f32.mrb[0].mxu0
        %731 = vmatprep.mubr.bf16.mxu0 0
        %732 = vmatmul.mubr.bf16.gmra.mrb[0].mxu0 %v600
        %v733 = vpop.f32.mrb[0].mxu0
        %v734 = vadd.f32 0.0, %v733
        %v735 = vpop.f32.mrb[0].mxu0
        %v736 = vpop.f32.mrb[0].mxu0
        %v737 = vadd.f32 0.0, %v736
        %v738 = vpop.f32.mrb[0].mxu0
        %739 = vmatprep.mubr.bf16.mxu0 0
        %740 = vmatmul.mubr.bf16.gmra.mrb[0].mxu0 %v601
        %v741 = vpop.f32.mrb[0].mxu0
        %v742 = vadd.f32 0.0, %v741
        %v743 = vpop.f32.mrb[0].mxu0
        %v744 = vpop.f32.mrb[0].mxu0
        %v745 = vadd.f32 0.0, %v744
        %v746 = vpop.f32.mrb[0].mxu0
        %747 = vmatprep.mubr.bf16.mxu0 0
        %748 = vmatmul.mubr.bf16.gmra.mrb[0].mxu0 %v602
        %v749 = vpop.f32.mrb[0].mxu0
        %v750 = vadd.f32 0.0, %v749
        %v751 = vpop.f32.mrb[0].mxu0
        %v752 = vpop.f32.mrb[0].mxu0
        %v753 = vadd.f32 0.0, %v752
        %v754 = vpop.f32.mrb[0].mxu0
        %755 = vmatprep.mubr.bf16.mxu0 0
        %756 = vmatmul.mubr.bf16.gmra.mrb[0].mxu0 %v603
        %v757 = vpop.f32.mrb[0].mxu0
        %v758 = vadd.f32 0.0, %v757
        %v759 = vpop.f32.mrb[0].mxu0
        %v760 = vpop.f32.mrb[0].mxu0
        %v761 = vadd.f32 0.0, %v760
        %v762 = vpop.f32.mrb[0].mxu0
        %763 = vmatprep.mubr.bf16.mxu0 0
        %764 = vmatmul.mubr.bf16.gmra.mrb[0].mxu0 %v604
        %v765 = vpop.f32.mrb[0].mxu0
        %v766 = vadd.f32 0.0, %v765
        %v767 = vpop.f32.mrb[0].mxu0
        %v768 = vpop.f32.mrb[0].mxu0
        %v769 = vadd.f32 0.0, %v768
        %v770 = vpop.f32.mrb[0].mxu0
        %771 = vmatprep.mubr.bf16.mxu0 0
        %772 = vmatmul.mubr.bf16.gmra.mrb[0].mxu0 %v605
        %v773 = vpop.f32.mrb[0].mxu0
        %v774 = vadd.f32 0.0, %v773
        %v775 = vpop.f32.mrb[0].mxu0
        %v776 = vpop.f32.mrb[0].mxu0
        %v777 = vadd.f32 0.0, %v776
        %v778 = vpop.f32.mrb[0].mxu0
        %779 = vmatprep.mubr.bf16.mxu0 0
        %780 = vmatmul.mubr.bf16.gmra.mrb[0].mxu0 %v606
        %v781 = vpop.f32.mrb[0].mxu0
        %v782 = vadd.f32 0.0, %v781
        %v783 = vpop.f32.mrb[0].mxu0
        %v784 = vpop.f32.mrb[0].mxu0
        %v785 = vadd.f32 0.0, %v784
        %v786 = vpop.f32.mrb[0].mxu0
        %787 = vmatprep.mubr.bf16.mxu0 0
        %788 = vmatmul.mubr.bf16.gmra.mrb[0].mxu0 %v607
        %v789 = vpop.f32.mrb[0].mxu0
        %v790 = vadd.f32 0.0, %v789
        %v791 = vpop.f32.mrb[0].mxu0
        %v792 = vpop.f32.mrb[0].mxu0
        %v793 = vadd.f32 0.0, %v792
        %v794 = vpop.f32.mrb[0].mxu0
        %795 = vmatprep.mubr.bf16.mxu0 0
        %796 = vmatmul.mubr.bf16.gmra.mrb[0].mxu0 %v608
        %v797 = vpop.f32.mrb[0].mxu0
        %v798 = vadd.f32 0.0, %v797
        %v799 = vpop.f32.mrb[0].mxu0
        %v800 = vpop.f32.mrb[0].mxu0
        %v801 = vadd.f32 0.0, %v800
        %v802 = vpop.f32.mrb[0].mxu0
        %803 = vmatprep.mubr.bf16.mxu0 0
        %804 = vmatmul.mubr.bf16.gmra.mrb[0].mxu0 %v609
        %v805 = vpop.f32.mrb[0].mxu0
        %v806 = vadd.f32 0.0, %v805
        %v807 = vpop.f32.mrb[0].mxu0
        %v808 = vpop.f32.mrb[0].mxu0
        %v809 = vadd.f32 0.0, %v808
        %v810 = vpop.f32.mrb[0].mxu0
        %811 = vmatprep.mubr.bf16.mxu0 0
        %812 = vmatmul.mubr.bf16.gmra.mrb[0].mxu0 %v610
        %v813 = vpop.f32.mrb[0].mxu0
        %v814 = vadd.f32 0.0, %v813
        %v815 = vpop.f32.mrb[0].mxu0
        %v816 = vpop.f32.mrb[0].mxu0
        %v817 = vadd.f32 0.0, %v816
        %v818 = vpop.f32.mrb[0].mxu0
        %819 = vmatprep.mubr.bf16.mxu0 0
        %820 = vmatmul.mubr.bf16.gmra.mrb[0].mxu0 %v611
        %v821 = vpop.f32.mrb[0].mxu0
        %v822 = vadd.f32 0.0, %v821
        %v823 = vpop.f32.mrb[0].mxu0
        %v824 = vpop.f32.mrb[0].mxu0
        %v825 = vadd.f32 0.0, %v824
        %v826 = vpop.f32.mrb[0].mxu0
        %827 = vmatprep.mubr.bf16.mxu0 0
        %828 = vmatmul.mubr.bf16.gmra.mrb[0].mxu0 %v612
        %v829 = vpop.f32.mrb[0].mxu0
        %v830 = vadd.f32 0.0, %v829
        %v831 = vpop.f32.mrb[0].mxu0
        %v832 = vpop.f32.mrb[0].mxu0
        %v833 = vadd.f32 0.0, %v832
        %v834 = vpop.f32.mrb[0].mxu0
        %835 = vmatprep.mubr.bf16.mxu0 0
        %836 = vmatmul.mubr.bf16.gmra.mrb[0].mxu0 %v613
        %v837 = vpop.f32.mrb[0].mxu0
        %v838 = vadd.f32 0.0, %v837
        %v839 = vpop.f32.mrb[0].mxu0
        %v840 = vpop.f32.mrb[0].mxu0
        %v841 = vadd.f32 0.0, %v840
        %v842 = vpop.f32.mrb[0].mxu0
        %843 = vmatprep.mubr.bf16.mxu0 0
        %844 = vmatmul.mubr.bf16.gmra.mrb[0].mxu0 %v614
        %v845 = vpop.f32.mrb[0].mxu0
        %v846 = vadd.f32 0.0, %v845
        %v847 = vpop.f32.mrb[0].mxu0
        %v848 = vpop.f32.mrb[0].mxu0
        %v849 = vadd.f32 0.0, %v848
        %v850 = vpop.f32.mrb[0].mxu0
        %851 = vmatprep.mubr.bf16.mxu0 0
        %852 = vmatmul.mubr.bf16.gmra.mrb[0].mxu0 %v615
        %v853 = vpop.f32.mrb[0].mxu0
        %v854 = vadd.f32 0.0, %v853
        %v855 = vpop.f32.mrb[0].mxu0
        %v856 = vpop.f32.mrb[0].mxu0
        %v857 = vadd.f32 0.0, %v856
        %v858 = vpop.f32.mrb[0].mxu0
        %859 = vmatprep.mubr.bf16.mxu0 0
        %860 = vmatmul.mubr.bf16.gmra.mrb[0].mxu0 %v616
        %v861 = vpop.f32.mrb[0].mxu0
        %v862 = vadd.f32 0.0, %v861
        %v863 = vpop.f32.mrb[0].mxu0
        %v864 = vpop.f32.mrb[0].mxu0
        %v865 = vadd.f32 0.0, %v864
        %v866 = vpop.f32.mrb[0].mxu0
        %867 = vmatprep.mubr.bf16.mxu0 0
        %868 = vmatmul.mubr.bf16.gmra.mrb[0].mxu0 %v617
        %v869 = vpop.f32.mrb[0].mxu0
        %v870 = vadd.f32 0.0, %v869
        %v871 = vpop.f32.mrb[0].mxu0
        %v872 = vpop.f32.mrb[0].mxu0
        %v873 = vadd.f32 0.0, %v872
        %v874 = vpop.f32.mrb[0].mxu0
        %875 = vmatprep.mubr.bf16.mxu0 0
        %876 = vmatmul.mubr.bf16.gmra.mrb[0].mxu0 %v618
        %v877 = vpop.f32.mrb[0].mxu0
        %v878 = vadd.f32 0.0, %v877
        %v879 = vpop.f32.mrb[0].mxu0
        %v880 = vpop.f32.mrb[0].mxu0
        %v881 = vadd.f32 0.0, %v880
        %v882 = vpop.f32.mrb[0].mxu0
        %883 = vmatprep.mubr.bf16.mxu0 0
        %884 = vmatmul.mubr.bf16.gmra.mrb[0].mxu0 %v619
        %v885 = vpop.f32.mrb[0].mxu0
        %v886 = vadd.f32 0.0, %v885
        %v887 = vpop.f32.mrb[0].mxu0
        %v888 = vpop.f32.mrb[0].mxu0
        %v889 = vadd.f32 0.0, %v888
        %v890 = vpop.f32.mrb[0].mxu0
        %891 = vmatprep.mubr.bf16.mxu0 0
        %892 = vmatmul.mubr.bf16.gmra.mrb[0].mxu0 %v620
        %v893 = vpop.f32.mrb[0].mxu0
        %v894 = vadd.f32 0.0, %v893
        %v895 = vpop.f32.mrb[0].mxu0
        %v896 = vpop.f32.mrb[0].mxu0
        %v897 = vpop.f32.mrb[0].mxu0
        %898 = vdwg.mxu0
        %v899 = vld [vmem:[%s3] sm:$0x1]
        %v901 = vlaneseq
        %v902 = vshrl.u32 %v901, 7
        %v903 = vsub.s32 0, %v902
        %v904 = vrot.slane %v899, %v903
        %v906 = vmul.f32 %v726, %v904
        %v907 = vmul.f32 %v729, %v904
        %v908 = vmul.f32 %v734, %v904
        %v909 = vmul.f32 %v737, %v904
        %v910 = vmul.f32 %v742, %v904
        %v911 = vmul.f32 %v745, %v904
        %v912 = vmul.f32 %v750, %v904
        %v913 = vmul.f32 %v753, %v904
        %v914 = vmul.f32 %v758, %v904
        %v915 = vmul.f32 %v761, %v904
        %v916 = vmul.f32 %v766, %v904
        %v917 = vmul.f32 %v769, %v904
        %v918 = vmul.f32 %v774, %v904
        %v919 = vmul.f32 %v777, %v904
        %v920 = vmul.f32 %v782, %v904
        %v921 = vmul.f32 %v785, %v904
        %v922 = vmul.f32 %v790, %v904
        %v923 = vmul.f32 %v793, %v904
        %v924 = vmul.f32 %v798, %v904
        %v925 = vmul.f32 %v801, %v904
        %v926 = vmul.f32 %v806, %v904
        %v927 = vmul.f32 %v809, %v904
        %v928 = vmul.f32 %v814, %v904
        %v929 = vmul.f32 %v817, %v904
        %v930 = vmul.f32 %v822, %v904
        %v931 = vmul.f32 %v825, %v904
        %v932 = vmul.f32 %v830, %v904
        %v933 = vmul.f32 %v833, %v904
        %v934 = vmul.f32 %v838, %v904
        %v935 = vmul.f32 %v841, %v904
        %v936 = vmul.f32 %v846, %v904
        %v937 = vmul.f32 %v849, %v904
        %v938 = vmul.f32 %v854, %v904
        %v939 = vmul.f32 %v857, %v904
        %v940 = vmul.f32 %v862, %v904
        %v941 = vmul.f32 %v865, %v904
        %v942 = vmul.f32 %v870, %v904
        %v943 = vmul.f32 %v873, %v904
        %v944 = vmul.f32 %v878, %v904
        %v945 = vmul.f32 %v881, %v904
        %v946 = vmul.f32 %v886, %v904
        %v947 = vmul.f32 %v889, %v904
        %v948 = vmul.f32 %v894, %v904
        %v949 = vld [vmem:[%s4] sm:$0x1]
        %v951 = vlaneseq
        %v952 = vshrl.u32 %v951, 7
        %v953 = vsub.s32 0, %v952
        %v954 = vrot.slane %v949, %v953
        %v956 = vadd.f32 %v906, %v954
        %v957 = vadd.f32 %v907, %v954
        %v958 = vadd.f32 %v908, %v954
        %v959 = vadd.f32 %v909, %v954
        %v960 = vadd.f32 %v910, %v954
        %v961 = vadd.f32 %v911, %v954
        %v962 = vadd.f32 %v912, %v954
        %v963 = vadd.f32 %v913, %v954
        %v964 = vadd.f32 %v914, %v954
        %v965 = vadd.f32 %v915, %v954
        %v966 = vadd.f32 %v916, %v954
        %v967 = vadd.f32 %v917, %v954
        %v968 = vadd.f32 %v918, %v954
        %v969 = vadd.f32 %v919, %v954
        %v970 = vadd.f32 %v920, %v954
        %v971 = vadd.f32 %v921, %v954
        %v972 = vadd.f32 %v922, %v954
        %v973 = vadd.f32 %v923, %v954
        %v974 = vadd.f32 %v924, %v954
        %v975 = vadd.f32 %v925, %v954
        %v976 = vadd.f32 %v926, %v954
        %v977 = vadd.f32 %v927, %v954
        %v978 = vadd.f32 %v928, %v954
        %v979 = vadd.f32 %v929, %v954
        %v980 = vadd.f32 %v930, %v954
        %v981 = vadd.f32 %v931, %v954
        %v982 = vadd.f32 %v932, %v954
        %v983 = vadd.f32 %v933, %v954
        %v984 = vadd.f32 %v934, %v954
        %v985 = vadd.f32 %v935, %v954
        %v986 = vadd.f32 %v936, %v954
        %v987 = vadd.f32 %v937, %v954
        %v988 = vadd.f32 %v938, %v954
        %v989 = vadd.f32 %v939, %v954
        %v990 = vadd.f32 %v940, %v954
        %v991 = vadd.f32 %v941, %v954
        %v992 = vadd.f32 %v942, %v954
        %v993 = vadd.f32 %v943, %v954
        %v994 = vadd.f32 %v944, %v954
        %v995 = vadd.f32 %v945, %v954
        %v996 = vadd.f32 %v946, %v954
        %v997 = vadd.f32 %v947, %v954
        %v998 = vadd.f32 %v948, %v954
        %v999 = vxor.u32 %v956, 2147483648
        %v1000 = vxor.u32 %v957, 2147483648
        %v1001 = vxor.u32 %v958, 2147483648
        %v1002 = vxor.u32 %v959, 2147483648
        %v1003 = vxor.u32 %v960, 2147483648
        %v1004 = vxor.u32 %v961, 2147483648
        %v1005 = vxor.u32 %v962, 2147483648
        %v1006 = vxor.u32 %v963, 2147483648
        %v1007 = vxor.u32 %v964, 2147483648
        %v1008 = vxor.u32 %v965, 2147483648
        %v1009 = vxor.u32 %v966, 2147483648
        %v1010 = vxor.u32 %v967, 2147483648
        %v1011 = vxor.u32 %v968, 2147483648
        %v1012 = vxor.u32 %v969, 2147483648
        %v1013 = vxor.u32 %v970, 2147483648
        %v1014 = vxor.u32 %v971, 2147483648
        %v1015 = vxor.u32 %v972, 2147483648
        %v1016 = vxor.u32 %v973, 2147483648
        %v1017 = vxor.u32 %v974, 2147483648
        %v1018 = vxor.u32 %v975, 2147483648
        %v1019 = vxor.u32 %v976, 2147483648
        %v1020 = vxor.u32 %v977, 2147483648
        %v1021 = vxor.u32 %v978, 2147483648
        %v1022 = vxor.u32 %v979, 2147483648
        %v1023 = vxor.u32 %v980, 2147483648
        %v1024 = vxor.u32 %v981, 2147483648
        %v1025 = vxor.u32 %v982, 2147483648
        %v1026 = vxor.u32 %v983, 2147483648
        %v1027 = vxor.u32 %v984, 2147483648
        %v1028 = vxor.u32 %v985, 2147483648
        %v1029 = vxor.u32 %v986, 2147483648
        %v1030 = vxor.u32 %v987, 2147483648
        %v1031 = vxor.u32 %v988, 2147483648
        %v1032 = vxor.u32 %v989, 2147483648
        %v1033 = vxor.u32 %v990, 2147483648
        %v1034 = vxor.u32 %v991, 2147483648
        %v1035 = vxor.u32 %v992, 2147483648
        %v1036 = vxor.u32 %v993, 2147483648
        %v1037 = vxor.u32 %v994, 2147483648
        %v1038 = vxor.u32 %v995, 2147483648
        %v1039 = vxor.u32 %v996, 2147483648
        %v1040 = vxor.u32 %v997, 2147483648
        %v1041 = vxor.u32 %v998, 2147483648
        %v1042 = vmul.f32 %v999, 1.442695
        %v1043 = vpow.pop %v1042
        %v1044 = vmul.f32 %v1000, 1.442695
        %v1045 = vpow.pop %v1044
        %v1046 = vmul.f32 %v1001, 1.442695
        %v1047 = vpow.pop %v1046
        %v1048 = vmul.f32 %v1002, 1.442695
        %v1049 = vpow.pop %v1048
        %v1050 = vmul.f32 %v1003, 1.442695
        %v1051 = vpow.pop %v1050
        %v1052 = vmul.f32 %v1004, 1.442695
        %v1053 = vpow.pop %v1052
        %v1054 = vmul.f32 %v1005, 1.442695
        %v1055 = vpow.pop %v1054
        %v1056 = vmul.f32 %v1006, 1.442695
        %v1057 = vpow.pop %v1056
        %v1058 = vmul.f32 %v1007, 1.442695
        %v1059 = vpow.pop %v1058
        %v1060 = vmul.f32 %v1008, 1.442695
        %v1061 = vpow.pop %v1060
        %v1062 = vmul.f32 %v1009, 1.442695
        %v1063 = vpow.pop %v1062
        %v1064 = vmul.f32 %v1010, 1.442695
        %v1065 = vpow.pop %v1064
        %v1066 = vmul.f32 %v1011, 1.442695
        %v1067 = vpow.pop %v1066
        %v1068 = vmul.f32 %v1012, 1.442695
        %v1069 = vpow.pop %v1068
        %v1070 = vmul.f32 %v1013, 1.442695
        %v1071 = vpow.pop %v1070
        %v1072 = vmul.f32 %v1014, 1.442695
        %v1073 = vpow.pop %v1072
        %v1074 = vmul.f32 %v1015, 1.442695
        %v1075 = vpow.pop %v1074
        %v1076 = vmul.f32 %v1016, 1.442695
        %v1077 = vpow.pop %v1076
        %v1078 = vmul.f32 %v1017, 1.442695
        %v1079 = vpow.pop %v1078
        %v1080 = vmul.f32 %v1018, 1.442695
        %v1081 = vpow.pop %v1080
        %v1082 = vmul.f32 %v1019, 1.442695
        %v1083 = vpow.pop %v1082
        %v1084 = vmul.f32 %v1020, 1.442695
        %v1085 = vpow.pop %v1084
        %v1086 = vmul.f32 %v1021, 1.442695
        %v1087 = vpow.pop %v1086
        %v1088 = vmul.f32 %v1022, 1.442695
        %v1089 = vpow.pop %v1088
        %v1090 = vmul.f32 %v1023, 1.442695
        %v1091 = vpow.pop %v1090
        %v1092 = vmul.f32 %v1024, 1.442695
        %v1093 = vpow.pop %v1092
        %v1094 = vmul.f32 %v1025, 1.442695
        %v1095 = vpow.pop %v1094
        %v1096 = vmul.f32 %v1026, 1.442695
        %v1097 = vpow.pop %v1096
        %v1098 = vmul.f32 %v1027, 1.442695
        %v1099 = vpow.pop %v1098
        %v1100 = vmul.f32 %v1028, 1.442695
        %v1101 = vpow.pop %v1100
        %v1102 = vmul.f32 %v1029, 1.442695
        %v1103 = vpow.pop %v1102
        %v1104 = vmul.f32 %v1030, 1.442695
        %v1105 = vpow.pop %v1104
        %v1106 = vmul.f32 %v1031, 1.442695
        %v1107 = vpow.pop %v1106
        %v1108 = vmul.f32 %v1032, 1.442695
        %v1109 = vpow.pop %v1108
        %v1110 = vmul.f32 %v1033, 1.442695
        %v1111 = vpow.pop %v1110
        %v1112 = vmul.f32 %v1034, 1.442695
        %v1113 = vpow.pop %v1112
        %v1114 = vmul.f32 %v1035, 1.442695
        %v1115 = vpow.pop %v1114
        %v1116 = vmul.f32 %v1036, 1.442695
        %v1117 = vpow.pop %v1116
        %v1118 = vmul.f32 %v1037, 1.442695
        %v1119 = vpow.pop %v1118
        %v1120 = vmul.f32 %v1038, 1.442695
        %v1121 = vpow.pop %v1120
        %v1122 = vmul.f32 %v1039, 1.442695
        %v1123 = vpow.pop %v1122
        %v1124 = vmul.f32 %v1040, 1.442695
        %v1125 = vpow.pop %v1124
        %v1126 = vmul.f32 %v1041, 1.442695
        %v1127 = vpow.pop %v1126
        %v1128 = vadd.f32 %v1043, 1.0
        %v1129 = vadd.f32 %v1045, 1.0
        %v1130 = vadd.f32 %v1047, 1.0
        %v1131 = vadd.f32 %v1049, 1.0
        %v1132 = vadd.f32 %v1051, 1.0
        %v1133 = vadd.f32 %v1053, 1.0
        %v1134 = vadd.f32 %v1055, 1.0
        %v1135 = vadd.f32 %v1057, 1.0
        %v1136 = vadd.f32 %v1059, 1.0
        %v1137 = vadd.f32 %v1061, 1.0
        %v1138 = vadd.f32 %v1063, 1.0
        %v1139 = vadd.f32 %v1065, 1.0
        %v1140 = vadd.f32 %v1067, 1.0
        %v1141 = vadd.f32 %v1069, 1.0
        %v1142 = vadd.f32 %v1071, 1.0
        %v1143 = vadd.f32 %v1073, 1.0
        %v1144 = vadd.f32 %v1075, 1.0
        %v1145 = vadd.f32 %v1077, 1.0
        %v1146 = vadd.f32 %v1079, 1.0
        %v1147 = vadd.f32 %v1081, 1.0
        %v1148 = vadd.f32 %v1083, 1.0
        %v1149 = vadd.f32 %v1085, 1.0
        %v1150 = vadd.f32 %v1087, 1.0
        %v1151 = vadd.f32 %v1089, 1.0
        %v1152 = vadd.f32 %v1091, 1.0
        %v1153 = vadd.f32 %v1093, 1.0
        %v1154 = vadd.f32 %v1095, 1.0
        %v1155 = vadd.f32 %v1097, 1.0
        %v1156 = vadd.f32 %v1099, 1.0
        %v1157 = vadd.f32 %v1101, 1.0
        %v1158 = vadd.f32 %v1103, 1.0
        %v1159 = vadd.f32 %v1105, 1.0
        %v1160 = vadd.f32 %v1107, 1.0
        %v1161 = vadd.f32 %v1109, 1.0
        %v1162 = vadd.f32 %v1111, 1.0
        %v1163 = vadd.f32 %v1113, 1.0
        %v1164 = vadd.f32 %v1115, 1.0
        %v1165 = vadd.f32 %v1117, 1.0
        %v1166 = vadd.f32 %v1119, 1.0
        %v1167 = vadd.f32 %v1121, 1.0
        %v1168 = vadd.f32 %v1123, 1.0
        %v1169 = vadd.f32 %v1125, 1.0
        %v1170 = vadd.f32 %v1127, 1.0
        %v1171 = vrcp.pop %v1128
        %v1172 = vmul.f32 1.0, %v1171
        %v1173 = vrcp.pop %v1129
        %v1174 = vmul.f32 1.0, %v1173
        %v1175 = vrcp.pop %v1130
        %v1176 = vmul.f32 1.0, %v1175
        %v1177 = vrcp.pop %v1131
        %v1178 = vmul.f32 1.0, %v1177
        %v1179 = vrcp.pop %v1132
        %v1180 = vmul.f32 1.0, %v1179
        %v1181 = vrcp.pop %v1133
        %v1182 = vmul.f32 1.0, %v1181
        %v1183 = vrcp.pop %v1134
        %v1184 = vmul.f32 1.0, %v1183
        %v1185 = vrcp.pop %v1135
        %v1186 = vmul.f32 1.0, %v1185
        %v1187 = vrcp.pop %v1136
        %v1188 = vmul.f32 1.0, %v1187
        %v1189 = vrcp.pop %v1137
        %v1190 = vmul.f32 1.0, %v1189
        %v1191 = vrcp.pop %v1138
        %v1192 = vmul.f32 1.0, %v1191
        %v1193 = vrcp.pop %v1139
        %v1194 = vmul.f32 1.0, %v1193
        %v1195 = vrcp.pop %v1140
        %v1196 = vmul.f32 1.0, %v1195
        %v1197 = vrcp.pop %v1141
        %v1198 = vmul.f32 1.0, %v1197
        %v1199 = vrcp.pop %v1142
        %v1200 = vmul.f32 1.0, %v1199
        %v1201 = vrcp.pop %v1143
        %v1202 = vmul.f32 1.0, %v1201
        %v1203 = vrcp.pop %v1144
        %v1204 = vmul.f32 1.0, %v1203
        %v1205 = vrcp.pop %v1145
        %v1206 = vmul.f32 1.0, %v1205
        %v1207 = vrcp.pop %v1146
        %v1208 = vmul.f32 1.0, %v1207
        %v1209 = vrcp.pop %v1147
        %v1210 = vmul.f32 1.0, %v1209
        %v1211 = vrcp.pop %v1148
        %v1212 = vmul.f32 1.0, %v1211
        %v1213 = vrcp.pop %v1149
        %v1214 = vmul.f32 1.0, %v1213
        %v1215 = vrcp.pop %v1150
        %v1216 = vmul.f32 1.0, %v1215
        %v1217 = vrcp.pop %v1151
        %v1218 = vmul.f32 1.0, %v1217
        %v1219 = vrcp.pop %v1152
        %v1220 = vmul.f32 1.0, %v1219
        %v1221 = vrcp.pop %v1153
        %v1222 = vmul.f32 1.0, %v1221
        %v1223 = vrcp.pop %v1154
        %v1224 = vmul.f32 1.0, %v1223
        %v1225 = vrcp.pop %v1155
        %v1226 = vmul.f32 1.0, %v1225
        %v1227 = vrcp.pop %v1156
        %v1228 = vmul.f32 1.0, %v1227
        %v1229 = vrcp.pop %v1157
        %v1230 = vmul.f32 1.0, %v1229
        %v1231 = vrcp.pop %v1158
        %v1232 = vmul.f32 1.0, %v1231
        %v1233 = vrcp.pop %v1159
        %v1234 = vmul.f32 1.0, %v1233
        %v1235 = vrcp.pop %v1160
        %v1236 = vmul.f32 1.0, %v1235
        %v1237 = vrcp.pop %v1161
        %v1238 = vmul.f32 1.0, %v1237
        %v1239 = vrcp.pop %v1162
        %v1240 = vmul.f32 1.0, %v1239
        %v1241 = vrcp.pop %v1163
        %v1242 = vmul.f32 1.0, %v1241
        %v1243 = vrcp.pop %v1164
        %v1244 = vmul.f32 1.0, %v1243
        %v1245 = vrcp.pop %v1165
        %v1246 = vmul.f32 1.0, %v1245
        %v1247 = vrcp.pop %v1166
        %v1248 = vmul.f32 1.0, %v1247
        %v1249 = vrcp.pop %v1167
        %v1250 = vmul.f32 1.0, %v1249
        %v1251 = vrcp.pop %v1168
        %v1252 = vmul.f32 1.0, %v1251
        %v1253 = vrcp.pop %v1169
        %v1254 = vmul.f32 1.0, %v1253
        %v1255 = vrcp.pop %v1170
        %v1256 = vmul.f32 1.0, %v1255
        %v1257 = vmul.f32 %v956, %v1172
        %v1258 = vmul.f32 %v957, %v1174
        %v1259 = vmul.f32 %v958, %v1176
        %v1260 = vmul.f32 %v959, %v1178
        %v1261 = vmul.f32 %v960, %v1180
        %v1262 = vmul.f32 %v961, %v1182
        %v1263 = vmul.f32 %v962, %v1184
        %v1264 = vmul.f32 %v963, %v1186
        %v1265 = vmul.f32 %v964, %v1188
        %v1266 = vmul.f32 %v965, %v1190
        %v1267 = vmul.f32 %v966, %v1192
        %v1268 = vmul.f32 %v967, %v1194
        %v1269 = vmul.f32 %v968, %v1196
        %v1270 = vmul.f32 %v969, %v1198
        %v1271 = vmul.f32 %v970, %v1200
        %v1272 = vmul.f32 %v971, %v1202
        %v1273 = vmul.f32 %v972, %v1204
        %v1274 = vmul.f32 %v973, %v1206
        %v1275 = vmul.f32 %v974, %v1208
        %v1276 = vmul.f32 %v975, %v1210
        %v1277 = vmul.f32 %v976, %v1212
        %v1278 = vmul.f32 %v977, %v1214
        %v1279 = vmul.f32 %v978, %v1216
        %v1280 = vmul.f32 %v979, %v1218
        %v1281 = vmul.f32 %v980, %v1220
        %v1282 = vmul.f32 %v981, %v1222
        %v1283 = vmul.f32 %v982, %v1224
        %v1284 = vmul.f32 %v983, %v1226
        %v1285 = vmul.f32 %v984, %v1228
        %v1286 = vmul.f32 %v985, %v1230
        %v1287 = vmul.f32 %v986, %v1232
        %v1288 = vmul.f32 %v987, %v1234
        %v1289 = vmul.f32 %v988, %v1236
        %v1290 = vmul.f32 %v989, %v1238
        %v1291 = vmul.f32 %v990, %v1240
        %v1292 = vmul.f32 %v991, %v1242
        %v1293 = vmul.f32 %v992, %v1244
        %v1294 = vmul.f32 %v993, %v1246
        %v1295 = vmul.f32 %v994, %v1248
        %v1296 = vmul.f32 %v995, %v1250
        %v1297 = vmul.f32 %v996, %v1252
        %v1298 = vmul.f32 %v997, %v1254
        %v1299 = vmul.f32 %v998, %v1256
        %v1300 = vld [vmem:[%s422] sm:$0xff]
        %v1301 = vld [vmem:[%s422 + $0x8] sm:$0xff]
        %v1302 = vld [vmem:[%s422 + $0x10] sm:$0xff]
        %v1303 = vld [vmem:[%s422 + $0x18] sm:$0xff]
        %v1304 = vld [vmem:[%s422 + $0x20] sm:$0xff]
        %v1305 = vld [vmem:[%s422 + $0x28] sm:$0xff]
        %v1306 = vld [vmem:[%s422 + $0x30] sm:$0xff]
        %v1307 = vld [vmem:[%s422 + $0x38] sm:$0xff]
        %v1308 = vld [vmem:[%s422 + $0x40] sm:$0xff]
        %v1309 = vld [vmem:[%s422 + $0x48] sm:$0xff]
        %v1310 = vld [vmem:[%s422 + $0x50] sm:$0xff]
        %v1311 = vld [vmem:[%s422 + $0x58] sm:$0xff]
        %v1312 = vld [vmem:[%s422 + $0x60] sm:$0xff]
        %v1313 = vld [vmem:[%s422 + $0x68] sm:$0xff]
        %v1314 = vld [vmem:[%s422 + $0x70] sm:$0xff]
        %v1315 = vld [vmem:[%s422 + $0x78] sm:$0xff]
        %v1316 = vld [vmem:[%s422 + $0x80] sm:$0xff]
        %v1317 = vld [vmem:[%s422 + $0x88] sm:$0xff]
        %v1318 = vld [vmem:[%s422 + $0x90] sm:$0xff]
        %v1319 = vld [vmem:[%s422 + $0x98] sm:$0xff]
        %v1320 = vld [vmem:[%s422 + $0xa0] sm:$0xff]
        %v1321 = vld [vmem:[%s422 + $0xa8] sm:$0xff]
        %v1322 = vld [vmem:[%s422 + $0xb0] sm:$0xff]
        %v1323 = vld [vmem:[%s422 + $0xb8] sm:$0xff]
        %v1324 = vld [vmem:[%s422 + $0xc0] sm:$0xff]
        %v1325 = vld [vmem:[%s422 + $0xc8] sm:$0xff]
        %v1326 = vld [vmem:[%s422 + $0xd0] sm:$0xff]
        %v1327 = vld [vmem:[%s422 + $0xd8] sm:$0xff]
        %v1328 = vld [vmem:[%s422 + $0xe0] sm:$0xff]
        %v1329 = vld [vmem:[%s422 + $0xe8] sm:$0xff]
        %v1330 = vld [vmem:[%s422 + $0xf0] sm:$0xff]
        %v1331 = vld [vmem:[%s422 + $0xf8] sm:$0xff]
        %v1332 = vld [vmem:[%s422 + $0x100] sm:$0xff]
        %v1333 = vld [vmem:[%s422 + $0x108] sm:$0xff]
        %v1334 = vld [vmem:[%s422 + $0x110] sm:$0xff]
        %v1335 = vld [vmem:[%s422 + $0x118] sm:$0xff]
        %v1336 = vld [vmem:[%s422 + $0x120] sm:$0xff]
        %v1337 = vld [vmem:[%s422 + $0x128] sm:$0xff]
        %v1338 = vld [vmem:[%s422 + $0x130] sm:$0xff]
        %v1339 = vld [vmem:[%s422 + $0x138] sm:$0xff]
        %v1340 = vld [vmem:[%s422 + $0x140] sm:$0xff]
        %v1341 = vld [vmem:[%s422 + $0x148] sm:$0xff]
        %v1342 = vld [vmem:[%s422 + $0x150] sm:$0x3f]
        %1344 = vset.pattern.permute.xlu0 0
        %1345 = vperm.xlu0 %1344, %v1300
        %v1346 = vpop.permute.xlu0 %1345
        %1349 = vset.pattern.permute.xlu0 0
        %1350 = vperm.xlu0 %1349, %v1301
        %v1351 = vpop.permute.xlu0 %1350
        %1354 = vset.pattern.permute.xlu0 0
        %1355 = vperm.xlu0 %1354, %v1302
        %v1356 = vpop.permute.xlu0 %1355
        %1359 = vset.pattern.permute.xlu0 0
        %1360 = vperm.xlu0 %1359, %v1303
        %v1361 = vpop.permute.xlu0 %1360
        %1364 = vset.pattern.permute.xlu0 0
        %1365 = vperm.xlu0 %1364, %v1304
        %v1366 = vpop.permute.xlu0 %1365
        %1369 = vset.pattern.permute.xlu0 0
        %1370 = vperm.xlu0 %1369, %v1305
        %v1371 = vpop.permute.xlu0 %1370
        %1374 = vset.pattern.permute.xlu0 0
        %1375 = vperm.xlu0 %1374, %v1306
        %v1376 = vpop.permute.xlu0 %1375
        %1379 = vset.pattern.permute.xlu0 0
        %1380 = vperm.xlu0 %1379, %v1307
        %v1381 = vpop.permute.xlu0 %1380
        %1384 = vset.pattern.permute.xlu0 0
        %1385 = vperm.xlu0 %1384, %v1308
        %v1386 = vpop.permute.xlu0 %1385
        %1389 = vset.pattern.permute.xlu0 0
        %1390 = vperm.xlu0 %1389, %v1309
        %v1391 = vpop.permute.xlu0 %1390
        %1394 = vset.pattern.permute.xlu0 0
        %1395 = vperm.xlu0 %1394, %v1310
        %v1396 = vpop.permute.xlu0 %1395
        %1399 = vset.pattern.permute.xlu0 0
        %1400 = vperm.xlu0 %1399, %v1311
        %v1401 = vpop.permute.xlu0 %1400
        %1404 = vset.pattern.permute.xlu0 0
        %1405 = vperm.xlu0 %1404, %v1312
        %v1406 = vpop.permute.xlu0 %1405
        %1409 = vset.pattern.permute.xlu0 0
        %1410 = vperm.xlu0 %1409, %v1313
        %v1411 = vpop.permute.xlu0 %1410
        %1414 = vset.pattern.permute.xlu0 0
        %1415 = vperm.xlu0 %1414, %v1314
        %v1416 = vpop.permute.xlu0 %1415
        %1419 = vset.pattern.permute.xlu0 0
        %1420 = vperm.xlu0 %1419, %v1315
        %v1421 = vpop.permute.xlu0 %1420
        %1424 = vset.pattern.permute.xlu0 0
        %1425 = vperm.xlu0 %1424, %v1316
        %v1426 = vpop.permute.xlu0 %1425
        %1429 = vset.pattern.permute.xlu0 0
        %1430 = vperm.xlu0 %1429, %v1317
        %v1431 = vpop.permute.xlu0 %1430
        %1434 = vset.pattern.permute.xlu0 0
        %1435 = vperm.xlu0 %1434, %v1318
        %v1436 = vpop.permute.xlu0 %1435
        %1439 = vset.pattern.permute.xlu0 0
        %1440 = vperm.xlu0 %1439, %v1319
        %v1441 = vpop.permute.xlu0 %1440
        %1444 = vset.pattern.permute.xlu0 0
        %1445 = vperm.xlu0 %1444, %v1320
        %v1446 = vpop.permute.xlu0 %1445
        %1449 = vset.pattern.permute.xlu0 0
        %1450 = vperm.xlu0 %1449, %v1321
        %v1451 = vpop.permute.xlu0 %1450
        %1454 = vset.pattern.permute.xlu0 0
        %1455 = vperm.xlu0 %1454, %v1322
        %v1456 = vpop.permute.xlu0 %1455
        %1459 = vset.pattern.permute.xlu0 0
        %1460 = vperm.xlu0 %1459, %v1323
        %v1461 = vpop.permute.xlu0 %1460
        %1464 = vset.pattern.permute.xlu0 0
        %1465 = vperm.xlu0 %1464, %v1324
        %v1466 = vpop.permute.xlu0 %1465
        %1469 = vset.pattern.permute.xlu0 0
        %1470 = vperm.xlu0 %1469, %v1325
        %v1471 = vpop.permute.xlu0 %1470
        %1474 = vset.pattern.permute.xlu0 0
        %1475 = vperm.xlu0 %1474, %v1326
        %v1476 = vpop.permute.xlu0 %1475
        %1479 = vset.pattern.permute.xlu0 0
        %1480 = vperm.xlu0 %1479, %v1327
        %v1481 = vpop.permute.xlu0 %1480
        %1484 = vset.pattern.permute.xlu0 0
        %1485 = vperm.xlu0 %1484, %v1328
        %v1486 = vpop.permute.xlu0 %1485
        %1489 = vset.pattern.permute.xlu0 0
        %1490 = vperm.xlu0 %1489, %v1329
        %v1491 = vpop.permute.xlu0 %1490
        %1494 = vset.pattern.permute.xlu0 0
        %1495 = vperm.xlu0 %1494, %v1330
        %v1496 = vpop.permute.xlu0 %1495
        %1499 = vset.pattern.permute.xlu0 0
        %1500 = vperm.xlu0 %1499, %v1331
        %v1501 = vpop.permute.xlu0 %1500
        %1504 = vset.pattern.permute.xlu0 0
        %1505 = vperm.xlu0 %1504, %v1332
        %v1506 = vpop.permute.xlu0 %1505
        %1509 = vset.pattern.permute.xlu0 0
        %1510 = vperm.xlu0 %1509, %v1333
        %v1511 = vpop.permute.xlu0 %1510
        %1514 = vset.pattern.permute.xlu0 0
        %1515 = vperm.xlu0 %1514, %v1334
        %v1516 = vpop.permute.xlu0 %1515
        %1519 = vset.pattern.permute.xlu0 0
        %1520 = vperm.xlu0 %1519, %v1335
        %v1521 = vpop.permute.xlu0 %1520
        %1524 = vset.pattern.permute.xlu0 0
        %1525 = vperm.xlu0 %1524, %v1336
        %v1526 = vpop.permute.xlu0 %1525
        %1529 = vset.pattern.permute.xlu0 0
        %1530 = vperm.xlu0 %1529, %v1337
        %v1531 = vpop.permute.xlu0 %1530
        %1534 = vset.pattern.permute.xlu0 0
        %1535 = vperm.xlu0 %1534, %v1338
        %v1536 = vpop.permute.xlu0 %1535
        %1539 = vset.pattern.permute.xlu0 0
        %1540 = vperm.xlu0 %1539, %v1339
        %v1541 = vpop.permute.xlu0 %1540
        %1544 = vset.pattern.permute.xlu0 0
        %1545 = vperm.xlu0 %1544, %v1340
        %v1546 = vpop.permute.xlu0 %1545
        %1549 = vset.pattern.permute.xlu0 0
        %1550 = vperm.xlu0 %1549, %v1341
        %v1551 = vpop.permute.xlu0 %1550
        %1554 = vset.pattern.permute.xlu0 0
        %1555 = vperm.xlu0 %1554, %v1342
        %v1556 = vpop.permute.xlu0 %1555
        %v1558 = vmul.f32 %v1257, %v1346
        %v1559 = vmul.f32 %v1258, %v1351
        %v1560 = vmul.f32 %v1259, %v1356
        %v1561 = vmul.f32 %v1260, %v1361
        %v1562 = vmul.f32 %v1261, %v1366
        %v1563 = vmul.f32 %v1262, %v1371
        %v1564 = vmul.f32 %v1263, %v1376
        %v1565 = vmul.f32 %v1264, %v1381
        %v1566 = vmul.f32 %v1265, %v1386
        %v1567 = vmul.f32 %v1266, %v1391
        %v1568 = vmul.f32 %v1267, %v1396
        %v1569 = vmul.f32 %v1268, %v1401
        %v1570 = vmul.f32 %v1269, %v1406
        %v1571 = vmul.f32 %v1270, %v1411
        %v1572 = vmul.f32 %v1271, %v1416
        %v1573 = vmul.f32 %v1272, %v1421
        %v1574 = vmul.f32 %v1273, %v1426
        %v1575 = vmul.f32 %v1274, %v1431
        %v1576 = vmul.f32 %v1275, %v1436
        %v1577 = vmul.f32 %v1276, %v1441
        %v1578 = vmul.f32 %v1277, %v1446
        %v1579 = vmul.f32 %v1278, %v1451
        %v1580 = vmul.f32 %v1279, %v1456
        %v1581 = vmul.f32 %v1280, %v1461
        %v1582 = vmul.f32 %v1281, %v1466
        %v1583 = vmul.f32 %v1282, %v1471
        %v1584 = vmul.f32 %v1283, %v1476
        %v1585 = vmul.f32 %v1284, %v1481
        %v1586 = vmul.f32 %v1285, %v1486
        %v1587 = vmul.f32 %v1286, %v1491
        %v1588 = vmul.f32 %v1287, %v1496
        %v1589 = vmul.f32 %v1288, %v1501
        %v1590 = vmul.f32 %v1289, %v1506
        %v1591 = vmul.f32 %v1290, %v1511
        %v1592 = vmul.f32 %v1291, %v1516
        %v1593 = vmul.f32 %v1292, %v1521
        %v1594 = vmul.f32 %v1293, %v1526
        %v1595 = vmul.f32 %v1294, %v1531
        %v1596 = vmul.f32 %v1295, %v1536
        %v1597 = vmul.f32 %v1296, %v1541
        %v1598 = vmul.f32 %v1297, %v1546
        %v1599 = vmul.f32 %v1298, %v1551
        %v1600 = vmul.f32 %v1299, %v1556
        %v1601 = vpack.c.bf16 %v1559, %v1558
        %v1602 = vpack.c.bf16 %v1561, %v1560
        %v1603 = vpack.c.bf16 %v1563, %v1562
        %v1604 = vpack.c.bf16 %v1565, %v1564
        %v1605 = vpack.c.bf16 %v1567, %v1566
        %v1606 = vpack.c.bf16 %v1569, %v1568
        %v1607 = vpack.c.bf16 %v1571, %v1570
        %v1608 = vpack.c.bf16 %v1573, %v1572
        %v1609 = vpack.c.bf16 %v1575, %v1574
        %v1610 = vpack.c.bf16 %v1577, %v1576
        %v1611 = vpack.c.bf16 %v1579, %v1578
        %v1612 = vpack.c.bf16 %v1581, %v1580
        %v1613 = vpack.c.bf16 %v1583, %v1582
        %v1614 = vpack.c.bf16 %v1585, %v1584
        %v1615 = vpack.c.bf16 %v1587, %v1586
        %v1616 = vpack.c.bf16 %v1589, %v1588
        %v1617 = vpack.c.bf16 %v1591, %v1590
        %v1618 = vpack.c.bf16 %v1593, %v1592
        %v1619 = vpack.c.bf16 %v1595, %v1594
        %v1620 = vpack.c.bf16 %v1597, %v1596
        %v1621 = vpack.c.bf16 %v1599, %v1598
        %v1622 = vpack.c.bf16 %v1600, %v1600
        %v1645 = vunpack.c.l.b16 %v1601
        %v1646 = vunpack.c.h.b16 %v1601
        %v1647 = vunpack.c.l.b16 %v1602
        %v1648 = vunpack.c.h.b16 %v1602
        %v1649 = vunpack.c.l.b16 %v1603
        %v1650 = vunpack.c.h.b16 %v1603
        %v1651 = vunpack.c.l.b16 %v1604
        %v1652 = vunpack.c.h.b16 %v1604
        %v1653 = vunpack.c.l.b16 %v1605
        %v1654 = vunpack.c.h.b16 %v1605
        %v1655 = vunpack.c.l.b16 %v1606
        %v1656 = vunpack.c.h.b16 %v1606
        %v1657 = vunpack.c.l.b16 %v1607
        %v1658 = vunpack.c.h.b16 %v1607
        %v1659 = vunpack.c.l.b16 %v1608
        %v1660 = vunpack.c.h.b16 %v1608
        %v1661 = vunpack.c.l.b16 %v1609
        %v1662 = vunpack.c.h.b16 %v1609
        %v1663 = vunpack.c.l.b16 %v1610
        %v1664 = vunpack.c.h.b16 %v1610
        %v1665 = vunpack.c.l.b16 %v1611
        %v1666 = vunpack.c.h.b16 %v1611
        %v1667 = vunpack.c.l.b16 %v1612
        %v1668 = vunpack.c.h.b16 %v1612
        %v1669 = vunpack.c.l.b16 %v1613
        %v1670 = vunpack.c.h.b16 %v1613
        %v1671 = vunpack.c.l.b16 %v1614
        %v1672 = vunpack.c.h.b16 %v1614
        %v1673 = vunpack.c.l.b16 %v1615
        %v1674 = vunpack.c.h.b16 %v1615
        %v1675 = vunpack.c.l.b16 %v1616
        %v1676 = vunpack.c.h.b16 %v1616
        %v1677 = vunpack.c.l.b16 %v1617
        %v1678 = vunpack.c.h.b16 %v1617
        %v1679 = vunpack.c.l.b16 %v1618
        %v1680 = vunpack.c.h.b16 %v1618
        %v1681 = vunpack.c.l.b16 %v1619
        %v1682 = vunpack.c.h.b16 %v1619
        %v1683 = vunpack.c.l.b16 %v1620
        %v1684 = vunpack.c.h.b16 %v1620
        %v1685 = vunpack.c.l.b16 %v1621
        %v1686 = vunpack.c.h.b16 %v1621
        %v1687 = vunpack.c.l.b16 %v1622
        %v1688 = vpack.c.b16 %v1645, %v1645
        %v1689 = vpack.c.b16 %v1646, %v1646
        %v1690 = vpack.c.b16 %v1647, %v1647
        %v1691 = vpack.c.b16 %v1648, %v1648
        %v1692 = vpack.c.b16 %v1649, %v1649
        %v1693 = vpack.c.b16 %v1650, %v1650
        %v1694 = vpack.c.b16 %v1651, %v1651
        %v1695 = vpack.c.b16 %v1652, %v1652
        %v1696 = vpack.c.b16 %v1653, %v1653
        %v1697 = vpack.c.b16 %v1654, %v1654
        %v1698 = vpack.c.b16 %v1655, %v1655
        %v1699 = vpack.c.b16 %v1656, %v1656
        %v1700 = vpack.c.b16 %v1657, %v1657
        %v1701 = vpack.c.b16 %v1658, %v1658
        %v1702 = vpack.c.b16 %v1659, %v1659
        %v1703 = vpack.c.b16 %v1660, %v1660
        %v1704 = vpack.c.b16 %v1661, %v1661
        %v1705 = vpack.c.b16 %v1662, %v1662
        %v1706 = vpack.c.b16 %v1663, %v1663
        %v1707 = vpack.c.b16 %v1664, %v1664
        %v1708 = vpack.c.b16 %v1665, %v1665
        %v1709 = vpack.c.b16 %v1666, %v1666
        %v1710 = vpack.c.b16 %v1667, %v1667
        %v1711 = vpack.c.b16 %v1668, %v1668
        %v1712 = vpack.c.b16 %v1669, %v1669
        %v1713 = vpack.c.b16 %v1670, %v1670
        %v1714 = vpack.c.b16 %v1671, %v1671
        %v1715 = vpack.c.b16 %v1672, %v1672
        %v1716 = vpack.c.b16 %v1673, %v1673
        %v1717 = vpack.c.b16 %v1674, %v1674
        %v1718 = vpack.c.b16 %v1675, %v1675
        %v1719 = vpack.c.b16 %v1676, %v1676
        %v1720 = vpack.c.b16 %v1677, %v1677
        %v1721 = vpack.c.b16 %v1678, %v1678
        %v1722 = vpack.c.b16 %v1679, %v1679
        %v1723 = vpack.c.b16 %v1680, %v1680
        %v1724 = vpack.c.b16 %v1681, %v1681
        %v1725 = vpack.c.b16 %v1682, %v1682
        %v1726 = vpack.c.b16 %v1683, %v1683
        %v1727 = vpack.c.b16 %v1684, %v1684
        %v1728 = vpack.c.b16 %v1685, %v1685
        %v1729 = vpack.c.b16 %v1686, %v1686
        %v1730 = vpack.c.b16 %v1687, %v1687
        %1774 = vst [vmem:[#allocation2] sm:$0xf] %v1688
        %1775 = vst [vmem:[#allocation2 + $0x4] sm:$0xf] %v1689
        %1776 = vst [vmem:[#allocation2 + $0x8] sm:$0xf] %v1690
        %1777 = vst [vmem:[#allocation2 + $0xc] sm:$0xf] %v1691
        %1778 = vst [vmem:[#allocation2 + $0x10] sm:$0xf] %v1692
        %1779 = vst [vmem:[#allocation2 + $0x14] sm:$0xf] %v1693
        %1780 = vst [vmem:[#allocation2 + $0x18] sm:$0xf] %v1694
        %1781 = vst [vmem:[#allocation2 + $0x1c] sm:$0xf] %v1695
        %1782 = vst [vmem:[#allocation2 + $0x20] sm:$0xf] %v1696
        %1783 = vst [vmem:[#allocation2 + $0x24] sm:$0xf] %v1697
        %1784 = vst [vmem:[#allocation2 + $0x28] sm:$0xf] %v1698
        %1785 = vst [vmem:[#allocation2 + $0x2c] sm:$0xf] %v1699
        %1786 = vst [vmem:[#allocation2 + $0x30] sm:$0xf] %v1700
        %1787 = vst [vmem:[#allocation2 + $0x34] sm:$0xf] %v1701
        %1788 = vst [vmem:[#allocation2 + $0x38] sm:$0xf] %v1702
        %1789 = vst [vmem:[#allocation2 + $0x3c] sm:$0xf] %v1703
        %1790 = vst [vmem:[#allocation2 + $0x40] sm:$0xf] %v1704
        %1791 = vst [vmem:[#allocation2 + $0x44] sm:$0xf] %v1705
        %1792 = vst [vmem:[#allocation2 + $0x48] sm:$0xf] %v1706
        %1793 = vst [vmem:[#allocation2 + $0x4c] sm:$0xf] %v1707
        %1794 = vst [vmem:[#allocation2 + $0x50] sm:$0xf] %v1708
        %1795 = vst [vmem:[#allocation2 + $0x54] sm:$0xf] %v1709
        %1796 = vst [vmem:[#allocation2 + $0x58] sm:$0xf] %v1710
        %1797 = vst [vmem:[#allocation2 + $0x5c] sm:$0xf] %v1711
        %1798 = vst [vmem:[#allocation2 + $0x60] sm:$0xf] %v1712
        %1799 = vst [vmem:[#allocation2 + $0x64] sm:$0xf] %v1713
        %1800 = vst [vmem:[#allocation2 + $0x68] sm:$0xf] %v1714
        %1801 = vst [vmem:[#allocation2 + $0x6c] sm:$0xf] %v1715
        %1802 = vst [vmem:[#allocation2 + $0x70] sm:$0xf] %v1716
        %1803 = vst [vmem:[#allocation2 + $0x74] sm:$0xf] %v1717
        %1804 = vst [vmem:[#allocation2 + $0x78] sm:$0xf] %v1718
        %1805 = vst [vmem:[#allocation2 + $0x7c] sm:$0xf] %v1719
        %1806 = vst [vmem:[#allocation2 + $0x80] sm:$0xf] %v1720
        %1807 = vst [vmem:[#allocation2 + $0x84] sm:$0xf] %v1721
        %1808 = vst [vmem:[#allocation2 + $0x88] sm:$0xf] %v1722
        %1809 = vst [vmem:[#allocation2 + $0x8c] sm:$0xf] %v1723
        %1810 = vst [vmem:[#allocation2 + $0x90] sm:$0xf] %v1724
        %1811 = vst [vmem:[#allocation2 + $0x94] sm:$0xf] %v1725
        %1812 = vst [vmem:[#allocation2 + $0x98] sm:$0xf] %v1726
        %1813 = vst [vmem:[#allocation2 + $0x9c] sm:$0xf] %v1727
        %1814 = vst [vmem:[#allocation2 + $0xa0] sm:$0xf] %v1728
        %1815 = vst [vmem:[#allocation2 + $0xa4] sm:$0xf] %v1729
        %1816 = vst [vmem:[#allocation2 + $0xa8] sm:$0x7] %v1730
      $region60: #{bottleneck_forward.1} parent=55 // pred_fallthru
        _
      %v1817 = vld [vmem:[#allocation2] sm:$0xf]
      %v1818 = vld [vmem:[#allocation2 + $0x4] sm:$0xf]
      %v1819 = vld [vmem:[#allocation2 + $0x8] sm:$0xf]
      %v1820 = vld [vmem:[#allocation2 + $0xc] sm:$0xf]
      %v1821 = vld [vmem:[#allocation2 + $0x10] sm:$0xf]
      %v1822 = vld [vmem:[#allocation2 + $0x14] sm:$0xf]
      %v1823 = vld [vmem:[#allocation2 + $0x18] sm:$0xf]
      %v1824 = vld [vmem:[#allocation2 + $0x1c] sm:$0xf]
      %v1825 = vld [vmem:[#allocation2 + $0x20] sm:$0xf]
      %v1826 = vld [vmem:[#allocation2 + $0x24] sm:$0xf]
      %v1827 = vld [vmem:[#allocation2 + $0x28] sm:$0xf]
      %v1828 = vld [vmem:[#allocation2 + $0x2c] sm:$0xf]
      %v1829 = vld [vmem:[#allocation2 + $0x30] sm:$0xf]
      %v1830 = vld [vmem:[#allocation2 + $0x34] sm:$0xf]
      %v1831 = vld [vmem:[#allocation2 + $0x38] sm:$0xf]
      %v1832 = vld [vmem:[#allocation2 + $0x3c] sm:$0xf]
      %v1833 = vld [vmem:[#allocation2 + $0x40] sm:$0xf]
      %v1834 = vld [vmem:[#allocation2 + $0x44] sm:$0xf]
      %v1835 = vld [vmem:[#allocation2 + $0x48] sm:$0xf]
      %v1836 = vld [vmem:[#allocation2 + $0x4c] sm:$0xf]
      %v1837 = vld [vmem:[#allocation2 + $0x50] sm:$0xf]
      %v1838 = vld [vmem:[#allocation2 + $0x54] sm:$0xf]
      %v1839 = vld [vmem:[#allocation2 + $0x58] sm:$0xf]
      %v1840 = vld [vmem:[#allocation2 + $0x5c] sm:$0xf]
      %v1841 = vld [vmem:[#allocation2 + $0x60] sm:$0xf]
      %v1842 = vld [vmem:[#allocation2 + $0x64] sm:$0xf]
      %v1843 = vld [vmem:[#allocation2 + $0x68] sm:$0xf]
      %v1844 = vld [vmem:[#allocation2 + $0x6c] sm:$0xf]
      %v1845 = vld [vmem:[#allocation2 + $0x70] sm:$0xf]
      %v1846 = vld [vmem:[#allocation2 + $0x74] sm:$0xf]
      %v1847 = vld [vmem:[#allocation2 + $0x78] sm:$0xf]
      %v1848 = vld [vmem:[#allocation2 + $0x7c] sm:$0xf]
      %v1849 = vld [vmem:[#allocation2 + $0x80] sm:$0xf]
      %v1850 = vld [vmem:[#allocation2 + $0x84] sm:$0xf]
      %v1851 = vld [vmem:[#allocation2 + $0x88] sm:$0xf]
      %v1852 = vld [vmem:[#allocation2 + $0x8c] sm:$0xf]
      %v1853 = vld [vmem:[%s426] sm:$0xf]
      %v1854 = vld [vmem:[%s426 + $0x4] sm:$0xf]
      %v1855 = vld [vmem:[%s426 + $0x8] sm:$0xf]
      %v1856 = vld [vmem:[%s426 + $0xc] sm:$0xf]
      %v1857 = vld [vmem:[%s426 + $0x10] sm:$0xf]
      %v1858 = vld [vmem:[%s426 + $0x14] sm:$0xf]
      %v1859 = vld [vmem:[%s426 + $0x18] sm:$0xf]
      %v1860 = vld [vmem:[%s426 + $0x1c] sm:$0xf]
      %v1861 = vld [vmem:[%s426 + $0x20] sm:$0xf]
      %v1862 = vld [vmem:[%s426 + $0x24] sm:$0xf]
      %v1863 = vld [vmem:[%s426 + $0x28] sm:$0xf]
      %v1864 = vld [vmem:[%s426 + $0x2c] sm:$0xf]
      %v1865 = vld [vmem:[%s426 + $0x30] sm:$0xf]
      %v1866 = vld [vmem:[%s426 + $0x34] sm:$0xf]
      %v1867 = vld [vmem:[%s426 + $0x38] sm:$0xf]
      %v1868 = vld [vmem:[%s426 + $0x3c] sm:$0xf]
      %v1869 = vld [vmem:[#allocation2 + $0x90] sm:$0x1]
      %s1870 = scalar_lea.vmem %s426, 64
      %v1871 = vld [vmem:[%s1870] sm:$0xf]
      %v1872 = vld [vmem:[%s1870 + $0x4] sm:$0xf]
      %v1873 = vld [vmem:[%s1870 + $0x8] sm:$0xf]
      %v1874 = vld [vmem:[%s1870 + $0xc] sm:$0xf]
      %v1875 = vld [vmem:[%s1870 + $0x10] sm:$0xf]
      %v1876 = vld [vmem:[%s1870 + $0x14] sm:$0xf]
      %v1877 = vld [vmem:[%s1870 + $0x18] sm:$0xf]
      %v1878 = vld [vmem:[%s1870 + $0x1c] sm:$0xf]
      %v1879 = vld [vmem:[%s1870 + $0x20] sm:$0xf]
      %v1880 = vld [vmem:[%s1870 + $0x24] sm:$0xf]
      %v1881 = vld [vmem:[%s1870 + $0x28] sm:$0xf]
      %v1882 = vld [vmem:[%s1870 + $0x2c] sm:$0xf]
      %v1883 = vld [vmem:[%s1870 + $0x30] sm:$0xf]
      %v1884 = vld [vmem:[%s1870 + $0x34] sm:$0xf]
      %v1885 = vld [vmem:[%s1870 + $0x38] sm:$0xf]
      %v1886 = vld [vmem:[%s1870 + $0x3c] sm:$0xf]
      %v1924 = vunpack.c.l.b16 %v1817
      %v1925 = vunpack.c.l.b16 %v1818
      %v1926 = vunpack.c.l.b16 %v1819
      %v1927 = vunpack.c.l.b16 %v1820
      %v1928 = vunpack.c.l.b16 %v1821
      %v1929 = vunpack.c.l.b16 %v1822
      %v1930 = vunpack.c.l.b16 %v1823
      %v1931 = vunpack.c.l.b16 %v1824
      %v1932 = vunpack.c.l.b16 %v1825
      %v1933 = vunpack.c.l.b16 %v1826
      %v1934 = vunpack.c.l.b16 %v1827
      %v1935 = vunpack.c.l.b16 %v1828
      %v1936 = vunpack.c.l.b16 %v1829
      %v1937 = vunpack.c.l.b16 %v1830
      %v1938 = vunpack.c.l.b16 %v1831
      %v1939 = vunpack.c.l.b16 %v1832
      %v1940 = vunpack.c.l.b16 %v1833
      %v1941 = vunpack.c.l.b16 %v1834
      %v1942 = vunpack.c.l.b16 %v1835
      %v1943 = vunpack.c.l.b16 %v1836
      %v1944 = vunpack.c.l.b16 %v1837
      %v1945 = vunpack.c.l.b16 %v1838
      %v1946 = vunpack.c.l.b16 %v1839
      %v1947 = vunpack.c.l.b16 %v1840
      %v1948 = vunpack.c.l.b16 %v1841
      %v1949 = vunpack.c.l.b16 %v1842
      %v1950 = vunpack.c.l.b16 %v1843
      %v1951 = vunpack.c.l.b16 %v1844
      %v1952 = vunpack.c.l.b16 %v1845
      %v1953 = vunpack.c.l.b16 %v1846
      %v1954 = vunpack.c.l.b16 %v1847
      %v1955 = vunpack.c.l.b16 %v1848
      %v1956 = vunpack.c.l.b16 %v1849
      %v1957 = vunpack.c.l.b16 %v1850
      %v1958 = vunpack.c.l.b16 %v1851
      %v1959 = vunpack.c.l.b16 %v1852
      %v1960 = vunpack.c.l.b16 %v1869
      %v1961 = vpack.c.b16 %v1925, %v1924
      %v1962 = vpack.c.b16 %v1927, %v1926
      %v1963 = vpack.c.b16 %v1929, %v1928
      %v1964 = vpack.c.b16 %v1931, %v1930
      %v1965 = vpack.c.b16 %v1933, %v1932
      %v1966 = vpack.c.b16 %v1935, %v1934
      %v1967 = vpack.c.b16 %v1937, %v1936
      %v1968 = vpack.c.b16 %v1939, %v1938
      %v1969 = vpack.c.b16 %v1941, %v1940
      %v1970 = vpack.c.b16 %v1943, %v1942
      %v1971 = vpack.c.b16 %v1945, %v1944
      %v1972 = vpack.c.b16 %v1947, %v1946
      %v1973 = vpack.c.b16 %v1949, %v1948
      %v1974 = vpack.c.b16 %v1951, %v1950
      %v1975 = vpack.c.b16 %v1953, %v1952
      %v1976 = vpack.c.b16 %v1955, %v1954
      %v1977 = vpack.c.b16 %v1957, %v1956
      %v1978 = vpack.c.b16 %v1959, %v1958
      %v1979 = vpack.c.b16 %v1960, %v1960
      %vm1980 = vsmask.f32 7424
      %v1982 = vshrl.u32 %v1961, 16
      %v1984 = vshll.u32 %v1961, 16
      %v1986 = vrot.slane %v1984, 1
      %v1987 = vor.u32 %v1982, %v1986
      %v1989 = vshll.u32 %v1962, 16
      %v1991 = vrot.slane %v1989, 1
      %v1992 = vsel %vm1980, %v1987, %v1991
      %v1993 = vshrl.u32 %v1962, 16
      %v1995 = vor.u32 %v1993, %v1991
      %v1997 = vshll.u32 %v1963, 16
      %v1999 = vrot.slane %v1997, 1
      %v2000 = vsel %vm1980, %v1995, %v1999
      %v2001 = vshrl.u32 %v1963, 16
      %v2003 = vor.u32 %v2001, %v1999
      %v2005 = vshll.u32 %v1964, 16
      %v2007 = vrot.slane %v2005, 1
      %v2008 = vsel %vm1980, %v2003, %v2007
      %v2009 = vshrl.u32 %v1964, 16
      %v2011 = vor.u32 %v2009, %v2007
      %v2013 = vshll.u32 %v1965, 16
      %v2015 = vrot.slane %v2013, 1
      %v2016 = vsel %vm1980, %v2011, %v2015
      %v2017 = vshrl.u32 %v1965, 16
      %v2019 = vor.u32 %v2017, %v2015
      %v2021 = vshll.u32 %v1966, 16
      %v2023 = vrot.slane %v2021, 1
      %v2024 = vsel %vm1980, %v2019, %v2023
      %v2025 = vshrl.u32 %v1966, 16
      %v2027 = vor.u32 %v2025, %v2023
      %v2029 = vshll.u32 %v1967, 16
      %v2031 = vrot.slane %v2029, 1
      %v2032 = vsel %vm1980, %v2027, %v2031
      %v2033 = vshrl.u32 %v1967, 16
      %v2035 = vor.u32 %v2033, %v2031
      %v2037 = vshll.u32 %v1968, 16
      %v2039 = vrot.slane %v2037, 1
      %v2040 = vsel %vm1980, %v2035, %v2039
      %v2041 = vshrl.u32 %v1968, 16
      %v2043 = vor.u32 %v2041, %v2039
      %v2045 = vshll.u32 %v1969, 16
      %v2047 = vrot.slane %v2045, 1
      %v2048 = vsel %vm1980, %v2043, %v2047
      %v2049 = vshrl.u32 %v1969, 16
      %v2051 = vor.u32 %v2049, %v2047
      %v2053 = vshll.u32 %v1970, 16
      %v2055 = vrot.slane %v2053, 1
      %v2056 = vsel %vm1980, %v2051, %v2055
      %v2057 = vshrl.u32 %v1970, 16
      %v2059 = vor.u32 %v2057, %v2055
      %v2061 = vshll.u32 %v1971, 16
      %v2063 = vrot.slane %v2061, 1
      %v2064 = vsel %vm1980, %v2059, %v2063
      %v2065 = vshrl.u32 %v1971, 16
      %v2067 = vor.u32 %v2065, %v2063
      %v2069 = vshll.u32 %v1972, 16
      %v2071 = vrot.slane %v2069, 1
      %v2072 = vsel %vm1980, %v2067, %v2071
      %v2073 = vshrl.u32 %v1972, 16
      %v2075 = vor.u32 %v2073, %v2071
      %v2077 = vshll.u32 %v1973, 16
      %v2079 = vrot.slane %v2077, 1
      %v2080 = vsel %vm1980, %v2075, %v2079
      %v2081 = vshrl.u32 %v1973, 16
      %v2083 = vor.u32 %v2081, %v2079
      %v2085 = vshll.u32 %v1974, 16
      %v2087 = vrot.slane %v2085, 1
      %v2088 = vsel %vm1980, %v2083, %v2087
      %v2089 = vshrl.u32 %v1974, 16
      %v2091 = vor.u32 %v2089, %v2087
      %v2093 = vshll.u32 %v1975, 16
      %v2095 = vrot.slane %v2093, 1
      %v2096 = vsel %vm1980, %v2091, %v2095
      %v2097 = vshrl.u32 %v1975, 16
      %v2099 = vor.u32 %v2097, %v2095
      %v2101 = vshll.u32 %v1976, 16
      %v2103 = vrot.slane %v2101, 1
      %v2104 = vsel %vm1980, %v2099, %v2103
      %v2105 = vshrl.u32 %v1976, 16
      %v2107 = vor.u32 %v2105, %v2103
      %v2109 = vshll.u32 %v1977, 16
      %v2111 = vrot.slane %v2109, 1
      %v2112 = vsel %vm1980, %v2107, %v2111
      %v2113 = vshrl.u32 %v1977, 16
      %v2115 = vor.u32 %v2113, %v2111
      %v2117 = vshll.u32 %v1978, 16
      %v2119 = vrot.slane %v2117, 1
      %v2120 = vsel %vm1980, %v2115, %v2119
      %v2121 = vshrl.u32 %v1978, 16
      %v2123 = vor.u32 %v2121, %v2119
      %v2125 = vshll.u32 %v1979, 16
      %v2127 = vrot.slane %v2125, 1
      %v2128 = vsel %vm1980, %v2123, %v2127
      %v2163 = vunpack.c.l.b16 %v1871
      %v2164 = vunpack.c.l.b16 %v1872
      %v2165 = vunpack.c.l.b16 %v1873
      %v2166 = vunpack.c.l.b16 %v1874
      %v2167 = vunpack.c.l.b16 %v1875
      %v2168 = vunpack.c.l.b16 %v1876
      %v2169 = vunpack.c.l.b16 %v1877
      %v2170 = vunpack.c.l.b16 %v1878
      %v2171 = vunpack.c.l.b16 %v1879
      %v2172 = vunpack.c.l.b16 %v1880
      %v2173 = vunpack.c.l.b16 %v1881
      %v2174 = vunpack.c.l.b16 %v1882
      %v2175 = vunpack.c.l.b16 %v1883
      %v2176 = vunpack.c.l.b16 %v1884
      %v2177 = vunpack.c.l.b16 %v1885
      %v2178 = vunpack.c.l.b16 %v1886
      %v2179 = vpack.c.b16 %v2164, %v2163
      %v2180 = vpack.c.b16 %v2166, %v2165
      %v2181 = vpack.c.b16 %v2168, %v2167
      %v2182 = vpack.c.b16 %v2170, %v2169
      %v2183 = vpack.c.b16 %v2172, %v2171
      %v2184 = vpack.c.b16 %v2174, %v2173
      %v2185 = vpack.c.b16 %v2176, %v2175
      %v2186 = vpack.c.b16 %v2178, %v2177
      %2195 = vmatprep.subr.bf16.mxu0 0
      %2196 = vmatpush1.bf16.msra.mxu0 %v2179
      %2197 = vmatprep.subr.bf16.mxu0 0
      %2198 = vmatpush1.bf16.msra.mxu0 %v2180
      %2199 = vmatprep.subr.bf16.mxu0 0
      %2200 = vmatpush1.bf16.msra.mxu0 %v2181
      %2201 = vmatprep.subr.bf16.mxu0 0
      %2202 = vmatpush1.bf16.msra.mxu0 %v2182
      %2203 = vmatprep.subr.bf16.mxu0 0
      %2204 = vmatpush1.bf16.msra.mxu0 %v2183
      %2205 = vmatprep.subr.bf16.mxu0 0
      %2206 = vmatpush1.bf16.msra.mxu0 %v2184
      %2207 = vmatprep.subr.bf16.mxu0 0
      %2208 = vmatpush1.bf16.msra.mxu0 %v2185
      %2209 = vmatprep.subr.bf16.mxu0 0
      %2210 = vmatpush1.bf16.msra.mxu0 %v2186
      %2211 = vmatprep.subr.bf16.mxu0 0
      %2212 = vmatpush1.bf16.msra.mxu0 0
      %2213 = vmatprep.subr.bf16.mxu0 0
      %2214 = vmatpush1.bf16.msra.mxu0 0
      %2215 = vmatprep.subr.bf16.mxu0 0
      %2216 = vmatpush1.bf16.msra.mxu0 0
      %2217 = vmatprep.subr.bf16.mxu0 0
      %2218 = vmatpush1.bf16.msra.mxu0 0
      %2219 = vmatprep.subr.bf16.mxu0 0
      %2220 = vmatpush1.bf16.msra.mxu0 0
      %2221 = vmatprep.subr.bf16.mxu0 0
      %2222 = vmatpush1.bf16.msra.mxu0 0
      %2223 = vmatprep.subr.bf16.mxu0 0
      %2224 = vmatpush1.bf16.msra.mxu0 0
      %2225 = vmatprep.subr.bf16.mxu0 0
      %2226 = vmatpush1.bf16.msra.mxu0 0
      %2227 = vmatprep.mubr.bf16.mxu0 0
      %2228 = vmatmul.mubr.bf16.gmra.mrb[0].mxu0 %v1992
      %v2229 = vpop.f32.mrb[0].mxu0
      %v2230 = vadd.f32 0.0, %v2229
      %v2231 = vpop.f32.mrb[0].mxu0
      %v2232 = vpop.f32.mrb[0].mxu0
      %v2233 = vadd.f32 0.0, %v2232
      %v2234 = vpop.f32.mrb[0].mxu0
      %2235 = vmatprep.mubr.bf16.mxu0 0
      %2236 = vmatmul.mubr.bf16.gmra.mrb[0].mxu0 %v2000
      %v2237 = vpop.f32.mrb[0].mxu0
      %v2238 = vadd.f32 0.0, %v2237
      %v2239 = vpop.f32.mrb[0].mxu0
      %v2240 = vpop.f32.mrb[0].mxu0
      %v2241 = vadd.f32 0.0, %v2240
      %v2242 = vpop.f32.mrb[0].mxu0
      %2243 = vmatprep.mubr.bf16.mxu0 0
      %2244 = vmatmul.mubr.bf16.gmra.mrb[0].mxu0 %v2008
      %v2245 = vpop.f32.mrb[0].mxu0
      %v2246 = vadd.f32 0.0, %v2245
      %v2247 = vpop.f32.mrb[0].mxu0
      %v2248 = vpop.f32.mrb[0].mxu0
      %v2249 = vadd.f32 0.0, %v2248
      %v2250 = vpop.f32.mrb[0].mxu0
      %2251 = vmatprep.mubr.bf16.mxu0 0
      %2252 = vmatmul.mubr.bf16.gmra.mrb[0].mxu0 %v2016
      %v2253 = vpop.f32.mrb[0].mxu0
      %v2254 = vadd.f32 0.0, %v2253
      %v2255 = vpop.f32.mrb[0].mxu0
      %v2256 = vpop.f32.mrb[0].mxu0
      %v2257 = vadd.f32 0.0, %v2256
      %v2258 = vpop.f32.mrb[0].mxu0
      %2259 = vmatprep.mubr.bf16.mxu0 0
      %2260 = vmatmul.mubr.bf16.gmra.mrb[0].mxu0 %v2024
      %v2261 = vpop.f32.mrb[0].mxu0
      %v2262 = vadd.f32 0.0, %v2261
      %v2263 = vpop.f32.mrb[0].mxu0
      %v2264 = vpop.f32.mrb[0].mxu0
      %v2265 = vadd.f32 0.0, %v2264
      %v2266 = vpop.f32.mrb[0].mxu0
      %2267 = vmatprep.mubr.bf16.mxu0 0
      %2268 = vmatmul.mubr.bf16.gmra.mrb[0].mxu0 %v2032
      %v2269 = vpop.f32.mrb[0].mxu0
      %v2270 = vadd.f32 0.0, %v2269
      %v2271 = vpop.f32.mrb[0].mxu0
      %v2272 = vpop.f32.mrb[0].mxu0
      %v2273 = vadd.f32 0.0, %v2272
      %v2274 = vpop.f32.mrb[0].mxu0
      %2275 = vmatprep.mubr.bf16.mxu0 0
      %2276 = vmatmul.mubr.bf16.gmra.mrb[0].mxu0 %v2040
      %v2277 = vpop.f32.mrb[0].mxu0
      %v2278 = vadd.f32 0.0, %v2277
      %v2279 = vpop.f32.mrb[0].mxu0
      %v2280 = vpop.f32.mrb[0].mxu0
      %v2281 = vadd.f32 0.0, %v2280
      %v2282 = vpop.f32.mrb[0].mxu0
      %2283 = vmatprep.mubr.bf16.mxu0 0
      %2284 = vmatmul.mubr.bf16.gmra.mrb[0].mxu0 %v2048
      %v2285 = vpop.f32.mrb[0].mxu0
      %v2286 = vadd.f32 0.0, %v2285
      %v2287 = vpop.f32.mrb[0].mxu0
      %v2288 = vpop.f32.mrb[0].mxu0
      %v2289 = vadd.f32 0.0, %v2288
      %v2290 = vpop.f32.mrb[0].mxu0
      %2291 = vmatprep.mubr.bf16.mxu0 0
      %2292 = vmatmul.mubr.bf16.gmra.mrb[0].mxu0 %v2056
      %v2293 = vpop.f32.mrb[0].mxu0
      %v2294 = vadd.f32 0.0, %v2293
      %v2295 = vpop.f32.mrb[0].mxu0
      %v2296 = vpop.f32.mrb[0].mxu0
      %v2297 = vadd.f32 0.0, %v2296
      %v2298 = vpop.f32.mrb[0].mxu0
      %2299 = vmatprep.mubr.bf16.mxu0 0
      %2300 = vmatmul.mubr.bf16.gmra.mrb[0].mxu0 %v2064
      %v2301 = vpop.f32.mrb[0].mxu0
      %v2302 = vadd.f32 0.0, %v2301
      %v2303 = vpop.f32.mrb[0].mxu0
      %v2304 = vpop.f32.mrb[0].mxu0
      %v2305 = vadd.f32 0.0, %v2304
      %v2306 = vpop.f32.mrb[0].mxu0
      %2307 = vmatprep.mubr.bf16.mxu0 0
      %2308 = vmatmul.mubr.bf16.gmra.mrb[0].mxu0 %v2072
      %v2309 = vpop.f32.mrb[0].mxu0
      %v2310 = vadd.f32 0.0, %v2309
      %v2311 = vpop.f32.mrb[0].mxu0
      %v2312 = vpop.f32.mrb[0].mxu0
      %v2313 = vadd.f32 0.0, %v2312
      %v2314 = vpop.f32.mrb[0].mxu0
      %2315 = vmatprep.mubr.bf16.mxu0 0
      %2316 = vmatmul.mubr.bf16.gmra.mrb[0].mxu0 %v2080
      %v2317 = vpop.f32.mrb[0].mxu0
      %v2318 = vadd.f32 0.0, %v2317
      %v2319 = vpop.f32.mrb[0].mxu0
      %v2320 = vpop.f32.mrb[0].mxu0
      %v2321 = vadd.f32 0.0, %v2320
      %v2322 = vpop.f32.mrb[0].mxu0
      %2323 = vmatprep.mubr.bf16.mxu0 0
      %2324 = vmatmul.mubr.bf16.gmra.mrb[0].mxu0 %v2088
      %v2325 = vpop.f32.mrb[0].mxu0
      %v2326 = vadd.f32 0.0, %v2325
      %v2327 = vpop.f32.mrb[0].mxu0
      %v2328 = vpop.f32.mrb[0].mxu0
      %v2329 = vadd.f32 0.0, %v2328
      %v2330 = vpop.f32.mrb[0].mxu0
      %2331 = vmatprep.mubr.bf16.mxu0 0
      %2332 = vmatmul.mubr.bf16.gmra.mrb[0].mxu0 %v2096
      %v2333 = vpop.f32.mrb[0].mxu0
      %v2334 = vadd.f32 0.0, %v2333
      %v2335 = vpop.f32.mrb[0].mxu0
      %v2336 = vpop.f32.mrb[0].mxu0
      %v2337 = vadd.f32 0.0, %v2336
      %v2338 = vpop.f32.mrb[0].mxu0
      %2339 = vmatprep.mubr.bf16.mxu0 0
      %2340 = vmatmul.mubr.bf16.gmra.mrb[0].mxu0 %v2104
      %v2341 = vpop.f32.mrb[0].mxu0
      %v2342 = vadd.f32 0.0, %v2341
      %v2343 = vpop.f32.mrb[0].mxu0
      %v2344 = vpop.f32.mrb[0].mxu0
      %v2345 = vadd.f32 0.0, %v2344
      %v2346 = vpop.f32.mrb[0].mxu0
      %2347 = vmatprep.mubr.bf16.mxu0 0
      %2348 = vmatmul.mubr.bf16.gmra.mrb[0].mxu0 %v2112
      %v2349 = vpop.f32.mrb[0].mxu0
      %v2350 = vadd.f32 0.0, %v2349
      %v2351 = vpop.f32.mrb[0].mxu0
      %v2352 = vpop.f32.mrb[0].mxu0
      %v2353 = vadd.f32 0.0, %v2352
      %v2354 = vpop.f32.mrb[0].mxu0
      %2355 = vmatprep.mubr.bf16.mxu0 0
      %2356 = vmatmul.mubr.bf16.gmra.mrb[0].mxu0 %v2120
      %v2357 = vpop.f32.mrb[0].mxu0
      %v2358 = vadd.f32 0.0, %v2357
      %v2359 = vpop.f32.mrb[0].mxu0
      %v2360 = vpop.f32.mrb[0].mxu0
      %v2361 = vadd.f32 0.0, %v2360
      %v2362 = vpop.f32.mrb[0].mxu0
      %2363 = vmatprep.mubr.bf16.mxu0 0
      %2364 = vmatmul.mubr.bf16.gmra.mrb[0].mxu0 %v2128
      %v2365 = vpop.f32.mrb[0].mxu0
      %v2366 = vadd.f32 0.0, %v2365
      %v2367 = vpop.f32.mrb[0].mxu0
      %v2368 = vpop.f32.mrb[0].mxu0
      %v2369 = vadd.f32 0.0, %v2368
      %v2370 = vpop.f32.mrb[0].mxu0
      %2371 = vdwg.mxu0
      %v2406 = vunpack.c.l.b16 %v1853
      %v2407 = vunpack.c.l.b16 %v1854
      %v2408 = vunpack.c.l.b16 %v1855
      %v2409 = vunpack.c.l.b16 %v1856
      %v2410 = vunpack.c.l.b16 %v1857
      %v2411 = vunpack.c.l.b16 %v1858
      %v2412 = vunpack.c.l.b16 %v1859
      %v2413 = vunpack.c.l.b16 %v1860
      %v2414 = vunpack.c.l.b16 %v1861
      %v2415 = vunpack.c.l.b16 %v1862
      %v2416 = vunpack.c.l.b16 %v1863
      %v2417 = vunpack.c.l.b16 %v1864
      %v2418 = vunpack.c.l.b16 %v1865
      %v2419 = vunpack.c.l.b16 %v1866
      %v2420 = vunpack.c.l.b16 %v1867
      %v2421 = vunpack.c.l.b16 %v1868
      %v2422 = vpack.c.b16 %v2407, %v2406
      %v2423 = vpack.c.b16 %v2409, %v2408
      %v2424 = vpack.c.b16 %v2411, %v2410
      %v2425 = vpack.c.b16 %v2413, %v2412
      %v2426 = vpack.c.b16 %v2415, %v2414
      %v2427 = vpack.c.b16 %v2417, %v2416
      %v2428 = vpack.c.b16 %v2419, %v2418
      %v2429 = vpack.c.b16 %v2421, %v2420
      %2438 = vmatprep.subr.bf16.mxu0 0
      %2439 = vmatpush1.bf16.msra.mxu0 %v2422
      %2440 = vmatprep.subr.bf16.mxu0 0
      %2441 = vmatpush1.bf16.msra.mxu0 %v2423
      %2442 = vmatprep.subr.bf16.mxu0 0
      %2443 = vmatpush1.bf16.msra.mxu0 %v2424
      %2444 = vmatprep.subr.bf16.mxu0 0
      %2445 = vmatpush1.bf16.msra.mxu0 %v2425
      %2446 = vmatprep.subr.bf16.mxu0 0
      %2447 = vmatpush1.bf16.msra.mxu0 %v2426
      %2448 = vmatprep.subr.bf16.mxu0 0
      %2449 = vmatpush1.bf16.msra.mxu0 %v2427
      %2450 = vmatprep.subr.bf16.mxu0 0
      %2451 = vmatpush1.bf16.msra.mxu0 %v2428
      %2452 = vmatprep.subr.bf16.mxu0 0
      %2453 = vmatpush1.bf16.msra.mxu0 %v2429
      %2454 = vmatprep.subr.bf16.mxu0 0
      %2455 = vmatpush1.bf16.msra.mxu0 0
      %2456 = vmatprep.subr.bf16.mxu0 0
      %2457 = vmatpush1.bf16.msra.mxu0 0
      %2458 = vmatprep.subr.bf16.mxu0 0
      %2459 = vmatpush1.bf16.msra.mxu0 0
      %2460 = vmatprep.subr.bf16.mxu0 0
      %2461 = vmatpush1.bf16.msra.mxu0 0
      %2462 = vmatprep.subr.bf16.mxu0 0
      %2463 = vmatpush1.bf16.msra.mxu0 0
      %2464 = vmatprep.subr.bf16.mxu0 0
      %2465 = vmatpush1.bf16.msra.mxu0 0
      %2466 = vmatprep.subr.bf16.mxu0 0
      %2467 = vmatpush1.bf16.msra.mxu0 0
      %2468 = vmatprep.subr.bf16.mxu0 0
      %2469 = vmatpush1.bf16.msra.mxu0 0
      %2470 = vmatprep.mubr.bf16.mxu0 0
      %2471 = vmatmul.mubr.bf16.gmra.mrb[0].mxu0 %v1961
      %v2472 = vpop.f32.mrb[0].mxu0
      %v2473 = vadd.f32 %v2230, %v2472
      %v2474 = vpop.f32.mrb[0].mxu0
      %v2475 = vpop.f32.mrb[0].mxu0
      %v2476 = vadd.f32 %v2233, %v2475
      %v2477 = vpop.f32.mrb[0].mxu0
      %2478 = vmatprep.mubr.bf16.mxu0 0
      %2479 = vmatmul.mubr.bf16.gmra.mrb[0].mxu0 %v1962
      %v2480 = vpop.f32.mrb[0].mxu0
      %v2481 = vadd.f32 %v2238, %v2480
      %v2482 = vpop.f32.mrb[0].mxu0
      %v2483 = vpop.f32.mrb[0].mxu0
      %v2484 = vadd.f32 %v2241, %v2483
      %v2485 = vpop.f32.mrb[0].mxu0
      %2486 = vmatprep.mubr.bf16.mxu0 0
      %2487 = vmatmul.mubr.bf16.gmra.mrb[0].mxu0 %v1963
      %v2488 = vpop.f32.mrb[0].mxu0
      %v2489 = vadd.f32 %v2246, %v2488
      %v2490 = vpop.f32.mrb[0].mxu0
      %v2491 = vpop.f32.mrb[0].mxu0
      %v2492 = vadd.f32 %v2249, %v2491
      %v2493 = vpop.f32.mrb[0].mxu0
      %2494 = vmatprep.mubr.bf16.mxu0 0
      %2495 = vmatmul.mubr.bf16.gmra.mrb[0].mxu0 %v1964
      %v2496 = vpop.f32.mrb[0].mxu0
      %v2497 = vadd.f32 %v2254, %v2496
      %v2498 = vpop.f32.mrb[0].mxu0
      %v2499 = vpop.f32.mrb[0].mxu0
      %v2500 = vadd.f32 %v2257, %v2499
      %v2501 = vpop.f32.mrb[0].mxu0
      %2502 = vmatprep.mubr.bf16.mxu0 0
      %2503 = vmatmul.mubr.bf16.gmra.mrb[0].mxu0 %v1965
      %v2504 = vpop.f32.mrb[0].mxu0
      %v2505 = vadd.f32 %v2262, %v2504
      %v2506 = vpop.f32.mrb[0].mxu0
      %v2507 = vpop.f32.mrb[0].mxu0
      %v2508 = vadd.f32 %v2265, %v2507
      %v2509 = vpop.f32.mrb[0].mxu0
      %2510 = vmatprep.mubr.bf16.mxu0 0
      %2511 = vmatmul.mubr.bf16.gmra.mrb[0].mxu0 %v1966
      %v2512 = vpop.f32.mrb[0].mxu0
      %v2513 = vadd.f32 %v2270, %v2512
      %v2514 = vpop.f32.mrb[0].mxu0
      %v2515 = vpop.f32.mrb[0].mxu0
      %v2516 = vadd.f32 %v2273, %v2515
      %v2517 = vpop.f32.mrb[0].mxu0
      %2518 = vmatprep.mubr.bf16.mxu0 0
      %2519 = vmatmul.mubr.bf16.gmra.mrb[0].mxu0 %v1967
      %v2520 = vpop.f32.mrb[0].mxu0
      %v2521 = vadd.f32 %v2278, %v2520
      %v2522 = vpop.f32.mrb[0].mxu0
      %v2523 = vpop.f32.mrb[0].mxu0
      %v2524 = vadd.f32 %v2281, %v2523
      %v2525 = vpop.f32.mrb[0].mxu0
      %2526 = vmatprep.mubr.bf16.mxu0 0
      %2527 = vmatmul.mubr.bf16.gmra.mrb[0].mxu0 %v1968
      %v2528 = vpop.f32.mrb[0].mxu0
      %v2529 = vadd.f32 %v2286, %v2528
      %v2530 = vpop.f32.mrb[0].mxu0
      %v2531 = vpop.f32.mrb[0].mxu0
      %v2532 = vadd.f32 %v2289, %v2531
      %v2533 = vpop.f32.mrb[0].mxu0
      %2534 = vmatprep.mubr.bf16.mxu0 0
      %2535 = vmatmul.mubr.bf16.gmra.mrb[0].mxu0 %v1969
      %v2536 = vpop.f32.mrb[0].mxu0
      %v2537 = vadd.f32 %v2294, %v2536
      %v2538 = vpop.f32.mrb[0].mxu0
      %v2539 = vpop.f32.mrb[0].mxu0
      %v2540 = vadd.f32 %v2297, %v2539
      %v2541 = vpop.f32.mrb[0].mxu0
      %2542 = vmatprep.mubr.bf16.mxu0 0
      %2543 = vmatmul.mubr.bf16.gmra.mrb[0].mxu0 %v1970
      %v2544 = vpop.f32.mrb[0].mxu0
      %v2545 = vadd.f32 %v2302, %v2544
      %v2546 = vpop.f32.mrb[0].mxu0
      %v2547 = vpop.f32.mrb[0].mxu0
      %v2548 = vadd.f32 %v2305, %v2547
      %v2549 = vpop.f32.mrb[0].mxu0
      %2550 = vmatprep.mubr.bf16.mxu0 0
      %2551 = vmatmul.mubr.bf16.gmra.mrb[0].mxu0 %v1971
      %v2552 = vpop.f32.mrb[0].mxu0
      %v2553 = vadd.f32 %v2310, %v2552
      %v2554 = vpop.f32.mrb[0].mxu0
      %v2555 = vpop.f32.mrb[0].mxu0
      %v2556 = vadd.f32 %v2313, %v2555
      %v2557 = vpop.f32.mrb[0].mxu0
      %2558 = vmatprep.mubr.bf16.mxu0 0
      %2559 = vmatmul.mubr.bf16.gmra.mrb[0].mxu0 %v1972
      %v2560 = vpop.f32.mrb[0].mxu0
      %v2561 = vadd.f32 %v2318, %v2560
      %v2562 = vpop.f32.mrb[0].mxu0
      %v2563 = vpop.f32.mrb[0].mxu0
      %v2564 = vadd.f32 %v2321, %v2563
      %v2565 = vpop.f32.mrb[0].mxu0
      %2566 = vmatprep.mubr.bf16.mxu0 0
      %2567 = vmatmul.mubr.bf16.gmra.mrb[0].mxu0 %v1973
      %v2568 = vpop.f32.mrb[0].mxu0
      %v2569 = vadd.f32 %v2326, %v2568
      %v2570 = vpop.f32.mrb[0].mxu0
      %v2571 = vpop.f32.mrb[0].mxu0
      %v2572 = vadd.f32 %v2329, %v2571
      %v2573 = vpop.f32.mrb[0].mxu0
      %2574 = vmatprep.mubr.bf16.mxu0 0
      %2575 = vmatmul.mubr.bf16.gmra.mrb[0].mxu0 %v1974
      %v2576 = vpop.f32.mrb[0].mxu0
      %v2577 = vadd.f32 %v2334, %v2576
      %v2578 = vpop.f32.mrb[0].mxu0
      %v2579 = vpop.f32.mrb[0].mxu0
      %v2580 = vadd.f32 %v2337, %v2579
      %v2581 = vpop.f32.mrb[0].mxu0
      %2582 = vmatprep.mubr.bf16.mxu0 0
      %2583 = vmatmul.mubr.bf16.gmra.mrb[0].mxu0 %v1975
      %v2584 = vpop.f32.mrb[0].mxu0
      %v2585 = vadd.f32 %v2342, %v2584
      %v2586 = vpop.f32.mrb[0].mxu0
      %v2587 = vpop.f32.mrb[0].mxu0
      %v2588 = vadd.f32 %v2345, %v2587
      %v2589 = vpop.f32.mrb[0].mxu0
      %2590 = vmatprep.mubr.bf16.mxu0 0
      %2591 = vmatmul.mubr.bf16.gmra.mrb[0].mxu0 %v1976
      %v2592 = vpop.f32.mrb[0].mxu0
      %v2593 = vadd.f32 %v2350, %v2592
      %v2594 = vpop.f32.mrb[0].mxu0
      %v2595 = vpop.f32.mrb[0].mxu0
      %v2596 = vadd.f32 %v2353, %v2595
      %v2597 = vpop.f32.mrb[0].mxu0
      %2598 = vmatprep.mubr.bf16.mxu0 0
      %2599 = vmatmul.mubr.bf16.gmra.mrb[0].mxu0 %v1977
      %v2600 = vpop.f32.mrb[0].mxu0
      %v2601 = vadd.f32 %v2358, %v2600
      %v2602 = vpop.f32.mrb[0].mxu0
      %v2603 = vpop.f32.mrb[0].mxu0
      %v2604 = vadd.f32 %v2361, %v2603
      %v2605 = vpop.f32.mrb[0].mxu0
      %2606 = vmatprep.mubr.bf16.mxu0 0
      %2607 = vmatmul.mubr.bf16.gmra.mrb[0].mxu0 %v1978
      %v2608 = vpop.f32.mrb[0].mxu0
      %v2609 = vadd.f32 %v2366, %v2608
      %v2610 = vpop.f32.mrb[0].mxu0
      %v2611 = vpop.f32.mrb[0].mxu0
      %v2612 = vadd.f32 %v2369, %v2611
      %v2613 = vpop.f32.mrb[0].mxu0
      %2614 = vdwg.mxu0
      %v2615 = vld [vmem:[#allocation2] sm:$0xe]
      %s2616 = scalar_lea.vmem %s426, 128
      %v2617 = vld [vmem:[%s2616] sm:$0xf]
      %v2618 = vld [vmem:[%s2616 + $0x4] sm:$0xf]
      %v2619 = vld [vmem:[%s2616 + $0x8] sm:$0xf]
      %v2620 = vld [vmem:[%s2616 + $0xc] sm:$0xf]
      %v2621 = vld [vmem:[%s2616 + $0x10] sm:$0xf]
      %v2622 = vld [vmem:[%s2616 + $0x14] sm:$0xf]
      %v2623 = vld [vmem:[%s2616 + $0x18] sm:$0xf]
      %v2624 = vld [vmem:[%s2616 + $0x1c] sm:$0xf]
      %v2625 = vld [vmem:[%s2616 + $0x20] sm:$0xf]
      %v2626 = vld [vmem:[%s2616 + $0x24] sm:$0xf]
      %v2627 = vld [vmem:[%s2616 + $0x28] sm:$0xf]
      %v2628 = vld [vmem:[%s2616 + $0x2c] sm:$0xf]
      %v2629 = vld [vmem:[%s2616 + $0x30] sm:$0xf]
      %v2630 = vld [vmem:[%s2616 + $0x34] sm:$0xf]
      %v2631 = vld [vmem:[%s2616 + $0x38] sm:$0xf]
      %v2632 = vld [vmem:[%s2616 + $0x3c] sm:$0xf]
      %v2634 = vunpack.c.l.b16 %v2615
      %v2635 = vpack.c.b16 %v1925, %v2634
      %vm2636 = vcmask 1046528
      %v2637 = vrot.slane %v2635, 1
      %v2638 = vrot.slane %v1962, 1
      %v2639 = vsel %vm2636, %v2637, %v2638
      %v2640 = vrot.slane %v1963, 1
      %v2641 = vsel %vm2636, %v2638, %v2640
      %v2642 = vrot.slane %v1964, 1
      %v2643 = vsel %vm2636, %v2640, %v2642
      %v2644 = vrot.slane %v1965, 1
      %v2645 = vsel %vm2636, %v2642, %v2644
      %v2646 = vrot.slane %v1966, 1
      %v2647 = vsel %vm2636, %v2644, %v2646
      %v2648 = vrot.slane %v1967, 1
      %v2649 = vsel %vm2636, %v2646, %v2648
      %v2650 = vrot.slane %v1968, 1
      %v2651 = vsel %vm2636, %v2648, %v2650
      %v2652 = vrot.slane %v1969, 1
      %v2653 = vsel %vm2636, %v2650, %v2652
      %v2654 = vrot.slane %v1970, 1
      %v2655 = vsel %vm2636, %v2652, %v2654
      %v2656 = vrot.slane %v1971, 1
      %v2657 = vsel %vm2636, %v2654, %v2656
      %v2658 = vrot.slane %v1972, 1
      %v2659 = vsel %vm2636, %v2656, %v2658
      %v2660 = vrot.slane %v1973, 1
      %v2661 = vsel %vm2636, %v2658, %v2660
      %v2662 = vrot.slane %v1974, 1
      %v2663 = vsel %vm2636, %v2660, %v2662
      %v2664 = vrot.slane %v1975, 1
      %v2665 = vsel %vm2636, %v2662, %v2664
      %v2666 = vrot.slane %v1976, 1
      %v2667 = vsel %vm2636, %v2664, %v2666
      %v2668 = vrot.slane %v1977, 1
      %v2669 = vsel %vm2636, %v2666, %v2668
      %v2670 = vrot.slane %v1978, 1
      %v2671 = vsel %vm2636, %v2668, %v2670
      %v2672 = vrot.slane %v1979, 1
      %v2673 = vsel %vm2636, %v2670, %v2672
      %v2708 = vunpack.c.l.b16 %v2617
      %v2709 = vunpack.c.l.b16 %v2618
      %v2710 = vunpack.c.l.b16 %v2619
      %v2711 = vunpack.c.l.b16 %v2620
      %v2712 = vunpack.c.l.b16 %v2621
      %v2713 = vunpack.c.l.b16 %v2622
      %v2714 = vunpack.c.l.b16 %v2623
      %v2715 = vunpack.c.l.b16 %v2624
      %v2716 = vunpack.c.l.b16 %v2625
      %v2717 = vunpack.c.l.b16 %v2626
      %v2718 = vunpack.c.l.b16 %v2627
      %v2719 = vunpack.c.l.b16 %v2628
      %v2720 = vunpack.c.l.b16 %v2629
      %v2721 = vunpack.c.l.b16 %v2630
      %v2722 = vunpack.c.l.b16 %v2631
      %v2723 = vunpack.c.l.b16 %v2632
      %v2724 = vpack.c.b16 %v2709, %v2708
      %v2725 = vpack.c.b16 %v2711, %v2710
      %v2726 = vpack.c.b16 %v2713, %v2712
      %v2727 = vpack.c.b16 %v2715, %v2714
      %v2728 = vpack.c.b16 %v2717, %v2716
      %v2729 = vpack.c.b16 %v2719, %v2718
      %v2730 = vpack.c.b16 %v2721, %v2720
      %v2731 = vpack.c.b16 %v2723, %v2722
      %2740 = vmatprep.subr.bf16.mxu0 0
      %2741 = vmatpush1.bf16.msra.mxu0 %v2724
      %2742 = vmatprep.subr.bf16.mxu0 0
      %2743 = vmatpush1.bf16.msra.mxu0 %v2725
      %2744 = vmatprep.subr.bf16.mxu0 0
      %2745 = vmatpush1.bf16.msra.mxu0 %v2726
      %2746 = vmatprep.subr.bf16.mxu0 0
      %2747 = vmatpush1.bf16.msra.mxu0 %v2727
      %2748 = vmatprep.subr.bf16.mxu0 0
      %2749 = vmatpush1.bf16.msra.mxu0 %v2728
      %2750 = vmatprep.subr.bf16.mxu0 0
      %2751 = vmatpush1.bf16.msra.mxu0 %v2729
      %2752 = vmatprep.subr.bf16.mxu0 0
      %2753 = vmatpush1.bf16.msra.mxu0 %v2730
      %2754 = vmatprep.subr.bf16.mxu0 0
      %2755 = vmatpush1.bf16.msra.mxu0 %v2731
      %2756 = vmatprep.subr.bf16.mxu0 0
      %2757 = vmatpush1.bf16.msra.mxu0 0
      %2758 = vmatprep.subr.bf16.mxu0 0
      %2759 = vmatpush1.bf16.msra.mxu0 0
      %2760 = vmatprep.subr.bf16.mxu0 0
      %2761 = vmatpush1.bf16.msra.mxu0 0
      %2762 = vmatprep.subr.bf16.mxu0 0
      %2763 = vmatpush1.bf16.msra.mxu0 0
      %2764 = vmatprep.subr.bf16.mxu0 0
      %2765 = vmatpush1.bf16.msra.mxu0 0
      %2766 = vmatprep.subr.bf16.mxu0 0
      %2767 = vmatpush1.bf16.msra.mxu0 0
      %2768 = vmatprep.subr.bf16.mxu0 0
      %2769 = vmatpush1.bf16.msra.mxu0 0
      %2770 = vmatprep.subr.bf16.mxu0 0
      %2771 = vmatpush1.bf16.msra.mxu0 0
      %2772 = vmatprep.mubr.bf16.mxu0 0
      %2773 = vmatmul.mubr.bf16.gmra.mrb[0].mxu0 %v2639
      %v2774 = vpop.f32.mrb[0].mxu0
      %v2775 = vadd.f32 0.0, %v2774
      %v2776 = vpop.f32.mrb[0].mxu0
      %v2777 = vpop.f32.mrb[0].mxu0
      %v2778 = vadd.f32 0.0, %v2777
      %v2779 = vpop.f32.mrb[0].mxu0
      %2780 = vmatprep.mubr.bf16.mxu0 0
      %2781 = vmatmul.mubr.bf16.gmra.mrb[0].mxu0 %v2641
      %v2782 = vpop.f32.mrb[0].mxu0
      %v2783 = vadd.f32 0.0, %v2782
      %v2784 = vpop.f32.mrb[0].mxu0
      %v2785 = vpop.f32.mrb[0].mxu0
      %v2786 = vadd.f32 0.0, %v2785
      %v2787 = vpop.f32.mrb[0].mxu0
      %2788 = vmatprep.mubr.bf16.mxu0 0
      %2789 = vmatmul.mubr.bf16.gmra.mrb[0].mxu0 %v2643
      %v2790 = vpop.f32.mrb[0].mxu0
      %v2791 = vadd.f32 0.0, %v2790
      %v2792 = vpop.f32.mrb[0].mxu0
      %v2793 = vpop.f32.mrb[0].mxu0
      %v2794 = vadd.f32 0.0, %v2793
      %v2795 = vpop.f32.mrb[0].mxu0
      %2796 = vmatprep.mubr.bf16.mxu0 0
      %2797 = vmatmul.mubr.bf16.gmra.mrb[0].mxu0 %v2645
      %v2798 = vpop.f32.mrb[0].mxu0
      %v2799 = vadd.f32 0.0, %v2798
      %v2800 = vpop.f32.mrb[0].mxu0
      %v2801 = vpop.f32.mrb[0].mxu0
      %v2802 = vadd.f32 0.0, %v2801
      %v2803 = vpop.f32.mrb[0].mxu0
      %2804 = vmatprep.mubr.bf16.mxu0 0
      %2805 = vmatmul.mubr.bf16.gmra.mrb[0].mxu0 %v2647
      %v2806 = vpop.f32.mrb[0].mxu0
      %v2807 = vadd.f32 0.0, %v2806
      %v2808 = vpop.f32.mrb[0].mxu0
      %v2809 = vpop.f32.mrb[0].mxu0
      %v2810 = vadd.f32 0.0, %v2809
      %v2811 = vpop.f32.mrb[0].mxu0
      %2812 = vmatprep.mubr.bf16.mxu0 0
      %2813 = vmatmul.mubr.bf16.gmra.mrb[0].mxu0 %v2649
      %v2814 = vpop.f32.mrb[0].mxu0
      %v2815 = vadd.f32 0.0, %v2814
      %v2816 = vpop.f32.mrb[0].mxu0
      %v2817 = vpop.f32.mrb[0].mxu0
      %v2818 = vadd.f32 0.0, %v2817
      %v2819 = vpop.f32.mrb[0].mxu0
      %2820 = vmatprep.mubr.bf16.mxu0 0
      %2821 = vmatmul.mubr.bf16.gmra.mrb[0].mxu0 %v2651
      %v2822 = vpop.f32.mrb[0].mxu0
      %v2823 = vadd.f32 0.0, %v2822
      %v2824 = vpop.f32.mrb[0].mxu0
      %v2825 = vpop.f32.mrb[0].mxu0
      %v2826 = vadd.f32 0.0, %v2825
      %v2827 = vpop.f32.mrb[0].mxu0
      %2828 = vmatprep.mubr.bf16.mxu0 0
      %2829 = vmatmul.mubr.bf16.gmra.mrb[0].mxu0 %v2653
      %v2830 = vpop.f32.mrb[0].mxu0
      %v2831 = vadd.f32 0.0, %v2830
      %v2832 = vpop.f32.mrb[0].mxu0
      %v2833 = vpop.f32.mrb[0].mxu0
      %v2834 = vadd.f32 0.0, %v2833
      %v2835 = vpop.f32.mrb[0].mxu0
      %2836 = vmatprep.mubr.bf16.mxu0 0
      %2837 = vmatmul.mubr.bf16.gmra.mrb[0].mxu0 %v2655
      %v2838 = vpop.f32.mrb[0].mxu0
      %v2839 = vadd.f32 0.0, %v2838
      %v2840 = vpop.f32.mrb[0].mxu0
      %v2841 = vpop.f32.mrb[0].mxu0
      %v2842 = vadd.f32 0.0, %v2841
      %v2843 = vpop.f32.mrb[0].mxu0
      %2844 = vmatprep.mubr.bf16.mxu0 0
      %2845 = vmatmul.mubr.bf16.gmra.mrb[0].mxu0 %v2657
      %v2846 = vpop.f32.mrb[0].mxu0
      %v2847 = vadd.f32 0.0, %v2846
      %v2848 = vpop.f32.mrb[0].mxu0
      %v2849 = vpop.f32.mrb[0].mxu0
      %v2850 = vadd.f32 0.0, %v2849
      %v2851 = vpop.f32.mrb[0].mxu0
      %2852 = vmatprep.mubr.bf16.mxu0 0
      %2853 = vmatmul.mubr.bf16.gmra.mrb[0].mxu0 %v2659
      %v2854 = vpop.f32.mrb[0].mxu0
      %v2855 = vadd.f32 0.0, %v2854
      %v2856 = vpop.f32.mrb[0].mxu0
      %v2857 = vpop.f32.mrb[0].mxu0
      %v2858 = vadd.f32 0.0, %v2857
      %v2859 = vpop.f32.mrb[0].mxu0
      %2860 = vmatprep.mubr.bf16.mxu0 0
      %2861 = vmatmul.mubr.bf16.gmra.mrb[0].mxu0 %v2661
      %v2862 = vpop.f32.mrb[0].mxu0
      %v2863 = vadd.f32 0.0, %v2862
      %v2864 = vpop.f32.mrb[0].mxu0
      %v2865 = vpop.f32.mrb[0].mxu0
      %v2866 = vadd.f32 0.0, %v2865
      %v2867 = vpop.f32.mrb[0].mxu0
      %2868 = vmatprep.mubr.bf16.mxu0 0
      %2869 = vmatmul.mubr.bf16.gmra.mrb[0].mxu0 %v2663
      %v2870 = vpop.f32.mrb[0].mxu0
      %v2871 = vadd.f32 0.0, %v2870
      %v2872 = vpop.f32.mrb[0].mxu0
      %v2873 = vpop.f32.mrb[0].mxu0
      %v2874 = vadd.f32 0.0, %v2873
      %v2875 = vpop.f32.mrb[0].mxu0
      %2876 = vmatprep.mubr.bf16.mxu0 0
      %2877 = vmatmul.mubr.bf16.gmra.mrb[0].mxu0 %v2665
      %v2878 = vpop.f32.mrb[0].mxu0
      %v2879 = vadd.f32 0.0, %v2878
      %v2880 = vpop.f32.mrb[0].mxu0
      %v2881 = vpop.f32.mrb[0].mxu0
      %v2882 = vadd.f32 0.0, %v2881
      %v2883 = vpop.f32.mrb[0].mxu0
      %2884 = vmatprep.mubr.bf16.mxu0 0
      %2885 = vmatmul.mubr.bf16.gmra.mrb[0].mxu0 %v2667
      %v2886 = vpop.f32.mrb[0].mxu0
      %v2887 = vadd.f32 0.0, %v2886
      %v2888 = vpop.f32.mrb[0].mxu0
      %v2889 = vpop.f32.mrb[0].mxu0
      %v2890 = vadd.f32 0.0, %v2889
      %v2891 = vpop.f32.mrb[0].mxu0
      %2892 = vmatprep.mubr.bf16.mxu0 0
      %2893 = vmatmul.mubr.bf16.gmra.mrb[0].mxu0 %v2669
      %v2894 = vpop.f32.mrb[0].mxu0
      %v2895 = vadd.f32 0.0, %v2894
      %v2896 = vpop.f32.mrb[0].mxu0
      %v2897 = vpop.f32.mrb[0].mxu0
      %v2898 = vadd.f32 0.0, %v2897
      %v2899 = vpop.f32.mrb[0].mxu0
      %2900 = vmatprep.mubr.bf16.mxu0 0
      %2901 = vmatmul.mubr.bf16.gmra.mrb[0].mxu0 %v2671
      %v2902 = vpop.f32.mrb[0].mxu0
      %v2903 = vadd.f32 0.0, %v2902
      %v2904 = vpop.f32.mrb[0].mxu0
      %v2905 = vpop.f32.mrb[0].mxu0
      %v2906 = vadd.f32 0.0, %v2905
      %v2907 = vpop.f32.mrb[0].mxu0
      %2908 = vmatprep.mubr.bf16.mxu0 0
      %2909 = vmatmul.mubr.bf16.gmra.mrb[0].mxu0 %v2673
      %v2910 = vpop.f32.mrb[0].mxu0
      %v2911 = vadd.f32 0.0, %v2910
      %v2912 = vpop.f32.mrb[0].mxu0
      %v2913 = vpop.f32.mrb[0].mxu0
      %v2914 = vadd.f32 0.0, %v2913
      %v2915 = vpop.f32.mrb[0].mxu0
      %2916 = vdwg.mxu0
      %v2917 = vadd.f32 %v2473, %v2775
      %v2918 = vadd.f32 %v2476, %v2778
      %v2919 = vadd.f32 %v2481, %v2783
      %v2920 = vadd.f32 %v2484, %v2786
      %v2921 = vadd.f32 %v2489, %v2791
      %v2922 = vadd.f32 %v2492, %v2794
      %v2923 = vadd.f32 %v2497, %v2799
      %v2924 = vadd.f32 %v2500, %v2802
      %v2925 = vadd.f32 %v2505, %v2807
      %v2926 = vadd.f32 %v2508, %v2810
      %v2927 = vadd.f32 %v2513, %v2815
      %v2928 = vadd.f32 %v2516, %v2818
      %v2929 = vadd.f32 %v2521, %v2823
      %v2930 = vadd.f32 %v2524, %v2826
      %v2931 = vadd.f32 %v2529, %v2831
      %v2932 = vadd.f32 %v2532, %v2834
      %v2933 = vadd.f32 %v2537, %v2839
      %v2934 = vadd.f32 %v2540, %v2842
      %v2935 = vadd.f32 %v2545, %v2847
      %v2936 = vadd.f32 %v2548, %v2850
      %v2937 = vadd.f32 %v2553, %v2855
      %v2938 = vadd.f32 %v2556, %v2858
      %v2939 = vadd.f32 %v2561, %v2863
      %v2940 = vadd.f32 %v2564, %v2866
      %v2941 = vadd.f32 %v2569, %v2871
      %v2942 = vadd.f32 %v2572, %v2874
      %v2943 = vadd.f32 %v2577, %v2879
      %v2944 = vadd.f32 %v2580, %v2882
      %v2945 = vadd.f32 %v2585, %v2887
      %v2946 = vadd.f32 %v2588, %v2890
      %v2947 = vadd.f32 %v2593, %v2895
      %v2948 = vadd.f32 %v2596, %v2898
      %v2949 = vadd.f32 %v2601, %v2903
      %v2950 = vadd.f32 %v2604, %v2906
      %v2951 = vadd.f32 %v2609, %v2911
      %v2952 = vadd.f32 %v2612, %v2914
      %v2953 = vld [vmem:[#allocation2 + $0x8] sm:$0xe]
      %v2954 = vld [vmem:[#allocation2 + $0xc] sm:$0xf]
      %v2955 = vld [vmem:[#allocation2 + $0x10] sm:$0xf]
      %v2956 = vld [vmem:[#allocation2 + $0x14] sm:$0xf]
      %v2957 = vld [vmem:[#allocation2 + $0x18] sm:$0xf]
      %v2958 = vld [vmem:[#allocation2 + $0x1c] sm:$0xf]
      %v2959 = vld [vmem:[#allocation2 + $0x20] sm:$0xf]
      %v2960 = vld [vmem:[#allocation2 + $0x24] sm:$0xf]
      %v2961 = vld [vmem:[#allocation2 + $0x28] sm:$0xf]
      %v2962 = vld [vmem:[#allocation2 + $0x2c] sm:$0xf]
      %v2963 = vld [vmem:[#allocation2 + $0x30] sm:$0xf]
      %v2964 = vld [vmem:[#allocation2 + $0x34] sm:$0xf]
      %v2965 = vld [vmem:[#allocation2 + $0x38] sm:$0xf]
      %v2966 = vld [vmem:[#allocation2 + $0x3c] sm:$0xf]
      %v2967 = vld [vmem:[#allocation2 + $0x40] sm:$0xf]
      %v2968 = vld [vmem:[#allocation2 + $0x44] sm:$0xf]
      %v2969 = vld [vmem:[#allocation2 + $0x48] sm:$0xf]
      %v2970 = vld [vmem:[#allocation2 + $0x4c] sm:$0xf]
      %v2971 = vld [vmem:[#allocation2 + $0x50] sm:$0xf]
      %v2972 = vld [vmem:[#allocation2 + $0x54] sm:$0xf]
      %v2973 = vld [vmem:[#allocation2 + $0x58] sm:$0xf]
      %v2974 = vld [vmem:[#allocation2 + $0x5c] sm:$0xf]
      %v2975 = vld [vmem:[#allocation2 + $0x60] sm:$0xf]
      %v2976 = vld [vmem:[#allocation2 + $0x64] sm:$0xf]
      %v2977 = vld [vmem:[#allocation2 + $0x68] sm:$0xf]
      %v2978 = vld [vmem:[#allocation2 + $0x6c] sm:$0xf]
      %v2979 = vld [vmem:[#allocation2 + $0x70] sm:$0xf]
      %v2980 = vld [vmem:[#allocation2 + $0x74] sm:$0xf]
      %v2981 = vld [vmem:[#allocation2 + $0x78] sm:$0xf]
      %v2982 = vld [vmem:[#allocation2 + $0x7c] sm:$0xf]
      %v2983 = vld [vmem:[#allocation2 + $0x80] sm:$0xf]
      %v2984 = vld [vmem:[#allocation2 + $0x84] sm:$0xf]
      %v2985 = vld [vmem:[#allocation2 + $0x88] sm:$0xf]
      %v2986 = vld [vmem:[#allocation2 + $0x8c] sm:$0xf]
      %v2987 = vld [vmem:[#allocation2 + $0x90] sm:$0xf]
      %v2988 = vld [vmem:[#allocation2 + $0x94] sm:$0xf]
      %v2989 = vld [vmem:[#allocation2 + $0x98] sm:$0x1]
      %s2990 = scalar_lea.vmem %s426, 192
      %v2991 = vld [vmem:[%s2990] sm:$0xf]
      %v2992 = vld [vmem:[%s2990 + $0x4] sm:$0xf]
      %v2993 = vld [vmem:[%s2990 + $0x8] sm:$0xf]
      %v2994 = vld [vmem:[%s2990 + $0xc] sm:$0xf]
      %v2995 = vld [vmem:[%s2990 + $0x10] sm:$0xf]
      %v2996 = vld [vmem:[%s2990 + $0x14] sm:$0xf]
      %v2997 = vld [vmem:[%s2990 + $0x18] sm:$0xf]
      %v2998 = vld [vmem:[%s2990 + $0x1c] sm:$0xf]
      %v2999 = vld [vmem:[%s2990 + $0x20] sm:$0xf]
      %v3000 = vld [vmem:[%s2990 + $0x24] sm:$0xf]
      %v3001 = vld [vmem:[%s2990 + $0x28] sm:$0xf]
      %v3002 = vld [vmem:[%s2990 + $0x2c] sm:$0xf]
      %v3003 = vld [vmem:[%s2990 + $0x30] sm:$0xf]
      %v3004 = vld [vmem:[%s2990 + $0x34] sm:$0xf]
      %v3005 = vld [vmem:[%s2990 + $0x38] sm:$0xf]
      %v3006 = vld [vmem:[%s2990 + $0x3c] sm:$0xf]
      %v3044 = vunpack.c.l.b16 %v2953
      %v3045 = vunpack.c.l.b16 %v2954
      %v3046 = vunpack.c.l.b16 %v2955
      %v3047 = vunpack.c.l.b16 %v2956
      %v3048 = vunpack.c.l.b16 %v2957
      %v3049 = vunpack.c.l.b16 %v2958
      %v3050 = vunpack.c.l.b16 %v2959
      %v3051 = vunpack.c.l.b16 %v2960
      %v3052 = vunpack.c.l.b16 %v2961
      %v3053 = vunpack.c.l.b16 %v2962
      %v3054 = vunpack.c.l.b16 %v2963
      %v3055 = vunpack.c.l.b16 %v2964
      %v3056 = vunpack.c.l.b16 %v2965
      %v3057 = vunpack.c.l.b16 %v2966
      %v3058 = vunpack.c.l.b16 %v2967
      %v3059 = vunpack.c.l.b16 %v2968
      %v3060 = vunpack.c.l.b16 %v2969
      %v3061 = vunpack.c.l.b16 %v2970
      %v3062 = vunpack.c.l.b16 %v2971
      %v3063 = vunpack.c.l.b16 %v2972
      %v3064 = vunpack.c.l.b16 %v2973
      %v3065 = vunpack.c.l.b16 %v2974
      %v3066 = vunpack.c.l.b16 %v2975
      %v3067 = vunpack.c.l.b16 %v2976
      %v3068 = vunpack.c.l.b16 %v2977
      %v3069 = vunpack.c.l.b16 %v2978
      %v3070 = vunpack.c.l.b16 %v2979
      %v3071 = vunpack.c.l.b16 %v2980
      %v3072 = vunpack.c.l.b16 %v2981
      %v3073 = vunpack.c.l.b16 %v2982
      %v3074 = vunpack.c.l.b16 %v2983
      %v3075 = vunpack.c.l.b16 %v2984
      %v3076 = vunpack.c.l.b16 %v2985
      %v3077 = vunpack.c.l.b16 %v2986
      %v3078 = vunpack.c.l.b16 %v2987
      %v3079 = vunpack.c.l.b16 %v2988
      %v3080 = vunpack.c.l.b16 %v2989
      %v3081 = vpack.c.b16 %v3045, %v3044
      %v3082 = vpack.c.b16 %v3047, %v3046
      %v3083 = vpack.c.b16 %v3049, %v3048
      %v3084 = vpack.c.b16 %v3051, %v3050
      %v3085 = vpack.c.b16 %v3053, %v3052
      %v3086 = vpack.c.b16 %v3055, %v3054
      %v3087 = vpack.c.b16 %v3057, %v3056
      %v3088 = vpack.c.b16 %v3059, %v3058
      %v3089 = vpack.c.b16 %v3061, %v3060
      %v3090 = vpack.c.b16 %v3063, %v3062
      %v3091 = vpack.c.b16 %v3065, %v3064
      %v3092 = vpack.c.b16 %v3067, %v3066
      %v3093 = vpack.c.b16 %v3069, %v3068
      %v3094 = vpack.c.b16 %v3071, %v3070
      %v3095 = vpack.c.b16 %v3073, %v3072
      %v3096 = vpack.c.b16 %v3075, %v3074
      %v3097 = vpack.c.b16 %v3077, %v3076
      %v3098 = vpack.c.b16 %v3079, %v3078
      %v3099 = vpack.c.b16 %v3080, %v3080
      %v3100 = vrot.slane %v3081, 1
      %v3101 = vrot.slane %v3082, 1
      %v3102 = vsel %vm2636, %v3100, %v3101
      %v3103 = vrot.slane %v3083, 1
      %v3104 = vsel %vm2636, %v3101, %v3103
      %v3105 = vrot.slane %v3084, 1
      %v3106 = vsel %vm2636, %v3103, %v3105
      %v3107 = vrot.slane %v3085, 1
      %v3108 = vsel %vm2636, %v3105, %v3107
      %v3109 = vrot.slane %v3086, 1
      %v3110 = vsel %vm2636, %v3107, %v3109
      %v3111 = vrot.slane %v3087, 1
      %v3112 = vsel %vm2636, %v3109, %v3111
      %v3113 = vrot.slane %v3088, 1
      %v3114 = vsel %vm2636, %v3111, %v3113
      %v3115 = vrot.slane %v3089, 1
      %v3116 = vsel %vm2636, %v3113, %v3115
      %v3117 = vrot.slane %v3090, 1
      %v3118 = vsel %vm2636, %v3115, %v3117
      %v3119 = vrot.slane %v3091, 1
      %v3120 = vsel %vm2636, %v3117, %v3119
      %v3121 = vrot.slane %v3092, 1
      %v3122 = vsel %vm2636, %v3119, %v3121
      %v3123 = vrot.slane %v3093, 1
      %v3124 = vsel %vm2636, %v3121, %v3123
      %v3125 = vrot.slane %v3094, 1
      %v3126 = vsel %vm2636, %v3123, %v3125
      %v3127 = vrot.slane %v3095, 1
      %v3128 = vsel %vm2636, %v3125, %v3127
      %v3129 = vrot.slane %v3096, 1
      %v3130 = vsel %vm2636, %v3127, %v3129
      %v3131 = vrot.slane %v3097, 1
      %v3132 = vsel %vm2636, %v3129, %v3131
      %v3133 = vrot.slane %v3098, 1
      %v3134 = vsel %vm2636, %v3131, %v3133
      %v3135 = vrot.slane %v3099, 1
      %v3136 = vsel %vm2636, %v3133, %v3135
      %v3171 = vunpack.c.l.b16 %v2991
      %v3172 = vunpack.c.l.b16 %v2992
      %v3173 = vunpack.c.l.b16 %v2993
      %v3174 = vunpack.c.l.b16 %v2994
      %v3175 = vunpack.c.l.b16 %v2995
      %v3176 = vunpack.c.l.b16 %v2996
      %v3177 = vunpack.c.l.b16 %v2997
      %v3178 = vunpack.c.l.b16 %v2998
      %v3179 = vunpack.c.l.b16 %v2999
      %v3180 = vunpack.c.l.b16 %v3000
      %v3181 = vunpack.c.l.b16 %v3001
      %v3182 = vunpack.c.l.b16 %v3002
      %v3183 = vunpack.c.l.b16 %v3003
      %v3184 = vunpack.c.l.b16 %v3004
      %v3185 = vunpack.c.l.b16 %v3005
      %v3186 = vunpack.c.l.b16 %v3006
      %v3187 = vpack.c.b16 %v3172, %v3171
      %v3188 = vpack.c.b16 %v3174, %v3173
      %v3189 = vpack.c.b16 %v3176, %v3175
      %v3190 = vpack.c.b16 %v3178, %v3177
      %v3191 = vpack.c.b16 %v3180, %v3179
      %v3192 = vpack.c.b16 %v3182, %v3181
      %v3193 = vpack.c.b16 %v3184, %v3183
      %v3194 = vpack.c.b16 %v3186, %v3185
      %3203 = vmatprep.subr.bf16.mxu0 0
      %3204 = vmatpush1.bf16.msra.mxu0 %v3187
      %3205 = vmatprep.subr.bf16.mxu0 0
      %3206 = vmatpush1.bf16.msra.mxu0 %v3188
      %3207 = vmatprep.subr.bf16.mxu0 0
      %3208 = vmatpush1.bf16.msra.mxu0 %v3189
      %3209 = vmatprep.subr.bf16.mxu0 0
      %3210 = vmatpush1.bf16.msra.mxu0 %v3190
      %3211 = vmatprep.subr.bf16.mxu0 0
      %3212 = vmatpush1.bf16.msra.mxu0 %v3191
      %3213 = vmatprep.subr.bf16.mxu0 0
      %3214 = vmatpush1.bf16.msra.mxu0 %v3192
      %3215 = vmatprep.subr.bf16.mxu0 0
      %3216 = vmatpush1.bf16.msra.mxu0 %v3193
      %3217 = vmatprep.subr.bf16.mxu0 0
      %3218 = vmatpush1.bf16.msra.mxu0 %v3194
      %3219 = vmatprep.subr.bf16.mxu0 0
      %3220 = vmatpush1.bf16.msra.mxu0 0
      %3221 = vmatprep.subr.bf16.mxu0 0
      %3222 = vmatpush1.bf16.msra.mxu0 0
      %3223 = vmatprep.subr.bf16.mxu0 0
      %3224 = vmatpush1.bf16.msra.mxu0 0
      %3225 = vmatprep.subr.bf16.mxu0 0
      %3226 = vmatpush1.bf16.msra.mxu0 0
      %3227 = vmatprep.subr.bf16.mxu0 0
      %3228 = vmatpush1.bf16.msra.mxu0 0
      %3229 = vmatprep.subr.bf16.mxu0 0
      %3230 = vmatpush1.bf16.msra.mxu0 0
      %3231 = vmatprep.subr.bf16.mxu0 0
      %3232 = vmatpush1.bf16.msra.mxu0 0
      %3233 = vmatprep.subr.bf16.mxu0 0
      %3234 = vmatpush1.bf16.msra.mxu0 0
      %3235 = vmatprep.mubr.bf16.mxu0 0
      %3236 = vmatmul.mubr.bf16.gmra.mrb[0].mxu0 %v3102
      %v3237 = vpop.f32.mrb[0].mxu0
      %v3238 = vadd.f32 0.0, %v3237
      %v3239 = vpop.f32.mrb[0].mxu0
      %v3240 = vpop.f32.mrb[0].mxu0
      %v3241 = vadd.f32 0.0, %v3240
      %v3242 = vpop.f32.mrb[0].mxu0
      %3243 = vmatprep.mubr.bf16.mxu0 0
      %3244 = vmatmul.mubr.bf16.gmra.mrb[0].mxu0 %v3104
      %v3245 = vpop.f32.mrb[0].mxu0
      %v3246 = vadd.f32 0.0, %v3245
      %v3247 = vpop.f32.mrb[0].mxu0
      %v3248 = vpop.f32.mrb[0].mxu0
      %v3249 = vadd.f32 0.0, %v3248
      %v3250 = vpop.f32.mrb[0].mxu0
      %3251 = vmatprep.mubr.bf16.mxu0 0
      %3252 = vmatmul.mubr.bf16.gmra.mrb[0].mxu0 %v3106
      %v3253 = vpop.f32.mrb[0].mxu0
      %v3254 = vadd.f32 0.0, %v3253
      %v3255 = vpop.f32.mrb[0].mxu0
      %v3256 = vpop.f32.mrb[0].mxu0
      %v3257 = vadd.f32 0.0, %v3256
      %v3258 = vpop.f32.mrb[0].mxu0
      %3259 = vmatprep.mubr.bf16.mxu0 0
      %3260 = vmatmul.mubr.bf16.gmra.mrb[0].mxu0 %v3108
      %v3261 = vpop.f32.mrb[0].mxu0
      %v3262 = vadd.f32 0.0, %v3261
      %v3263 = vpop.f32.mrb[0].mxu0
      %v3264 = vpop.f32.mrb[0].mxu0
      %v3265 = vadd.f32 0.0, %v3264
      %v3266 = vpop.f32.mrb[0].mxu0
      %3267 = vmatprep.mubr.bf16.mxu0 0
      %3268 = vmatmul.mubr.bf16.gmra.mrb[0].mxu0 %v3110
      %v3269 = vpop.f32.mrb[0].mxu0
      %v3270 = vadd.f32 0.0, %v3269
      %v3271 = vpop.f32.mrb[0].mxu0
      %v3272 = vpop.f32.mrb[0].mxu0
      %v3273 = vadd.f32 0.0, %v3272
      %v3274 = vpop.f32.mrb[0].mxu0
      %3275 = vmatprep.mubr.bf16.mxu0 0
      %3276 = vmatmul.mubr.bf16.gmra.mrb[0].mxu0 %v3112
      %v3277 = vpop.f32.mrb[0].mxu0
      %v3278 = vadd.f32 0.0, %v3277
      %v3279 = vpop.f32.mrb[0].mxu0
      %v3280 = vpop.f32.mrb[0].mxu0
      %v3281 = vadd.f32 0.0, %v3280
      %v3282 = vpop.f32.mrb[0].mxu0
      %3283 = vmatprep.mubr.bf16.mxu0 0
      %3284 = vmatmul.mubr.bf16.gmra.mrb[0].mxu0 %v3114
      %v3285 = vpop.f32.mrb[0].mxu0
      %v3286 = vadd.f32 0.0, %v3285
      %v3287 = vpop.f32.mrb[0].mxu0
      %v3288 = vpop.f32.mrb[0].mxu0
      %v3289 = vadd.f32 0.0, %v3288
      %v3290 = vpop.f32.mrb[0].mxu0
      %3291 = vmatprep.mubr.bf16.mxu0 0
      %3292 = vmatmul.mubr.bf16.gmra.mrb[0].mxu0 %v3116
      %v3293 = vpop.f32.mrb[0].mxu0
      %v3294 = vadd.f32 0.0, %v3293
      %v3295 = vpop.f32.mrb[0].mxu0
      %v3296 = vpop.f32.mrb[0].mxu0
      %v3297 = vadd.f32 0.0, %v3296
      %v3298 = vpop.f32.mrb[0].mxu0
      %3299 = vmatprep.mubr.bf16.mxu0 0
      %3300 = vmatmul.mubr.bf16.gmra.mrb[0].mxu0 %v3118
      %v3301 = vpop.f32.mrb[0].mxu0
      %v3302 = vadd.f32 0.0, %v3301
      %v3303 = vpop.f32.mrb[0].mxu0
      %v3304 = vpop.f32.mrb[0].mxu0
      %v3305 = vadd.f32 0.0, %v3304
      %v3306 = vpop.f32.mrb[0].mxu0
      %3307 = vmatprep.mubr.bf16.mxu0 0
      %3308 = vmatmul.mubr.bf16.gmra.mrb[0].mxu0 %v3120
      %v3309 = vpop.f32.mrb[0].mxu0
      %v3310 = vadd.f32 0.0, %v3309
      %v3311 = vpop.f32.mrb[0].mxu0
      %v3312 = vpop.f32.mrb[0].mxu0
      %v3313 = vadd.f32 0.0, %v3312
      %v3314 = vpop.f32.mrb[0].mxu0
      %3315 = vmatprep.mubr.bf16.mxu0 0
      %3316 = vmatmul.mubr.bf16.gmra.mrb[0].mxu0 %v3122
      %v3317 = vpop.f32.mrb[0].mxu0
      %v3318 = vadd.f32 0.0, %v3317
      %v3319 = vpop.f32.mrb[0].mxu0
      %v3320 = vpop.f32.mrb[0].mxu0
      %v3321 = vadd.f32 0.0, %v3320
      %v3322 = vpop.f32.mrb[0].mxu0
      %3323 = vmatprep.mubr.bf16.mxu0 0
      %3324 = vmatmul.mubr.bf16.gmra.mrb[0].mxu0 %v3124
      %v3325 = vpop.f32.mrb[0].mxu0
      %v3326 = vadd.f32 0.0, %v3325
      %v3327 = vpop.f32.mrb[0].mxu0
      %v3328 = vpop.f32.mrb[0].mxu0
      %v3329 = vadd.f32 0.0, %v3328
      %v3330 = vpop.f32.mrb[0].mxu0
      %3331 = vmatprep.mubr.bf16.mxu0 0
      %3332 = vmatmul.mubr.bf16.gmra.mrb[0].mxu0 %v3126
      %v3333 = vpop.f32.mrb[0].mxu0
      %v3334 = vadd.f32 0.0, %v3333
      %v3335 = vpop.f32.mrb[0].mxu0
      %v3336 = vpop.f32.mrb[0].mxu0
      %v3337 = vadd.f32 0.0, %v3336
      %v3338 = vpop.f32.mrb[0].mxu0
      %3339 = vmatprep.mubr.bf16.mxu0 0
      %3340 = vmatmul.mubr.bf16.gmra.mrb[0].mxu0 %v3128
      %v3341 = vpop.f32.mrb[0].mxu0
      %v3342 = vadd.f32 0.0, %v3341
      %v3343 = vpop.f32.mrb[0].mxu0
      %v3344 = vpop.f32.mrb[0].mxu0
      %v3345 = vadd.f32 0.0, %v3344
      %v3346 = vpop.f32.mrb[0].mxu0
      %3347 = vmatprep.mubr.bf16.mxu0 0
      %3348 = vmatmul.mubr.bf16.gmra.mrb[0].mxu0 %v3130
      %v3349 = vpop.f32.mrb[0].mxu0
      %v3350 = vadd.f32 0.0, %v3349
      %v3351 = vpop.f32.mrb[0].mxu0
      %v3352 = vpop.f32.mrb[0].mxu0
      %v3353 = vadd.f32 0.0, %v3352
      %v3354 = vpop.f32.mrb[0].mxu0
      %3355 = vmatprep.mubr.bf16.mxu0 0
      %3356 = vmatmul.mubr.bf16.gmra.mrb[0].mxu0 %v3132
      %v3357 = vpop.f32.mrb[0].mxu0
      %v3358 = vadd.f32 0.0, %v3357
      %v3359 = vpop.f32.mrb[0].mxu0
      %v3360 = vpop.f32.mrb[0].mxu0
      %v3361 = vadd.f32 0.0, %v3360
      %v3362 = vpop.f32.mrb[0].mxu0
      %3363 = vmatprep.mubr.bf16.mxu0 0
      %3364 = vmatmul.mubr.bf16.gmra.mrb[0].mxu0 %v3134
      %v3365 = vpop.f32.mrb[0].mxu0
      %v3366 = vadd.f32 0.0, %v3365
      %v3367 = vpop.f32.mrb[0].mxu0
      %v3368 = vpop.f32.mrb[0].mxu0
      %v3369 = vadd.f32 0.0, %v3368
      %v3370 = vpop.f32.mrb[0].mxu0
      %3371 = vmatprep.mubr.bf16.mxu0 0
      %3372 = vmatmul.mubr.bf16.gmra.mrb[0].mxu0 %v3136
      %v3373 = vpop.f32.mrb[0].mxu0
      %v3374 = vadd.f32 0.0, %v3373
      %v3375 = vpop.f32.mrb[0].mxu0
      %v3376 = vpop.f32.mrb[0].mxu0
      %v3377 = vadd.f32 0.0, %v3376
      %v3378 = vpop.f32.mrb[0].mxu0
      %3379 = vdwg.mxu0
      %v3380 = vadd.f32 %v2917, %v3238
      %v3381 = vadd.f32 %v2918, %v3241
      %v3382 = vadd.f32 %v2919, %v3246
      %v3383 = vadd.f32 %v2920, %v3249
      %v3384 = vadd.f32 %v2921, %v3254
      %v3385 = vadd.f32 %v2922, %v3257
      %v3386 = vadd.f32 %v2923, %v3262
      %v3387 = vadd.f32 %v2924, %v3265
      %v3388 = vadd.f32 %v2925, %v3270
      %v3389 = vadd.f32 %v2926, %v3273
      %v3390 = vadd.f32 %v2927, %v3278
      %v3391 = vadd.f32 %v2928, %v3281
      %v3392 = vadd.f32 %v2929, %v3286
      %v3393 = vadd.f32 %v2930, %v3289
      %v3394 = vadd.f32 %v2931, %v3294
      %v3395 = vadd.f32 %v2932, %v3297
      %v3396 = vadd.f32 %v2933, %v3302
      %v3397 = vadd.f32 %v2934, %v3305
      %v3398 = vadd.f32 %v2935, %v3310
      %v3399 = vadd.f32 %v2936, %v3313
      %v3400 = vadd.f32 %v2937, %v3318
      %v3401 = vadd.f32 %v2938, %v3321
      %v3402 = vadd.f32 %v2939, %v3326
      %v3403 = vadd.f32 %v2940, %v3329
      %v3404 = vadd.f32 %v2941, %v3334
      %v3405 = vadd.f32 %v2942, %v3337
      %v3406 = vadd.f32 %v2943, %v3342
      %v3407 = vadd.f32 %v2944, %v3345
      %v3408 = vadd.f32 %v2945, %v3350
      %v3409 = vadd.f32 %v2946, %v3353
      %v3410 = vadd.f32 %v2947, %v3358
      %v3411 = vadd.f32 %v2948, %v3361
      %v3412 = vadd.f32 %v2949, %v3366
      %v3413 = vadd.f32 %v2950, %v3369
      %v3414 = vadd.f32 %v2951, %v3374
      %v3415 = vadd.f32 %v2952, %v3377
      %v3416 = vld [vmem:[#allocation2 + $0x98] sm:$0x3]
      %s3417 = scalar_lea.vmem %s426, 256
      %v3418 = vld [vmem:[%s3417] sm:$0xf]
      %v3419 = vld [vmem:[%s3417 + $0x4] sm:$0xf]
      %v3420 = vld [vmem:[%s3417 + $0x8] sm:$0xf]
      %v3421 = vld [vmem:[%s3417 + $0xc] sm:$0xf]
      %v3422 = vld [vmem:[%s3417 + $0x10] sm:$0xf]
      %v3423 = vld [vmem:[%s3417 + $0x14] sm:$0xf]
      %v3424 = vld [vmem:[%s3417 + $0x18] sm:$0xf]
      %v3425 = vld [vmem:[%s3417 + $0x1c] sm:$0xf]
      %v3426 = vld [vmem:[%s3417 + $0x20] sm:$0xf]
      %v3427 = vld [vmem:[%s3417 + $0x24] sm:$0xf]
      %v3428 = vld [vmem:[%s3417 + $0x28] sm:$0xf]
      %v3429 = vld [vmem:[%s3417 + $0x2c] sm:$0xf]
      %v3430 = vld [vmem:[%s3417 + $0x30] sm:$0xf]
      %v3431 = vld [vmem:[%s3417 + $0x34] sm:$0xf]
      %v3432 = vld [vmem:[%s3417 + $0x38] sm:$0xf]
      %v3433 = vld [vmem:[%s3417 + $0x3c] sm:$0xf]
      %v3435 = vunpack.c.l.b16 %v3416
      %v3436 = vpack.c.b16 %v3435, %v3435
      %vm3437 = vsmask.f32 6400
      %v3439 = vshrl.u32 %v3081, 16
      %v3441 = vrot.slane %v3439, 1
      %v3442 = vshll.u32 %v3081, 16
      %v3444 = vrot.slane %v3442, 2
      %v3445 = vor.u32 %v3441, %v3444
      %v3447 = vshrl.u32 %v3082, 16
      %v3449 = vrot.slane %v3447, 1
      %v3450 = vshll.u32 %v3082, 16
      %v3452 = vrot.slane %v3450, 2
      %v3453 = vor.u32 %v3449, %v3452
      %v3454 = vsel %vm3437, %v3445, %v3453
      %v3456 = vshrl.u32 %v3083, 16
      %v3458 = vrot.slane %v3456, 1
      %v3459 = vshll.u32 %v3083, 16
      %v3461 = vrot.slane %v3459, 2
      %v3462 = vor.u32 %v3458, %v3461
      %v3463 = vsel %vm3437, %v3453, %v3462
      %v3465 = vshrl.u32 %v3084, 16
      %v3467 = vrot.slane %v3465, 1
      %v3468 = vshll.u32 %v3084, 16
      %v3470 = vrot.slane %v3468, 2
      %v3471 = vor.u32 %v3467, %v3470
      %v3472 = vsel %vm3437, %v3462, %v3471
      %v3474 = vshrl.u32 %v3085, 16
      %v3476 = vrot.slane %v3474, 1
      %v3477 = vshll.u32 %v3085, 16
      %v3479 = vrot.slane %v3477, 2
      %v3480 = vor.u32 %v3476, %v3479
      %v3481 = vsel %vm3437, %v3471, %v3480
      %v3483 = vshrl.u32 %v3086, 16
      %v3485 = vrot.slane %v3483, 1
      %v3486 = vshll.u32 %v3086, 16
      %v3488 = vrot.slane %v3486, 2
      %v3489 = vor.u32 %v3485, %v3488
      %v3490 = vsel %vm3437, %v3480, %v3489
      %v3492 = vshrl.u32 %v3087, 16
      %v3494 = vrot.slane %v3492, 1
      %v3495 = vshll.u32 %v3087, 16
      %v3497 = vrot.slane %v3495, 2
      %v3498 = vor.u32 %v3494, %v3497
      %v3499 = vsel %vm3437, %v3489, %v3498
      %v3501 = vshrl.u32 %v3088, 16
      %v3503 = vrot.slane %v3501, 1
      %v3504 = vshll.u32 %v3088, 16
      %v3506 = vrot.slane %v3504, 2
      %v3507 = vor.u32 %v3503, %v3506
      %v3508 = vsel %vm3437, %v3498, %v3507
      %v3510 = vshrl.u32 %v3089, 16
      %v3512 = vrot.slane %v3510, 1
      %v3513 = vshll.u32 %v3089, 16
      %v3515 = vrot.slane %v3513, 2
      %v3516 = vor.u32 %v3512, %v3515
      %v3517 = vsel %vm3437, %v3507, %v3516
      %v3519 = vshrl.u32 %v3090, 16
      %v3521 = vrot.slane %v3519, 1
      %v3522 = vshll.u32 %v3090, 16
      %v3524 = vrot.slane %v3522, 2
      %v3525 = vor.u32 %v3521, %v3524
      %v3526 = vsel %vm3437, %v3516, %v3525
      %v3528 = vshrl.u32 %v3091, 16
      %v3530 = vrot.slane %v3528, 1
      %v3531 = vshll.u32 %v3091, 16
      %v3533 = vrot.slane %v3531, 2
      %v3534 = vor.u32 %v3530, %v3533
      %v3535 = vsel %vm3437, %v3525, %v3534
      %v3537 = vshrl.u32 %v3092, 16
      %v3539 = vrot.slane %v3537, 1
      %v3540 = vshll.u32 %v3092, 16
      %v3542 = vrot.slane %v3540, 2
      %v3543 = vor.u32 %v3539, %v3542
      %v3544 = vsel %vm3437, %v3534, %v3543
      %v3546 = vshrl.u32 %v3093, 16
      %v3548 = vrot.slane %v3546, 1
      %v3549 = vshll.u32 %v3093, 16
      %v3551 = vrot.slane %v3549, 2
      %v3552 = vor.u32 %v3548, %v3551
      %v3553 = vsel %vm3437, %v3543, %v3552
      %v3555 = vshrl.u32 %v3094, 16
      %v3557 = vrot.slane %v3555, 1
      %v3558 = vshll.u32 %v3094, 16
      %v3560 = vrot.slane %v3558, 2
      %v3561 = vor.u32 %v3557, %v3560
      %v3562 = vsel %vm3437, %v3552, %v3561
      %v3564 = vshrl.u32 %v3095, 16
      %v3566 = vrot.slane %v3564, 1
      %v3567 = vshll.u32 %v3095, 16
      %v3569 = vrot.slane %v3567, 2
      %v3570 = vor.u32 %v3566, %v3569
      %v3571 = vsel %vm3437, %v3561, %v3570
      %v3573 = vshrl.u32 %v3096, 16
      %v3575 = vrot.slane %v3573, 1
      %v3576 = vshll.u32 %v3096, 16
      %v3578 = vrot.slane %v3576, 2
      %v3579 = vor.u32 %v3575, %v3578
      %v3580 = vsel %vm3437, %v3570, %v3579
      %v3582 = vshrl.u32 %v3097, 16
      %v3584 = vrot.slane %v3582, 1
      %v3585 = vshll.u32 %v3097, 16
      %v3587 = vrot.slane %v3585, 2
      %v3588 = vor.u32 %v3584, %v3587
      %v3589 = vsel %vm3437, %v3579, %v3588
      %v3591 = vshrl.u32 %v3098, 16
      %v3593 = vrot.slane %v3591, 1
      %v3594 = vshll.u32 %v3098, 16
      %v3596 = vrot.slane %v3594, 2
      %v3597 = vor.u32 %v3593, %v3596
      %v3598 = vsel %vm3437, %v3588, %v3597
      %v3600 = vshrl.u32 %v3436, 16
      %v3602 = vrot.slane %v3600, 1
      %v3603 = vshll.u32 %v3436, 16
      %v3605 = vrot.slane %v3603, 2
      %v3606 = vor.u32 %v3602, %v3605
      %v3607 = vsel %vm3437, %v3597, %v3606
      %v3642 = vunpack.c.l.b16 %v3418
      %v3643 = vunpack.c.l.b16 %v3419
      %v3644 = vunpack.c.l.b16 %v3420
      %v3645 = vunpack.c.l.b16 %v3421
      %v3646 = vunpack.c.l.b16 %v3422
      %v3647 = vunpack.c.l.b16 %v3423
      %v3648 = vunpack.c.l.b16 %v3424
      %v3649 = vunpack.c.l.b16 %v3425
      %v3650 = vunpack.c.l.b16 %v3426
      %v3651 = vunpack.c.l.b16 %v3427
      %v3652 = vunpack.c.l.b16 %v3428
      %v3653 = vunpack.c.l.b16 %v3429
      %v3654 = vunpack.c.l.b16 %v3430
      %v3655 = vunpack.c.l.b16 %v3431
      %v3656 = vunpack.c.l.b16 %v3432
      %v3657 = vunpack.c.l.b16 %v3433
      %v3658 = vpack.c.b16 %v3643, %v3642
      %v3659 = vpack.c.b16 %v3645, %v3644
      %v3660 = vpack.c.b16 %v3647, %v3646
      %v3661 = vpack.c.b16 %v3649, %v3648
      %v3662 = vpack.c.b16 %v3651, %v3650
      %v3663 = vpack.c.b16 %v3653, %v3652
      %v3664 = vpack.c.b16 %v3655, %v3654
      %v3665 = vpack.c.b16 %v3657, %v3656
      %3674 = vmatprep.subr.bf16.mxu0 0
      %3675 = vmatpush1.bf16.msra.mxu0 %v3658
      %3676 = vmatprep.subr.bf16.mxu0 0
      %3677 = vmatpush1.bf16.msra.mxu0 %v3659
      %3678 = vmatprep.subr.bf16.mxu0 0
      %3679 = vmatpush1.bf16.msra.mxu0 %v3660
      %3680 = vmatprep.subr.bf16.mxu0 0
      %3681 = vmatpush1.bf16.msra.mxu0 %v3661
      %3682 = vmatprep.subr.bf16.mxu0 0
      %3683 = vmatpush1.bf16.msra.mxu0 %v3662
      %3684 = vmatprep.subr.bf16.mxu0 0
      %3685 = vmatpush1.bf16.msra.mxu0 %v3663
      %3686 = vmatprep.subr.bf16.mxu0 0
      %3687 = vmatpush1.bf16.msra.mxu0 %v3664
      %3688 = vmatprep.subr.bf16.mxu0 0
      %3689 = vmatpush1.bf16.msra.mxu0 %v3665
      %3690 = vmatprep.subr.bf16.mxu0 0
      %3691 = vmatpush1.bf16.msra.mxu0 0
      %3692 = vmatprep.subr.bf16.mxu0 0
      %3693 = vmatpush1.bf16.msra.mxu0 0
      %3694 = vmatprep.subr.bf16.mxu0 0
      %3695 = vmatpush1.bf16.msra.mxu0 0
      %3696 = vmatprep.subr.bf16.mxu0 0
      %3697 = vmatpush1.bf16.msra.mxu0 0
      %3698 = vmatprep.subr.bf16.mxu0 0
      %3699 = vmatpush1.bf16.msra.mxu0 0
      %3700 = vmatprep.subr.bf16.mxu0 0
      %3701 = vmatpush1.bf16.msra.mxu0 0
      %3702 = vmatprep.subr.bf16.mxu0 0
      %3703 = vmatpush1.bf16.msra.mxu0 0
      %3704 = vmatprep.subr.bf16.mxu0 0
      %3705 = vmatpush1.bf16.msra.mxu0 0
      %3706 = vmatprep.mubr.bf16.mxu0 0
      %3707 = vmatmul.mubr.bf16.gmra.mrb[0].mxu0 %v3454
      %v3708 = vpop.f32.mrb[0].mxu0
      %v3709 = vadd.f32 0.0, %v3708
      %v3710 = vpop.f32.mrb[0].mxu0
      %v3711 = vpop.f32.mrb[0].mxu0
      %v3712 = vadd.f32 0.0, %v3711
      %v3713 = vpop.f32.mrb[0].mxu0
      %3714 = vmatprep.mubr.bf16.mxu0 0
      %3715 = vmatmul.mubr.bf16.gmra.mrb[0].mxu0 %v3463
      %v3716 = vpop.f32.mrb[0].mxu0
      %v3717 = vadd.f32 0.0, %v3716
      %v3718 = vpop.f32.mrb[0].mxu0
      %v3719 = vpop.f32.mrb[0].mxu0
      %v3720 = vadd.f32 0.0, %v3719
      %v3721 = vpop.f32.mrb[0].mxu0
      %3722 = vmatprep.mubr.bf16.mxu0 0
      %3723 = vmatmul.mubr.bf16.gmra.mrb[0].mxu0 %v3472
      %v3724 = vpop.f32.mrb[0].mxu0
      %v3725 = vadd.f32 0.0, %v3724
      %v3726 = vpop.f32.mrb[0].mxu0
      %v3727 = vpop.f32.mrb[0].mxu0
      %v3728 = vadd.f32 0.0, %v3727
      %v3729 = vpop.f32.mrb[0].mxu0
      %3730 = vmatprep.mubr.bf16.mxu0 0
      %3731 = vmatmul.mubr.bf16.gmra.mrb[0].mxu0 %v3481
      %v3732 = vpop.f32.mrb[0].mxu0
      %v3733 = vadd.f32 0.0, %v3732
      %v3734 = vpop.f32.mrb[0].mxu0
      %v3735 = vpop.f32.mrb[0].mxu0
      %v3736 = vadd.f32 0.0, %v3735
      %v3737 = vpop.f32.mrb[0].mxu0
      %3738 = vmatprep.mubr.bf16.mxu0 0
      %3739 = vmatmul.mubr.bf16.gmra.mrb[0].mxu0 %v3490
      %v3740 = vpop.f32.mrb[0].mxu0
      %v3741 = vadd.f32 0.0, %v3740
      %v3742 = vpop.f32.mrb[0].mxu0
      %v3743 = vpop.f32.mrb[0].mxu0
      %v3744 = vadd.f32 0.0, %v3743
      %v3745 = vpop.f32.mrb[0].mxu0
      %3746 = vmatprep.mubr.bf16.mxu0 0
      %3747 = vmatmul.mubr.bf16.gmra.mrb[0].mxu0 %v3499
      %v3748 = vpop.f32.mrb[0].mxu0
      %v3749 = vadd.f32 0.0, %v3748
      %v3750 = vpop.f32.mrb[0].mxu0
      %v3751 = vpop.f32.mrb[0].mxu0
      %v3752 = vadd.f32 0.0, %v3751
      %v3753 = vpop.f32.mrb[0].mxu0
      %3754 = vmatprep.mubr.bf16.mxu0 0
      %3755 = vmatmul.mubr.bf16.gmra.mrb[0].mxu0 %v3508
      %v3756 = vpop.f32.mrb[0].mxu0
      %v3757 = vadd.f32 0.0, %v3756
      %v3758 = vpop.f32.mrb[0].mxu0
      %v3759 = vpop.f32.mrb[0].mxu0
      %v3760 = vadd.f32 0.0, %v3759
      %v3761 = vpop.f32.mrb[0].mxu0
      %3762 = vmatprep.mubr.bf16.mxu0 0
      %3763 = vmatmul.mubr.bf16.gmra.mrb[0].mxu0 %v3517
      %v3764 = vpop.f32.mrb[0].mxu0
      %v3765 = vadd.f32 0.0, %v3764
      %v3766 = vpop.f32.mrb[0].mxu0
      %v3767 = vpop.f32.mrb[0].mxu0
      %v3768 = vadd.f32 0.0, %v3767
      %v3769 = vpop.f32.mrb[0].mxu0
      %3770 = vmatprep.mubr.bf16.mxu0 0
      %3771 = vmatmul.mubr.bf16.gmra.mrb[0].mxu0 %v3526
      %v3772 = vpop.f32.mrb[0].mxu0
      %v3773 = vadd.f32 0.0, %v3772
      %v3774 = vpop.f32.mrb[0].mxu0
      %v3775 = vpop.f32.mrb[0].mxu0
      %v3776 = vadd.f32 0.0, %v3775
      %v3777 = vpop.f32.mrb[0].mxu0
      %3778 = vmatprep.mubr.bf16.mxu0 0
      %3779 = vmatmul.mubr.bf16.gmra.mrb[0].mxu0 %v3535
      %v3780 = vpop.f32.mrb[0].mxu0
      %v3781 = vadd.f32 0.0, %v3780
      %v3782 = vpop.f32.mrb[0].mxu0
      %v3783 = vpop.f32.mrb[0].mxu0
      %v3784 = vadd.f32 0.0, %v3783
      %v3785 = vpop.f32.mrb[0].mxu0
      %3786 = vmatprep.mubr.bf16.mxu0 0
      %3787 = vmatmul.mubr.bf16.gmra.mrb[0].mxu0 %v3544
      %v3788 = vpop.f32.mrb[0].mxu0
      %v3789 = vadd.f32 0.0, %v3788
      %v3790 = vpop.f32.mrb[0].mxu0
      %v3791 = vpop.f32.mrb[0].mxu0
      %v3792 = vadd.f32 0.0, %v3791
      %v3793 = vpop.f32.mrb[0].mxu0
      %3794 = vmatprep.mubr.bf16.mxu0 0
      %3795 = vmatmul.mubr.bf16.gmra.mrb[0].mxu0 %v3553
      %v3796 = vpop.f32.mrb[0].mxu0
      %v3797 = vadd.f32 0.0, %v3796
      %v3798 = vpop.f32.mrb[0].mxu0
      %v3799 = vpop.f32.mrb[0].mxu0
      %v3800 = vadd.f32 0.0, %v3799
      %v3801 = vpop.f32.mrb[0].mxu0
      %3802 = vmatprep.mubr.bf16.mxu0 0
      %3803 = vmatmul.mubr.bf16.gmra.mrb[0].mxu0 %v3562
      %v3804 = vpop.f32.mrb[0].mxu0
      %v3805 = vadd.f32 0.0, %v3804
      %v3806 = vpop.f32.mrb[0].mxu0
      %v3807 = vpop.f32.mrb[0].mxu0
      %v3808 = vadd.f32 0.0, %v3807
      %v3809 = vpop.f32.mrb[0].mxu0
      %3810 = vmatprep.mubr.bf16.mxu0 0
      %3811 = vmatmul.mubr.bf16.gmra.mrb[0].mxu0 %v3571
      %v3812 = vpop.f32.mrb[0].mxu0
      %v3813 = vadd.f32 0.0, %v3812
      %v3814 = vpop.f32.mrb[0].mxu0
      %v3815 = vpop.f32.mrb[0].mxu0
      %v3816 = vadd.f32 0.0, %v3815
      %v3817 = vpop.f32.mrb[0].mxu0
      %3818 = vmatprep.mubr.bf16.mxu0 0
      %3819 = vmatmul.mubr.bf16.gmra.mrb[0].mxu0 %v3580
      %v3820 = vpop.f32.mrb[0].mxu0
      %v3821 = vadd.f32 0.0, %v3820
      %v3822 = vpop.f32.mrb[0].mxu0
      %v3823 = vpop.f32.mrb[0].mxu0
      %v3824 = vadd.f32 0.0, %v3823
      %v3825 = vpop.f32.mrb[0].mxu0
      %3826 = vmatprep.mubr.bf16.mxu0 0
      %3827 = vmatmul.mubr.bf16.gmra.mrb[0].mxu0 %v3589
      %v3828 = vpop.f32.mrb[0].mxu0
      %v3829 = vadd.f32 0.0, %v3828
      %v3830 = vpop.f32.mrb[0].mxu0
      %v3831 = vpop.f32.mrb[0].mxu0
      %v3832 = vadd.f32 0.0, %v3831
      %v3833 = vpop.f32.mrb[0].mxu0
      %3834 = vmatprep.mubr.bf16.mxu0 0
      %3835 = vmatmul.mubr.bf16.gmra.mrb[0].mxu0 %v3598
      %v3836 = vpop.f32.mrb[0].mxu0
      %v3837 = vadd.f32 0.0, %v3836
      %v3838 = vpop.f32.mrb[0].mxu0
      %v3839 = vpop.f32.mrb[0].mxu0
      %v3840 = vadd.f32 0.0, %v3839
      %v3841 = vpop.f32.mrb[0].mxu0
      %3842 = vmatprep.mubr.bf16.mxu0 0
      %3843 = vmatmul.mubr.bf16.gmra.mrb[0].mxu0 %v3607
      %v3844 = vpop.f32.mrb[0].mxu0
      %v3845 = vadd.f32 0.0, %v3844
      %v3846 = vpop.f32.mrb[0].mxu0
      %v3847 = vpop.f32.mrb[0].mxu0
      %v3848 = vadd.f32 0.0, %v3847
      %v3849 = vpop.f32.mrb[0].mxu0
      %3850 = vdwg.mxu0
      %v3851 = vadd.f32 %v3380, %v3709
      %v3852 = vadd.f32 %v3381, %v3712
      %v3853 = vadd.f32 %v3382, %v3717
      %v3854 = vadd.f32 %v3383, %v3720
      %v3855 = vadd.f32 %v3384, %v3725
      %v3856 = vadd.f32 %v3385, %v3728
      %v3857 = vadd.f32 %v3386, %v3733
      %v3858 = vadd.f32 %v3387, %v3736
      %v3859 = vadd.f32 %v3388, %v3741
      %v3860 = vadd.f32 %v3389, %v3744
      %v3861 = vadd.f32 %v3390, %v3749
      %v3862 = vadd.f32 %v3391, %v3752
      %v3863 = vadd.f32 %v3392, %v3757
      %v3864 = vadd.f32 %v3393, %v3760
      %v3865 = vadd.f32 %v3394, %v3765
      %v3866 = vadd.f32 %v3395, %v3768
      %v3867 = vadd.f32 %v3396, %v3773
      %v3868 = vadd.f32 %v3397, %v3776
      %v3869 = vadd.f32 %v3398, %v3781
      %v3870 = vadd.f32 %v3399, %v3784
      %v3871 = vadd.f32 %v3400, %v3789
      %v3872 = vadd.f32 %v3401, %v3792
      %v3873 = vadd.f32 %v3402, %v3797
      %v3874 = vadd.f32 %v3403, %v3800
      %v3875 = vadd.f32 %v3404, %v3805
      %v3876 = vadd.f32 %v3405, %v3808
      %v3877 = vadd.f32 %v3406, %v3813
      %v3878 = vadd.f32 %v3407, %v3816
      %v3879 = vadd.f32 %v3408, %v3821
      %v3880 = vadd.f32 %v3409, %v3824
      %v3881 = vadd.f32 %v3410, %v3829
      %v3882 = vadd.f32 %v3411, %v3832
      %v3883 = vadd.f32 %v3412, %v3837
      %v3884 = vadd.f32 %v3413, %v3840
      %v3885 = vadd.f32 %v3414, %v3845
      %v3886 = vadd.f32 %v3415, %v3848
      %v3887 = vld [vmem:[#allocation2 + $0x8] sm:$0xc]
      %s3888 = scalar_lea.vmem %s426, 320
      %v3889 = vld [vmem:[%s3888] sm:$0xf]
      %v3890 = vld [vmem:[%s3888 + $0x4] sm:$0xf]
      %v3891 = vld [vmem:[%s3888 + $0x8] sm:$0xf]
      %v3892 = vld [vmem:[%s3888 + $0xc] sm:$0xf]
      %v3893 = vld [vmem:[%s3888 + $0x10] sm:$0xf]
      %v3894 = vld [vmem:[%s3888 + $0x14] sm:$0xf]
      %v3895 = vld [vmem:[%s3888 + $0x18] sm:$0xf]
      %v3896 = vld [vmem:[%s3888 + $0x1c] sm:$0xf]
      %v3897 = vld [vmem:[%s3888 + $0x20] sm:$0xf]
      %v3898 = vld [vmem:[%s3888 + $0x24] sm:$0xf]
      %v3899 = vld [vmem:[%s3888 + $0x28] sm:$0xf]
      %v3900 = vld [vmem:[%s3888 + $0x2c] sm:$0xf]
      %v3901 = vld [vmem:[%s3888 + $0x30] sm:$0xf]
      %v3902 = vld [vmem:[%s3888 + $0x34] sm:$0xf]
      %v3903 = vld [vmem:[%s3888 + $0x38] sm:$0xf]
      %v3904 = vld [vmem:[%s3888 + $0x3c] sm:$0xf]
      %v3906 = vunpack.c.l.b16 %v3887
      %v3907 = vpack.c.b16 %v3045, %v3906
      %vm3908 = vcmask 1045504
      %v3909 = vrot.slane %v3907, 2
      %v3910 = vrot.slane %v3082, 2
      %v3911 = vsel %vm3908, %v3909, %v3910
      %v3912 = vrot.slane %v3083, 2
      %v3913 = vsel %vm3908, %v3910, %v3912
      %v3914 = vrot.slane %v3084, 2
      %v3915 = vsel %vm3908, %v3912, %v3914
      %v3916 = vrot.slane %v3085, 2
      %v3917 = vsel %vm3908, %v3914, %v3916
      %v3918 = vrot.slane %v3086, 2
      %v3919 = vsel %vm3908, %v3916, %v3918
      %v3920 = vrot.slane %v3087, 2
      %v3921 = vsel %vm3908, %v3918, %v3920
      %v3922 = vrot.slane %v3088, 2
      %v3923 = vsel %vm3908, %v3920, %v3922
      %v3924 = vrot.slane %v3089, 2
      %v3925 = vsel %vm3908, %v3922, %v3924
      %v3926 = vrot.slane %v3090, 2
      %v3927 = vsel %vm3908, %v3924, %v3926
      %v3928 = vrot.slane %v3091, 2
      %v3929 = vsel %vm3908, %v3926, %v3928
      %v3930 = vrot.slane %v3092, 2
      %v3931 = vsel %vm3908, %v3928, %v3930
      %v3932 = vrot.slane %v3093, 2
      %v3933 = vsel %vm3908, %v3930, %v3932
      %v3934 = vrot.slane %v3094, 2
      %v3935 = vsel %vm3908, %v3932, %v3934
      %v3936 = vrot.slane %v3095, 2
      %v3937 = vsel %vm3908, %v3934, %v3936
      %v3938 = vrot.slane %v3096, 2
      %v3939 = vsel %vm3908, %v3936, %v3938
      %v3940 = vrot.slane %v3097, 2
      %v3941 = vsel %vm3908, %v3938, %v3940
      %v3942 = vrot.slane %v3098, 2
      %v3943 = vsel %vm3908, %v3940, %v3942
      %v3944 = vrot.slane %v3436, 2
      %v3945 = vsel %vm3908, %v3942, %v3944
      %v3980 = vunpack.c.l.b16 %v3889
      %v3981 = vunpack.c.l.b16 %v3890
      %v3982 = vunpack.c.l.b16 %v3891
      %v3983 = vunpack.c.l.b16 %v3892
      %v3984 = vunpack.c.l.b16 %v3893
      %v3985 = vunpack.c.l.b16 %v3894
      %v3986 = vunpack.c.l.b16 %v3895
      %v3987 = vunpack.c.l.b16 %v3896
      %v3988 = vunpack.c.l.b16 %v3897
      %v3989 = vunpack.c.l.b16 %v3898
      %v3990 = vunpack.c.l.b16 %v3899
      %v3991 = vunpack.c.l.b16 %v3900
      %v3992 = vunpack.c.l.b16 %v3901
      %v3993 = vunpack.c.l.b16 %v3902
      %v3994 = vunpack.c.l.b16 %v3903
      %v3995 = vunpack.c.l.b16 %v3904
      %v3996 = vpack.c.b16 %v3981, %v3980
      %v3997 = vpack.c.b16 %v3983, %v3982
      %v3998 = vpack.c.b16 %v3985, %v3984
      %v3999 = vpack.c.b16 %v3987, %v3986
      %v4000 = vpack.c.b16 %v3989, %v3988
      %v4001 = vpack.c.b16 %v3991, %v3990
      %v4002 = vpack.c.b16 %v3993, %v3992
      %v4003 = vpack.c.b16 %v3995, %v3994
      %4012 = vmatprep.subr.bf16.mxu0 0
      %4013 = vmatpush1.bf16.msra.mxu0 %v3996
      %4014 = vmatprep.subr.bf16.mxu0 0
      %4015 = vmatpush1.bf16.msra.mxu0 %v3997
      %4016 = vmatprep.subr.bf16.mxu0 0
      %4017 = vmatpush1.bf16.msra.mxu0 %v3998
      %4018 = vmatprep.subr.bf16.mxu0 0
      %4019 = vmatpush1.bf16.msra.mxu0 %v3999
      %4020 = vmatprep.subr.bf16.mxu0 0
      %4021 = vmatpush1.bf16.msra.mxu0 %v4000
      %4022 = vmatprep.subr.bf16.mxu0 0
      %4023 = vmatpush1.bf16.msra.mxu0 %v4001
      %4024 = vmatprep.subr.bf16.mxu0 0
      %4025 = vmatpush1.bf16.msra.mxu0 %v4002
      %4026 = vmatprep.subr.bf16.mxu0 0
      %4027 = vmatpush1.bf16.msra.mxu0 %v4003
      %4028 = vmatprep.subr.bf16.mxu0 0
      %4029 = vmatpush1.bf16.msra.mxu0 0
      %4030 = vmatprep.subr.bf16.mxu0 0
      %4031 = vmatpush1.bf16.msra.mxu0 0
      %4032 = vmatprep.subr.bf16.mxu0 0
      %4033 = vmatpush1.bf16.msra.mxu0 0
      %4034 = vmatprep.subr.bf16.mxu0 0
      %4035 = vmatpush1.bf16.msra.mxu0 0
      %4036 = vmatprep.subr.bf16.mxu0 0
      %4037 = vmatpush1.bf16.msra.mxu0 0
      %4038 = vmatprep.subr.bf16.mxu0 0
      %4039 = vmatpush1.bf16.msra.mxu0 0
      %4040 = vmatprep.subr.bf16.mxu0 0
      %4041 = vmatpush1.bf16.msra.mxu0 0
      %4042 = vmatprep.subr.bf16.mxu0 0
      %4043 = vmatpush1.bf16.msra.mxu0 0
      %4044 = vmatprep.mubr.bf16.mxu0 0
      %4045 = vmatmul.mubr.bf16.gmra.mrb[0].mxu0 %v3911
      %v4046 = vpop.f32.mrb[0].mxu0
      %v4047 = vadd.f32 0.0, %v4046
      %v4048 = vpop.f32.mrb[0].mxu0
      %v4049 = vpop.f32.mrb[0].mxu0
      %v4050 = vadd.f32 0.0, %v4049
      %v4051 = vpop.f32.mrb[0].mxu0
      %4052 = vmatprep.mubr.bf16.mxu0 0
      %4053 = vmatmul.mubr.bf16.gmra.mrb[0].mxu0 %v3913
      %v4054 = vpop.f32.mrb[0].mxu0
      %v4055 = vadd.f32 0.0, %v4054
      %v4056 = vpop.f32.mrb[0].mxu0
      %v4057 = vpop.f32.mrb[0].mxu0
      %v4058 = vadd.f32 0.0, %v4057
      %v4059 = vpop.f32.mrb[0].mxu0
      %4060 = vmatprep.mubr.bf16.mxu0 0
      %4061 = vmatmul.mubr.bf16.gmra.mrb[0].mxu0 %v3915
      %v4062 = vpop.f32.mrb[0].mxu0
      %v4063 = vadd.f32 0.0, %v4062
      %v4064 = vpop.f32.mrb[0].mxu0
      %v4065 = vpop.f32.mrb[0].mxu0
      %v4066 = vadd.f32 0.0, %v4065
      %v4067 = vpop.f32.mrb[0].mxu0
      %4068 = vmatprep.mubr.bf16.mxu0 0
      %4069 = vmatmul.mubr.bf16.gmra.mrb[0].mxu0 %v3917
      %v4070 = vpop.f32.mrb[0].mxu0
      %v4071 = vadd.f32 0.0, %v4070
      %v4072 = vpop.f32.mrb[0].mxu0
      %v4073 = vpop.f32.mrb[0].mxu0
      %v4074 = vadd.f32 0.0, %v4073
      %v4075 = vpop.f32.mrb[0].mxu0
      %4076 = vmatprep.mubr.bf16.mxu0 0
      %4077 = vmatmul.mubr.bf16.gmra.mrb[0].mxu0 %v3919
      %v4078 = vpop.f32.mrb[0].mxu0
      %v4079 = vadd.f32 0.0, %v4078
      %v4080 = vpop.f32.mrb[0].mxu0
      %v4081 = vpop.f32.mrb[0].mxu0
      %v4082 = vadd.f32 0.0, %v4081
      %v4083 = vpop.f32.mrb[0].mxu0
      %4084 = vmatprep.mubr.bf16.mxu0 0
      %4085 = vmatmul.mubr.bf16.gmra.mrb[0].mxu0 %v3921
      %v4086 = vpop.f32.mrb[0].mxu0
      %v4087 = vadd.f32 0.0, %v4086
      %v4088 = vpop.f32.mrb[0].mxu0
      %v4089 = vpop.f32.mrb[0].mxu0
      %v4090 = vadd.f32 0.0, %v4089
      %v4091 = vpop.f32.mrb[0].mxu0
      %4092 = vmatprep.mubr.bf16.mxu0 0
      %4093 = vmatmul.mubr.bf16.gmra.mrb[0].mxu0 %v3923
      %v4094 = vpop.f32.mrb[0].mxu0
      %v4095 = vadd.f32 0.0, %v4094
      %v4096 = vpop.f32.mrb[0].mxu0
      %v4097 = vpop.f32.mrb[0].mxu0
      %v4098 = vadd.f32 0.0, %v4097
      %v4099 = vpop.f32.mrb[0].mxu0
      %4100 = vmatprep.mubr.bf16.mxu0 0
      %4101 = vmatmul.mubr.bf16.gmra.mrb[0].mxu0 %v3925
      %v4102 = vpop.f32.mrb[0].mxu0
      %v4103 = vadd.f32 0.0, %v4102
      %v4104 = vpop.f32.mrb[0].mxu0
      %v4105 = vpop.f32.mrb[0].mxu0
      %v4106 = vadd.f32 0.0, %v4105
      %v4107 = vpop.f32.mrb[0].mxu0
      %4108 = vmatprep.mubr.bf16.mxu0 0
      %4109 = vmatmul.mubr.bf16.gmra.mrb[0].mxu0 %v3927
      %v4110 = vpop.f32.mrb[0].mxu0
      %v4111 = vadd.f32 0.0, %v4110
      %v4112 = vpop.f32.mrb[0].mxu0
      %v4113 = vpop.f32.mrb[0].mxu0
      %v4114 = vadd.f32 0.0, %v4113
      %v4115 = vpop.f32.mrb[0].mxu0
      %4116 = vmatprep.mubr.bf16.mxu0 0
      %4117 = vmatmul.mubr.bf16.gmra.mrb[0].mxu0 %v3929
      %v4118 = vpop.f32.mrb[0].mxu0
      %v4119 = vadd.f32 0.0, %v4118
      %v4120 = vpop.f32.mrb[0].mxu0
      %v4121 = vpop.f32.mrb[0].mxu0
      %v4122 = vadd.f32 0.0, %v4121
      %v4123 = vpop.f32.mrb[0].mxu0
      %4124 = vmatprep.mubr.bf16.mxu0 0
      %4125 = vmatmul.mubr.bf16.gmra.mrb[0].mxu0 %v3931
      %v4126 = vpop.f32.mrb[0].mxu0
      %v4127 = vadd.f32 0.0, %v4126
      %v4128 = vpop.f32.mrb[0].mxu0
      %v4129 = vpop.f32.mrb[0].mxu0
      %v4130 = vadd.f32 0.0, %v4129
      %v4131 = vpop.f32.mrb[0].mxu0
      %4132 = vmatprep.mubr.bf16.mxu0 0
      %4133 = vmatmul.mubr.bf16.gmra.mrb[0].mxu0 %v3933
      %v4134 = vpop.f32.mrb[0].mxu0
      %v4135 = vadd.f32 0.0, %v4134
      %v4136 = vpop.f32.mrb[0].mxu0
      %v4137 = vpop.f32.mrb[0].mxu0
      %v4138 = vadd.f32 0.0, %v4137
      %v4139 = vpop.f32.mrb[0].mxu0
      %4140 = vmatprep.mubr.bf16.mxu0 0
      %4141 = vmatmul.mubr.bf16.gmra.mrb[0].mxu0 %v3935
      %v4142 = vpop.f32.mrb[0].mxu0
      %v4143 = vadd.f32 0.0, %v4142
      %v4144 = vpop.f32.mrb[0].mxu0
      %v4145 = vpop.f32.mrb[0].mxu0
      %v4146 = vadd.f32 0.0, %v4145
      %v4147 = vpop.f32.mrb[0].mxu0
      %4148 = vmatprep.mubr.bf16.mxu0 0
      %4149 = vmatmul.mubr.bf16.gmra.mrb[0].mxu0 %v3937
      %v4150 = vpop.f32.mrb[0].mxu0
      %v4151 = vadd.f32 0.0, %v4150
      %v4152 = vpop.f32.mrb[0].mxu0
      %v4153 = vpop.f32.mrb[0].mxu0
      %v4154 = vadd.f32 0.0, %v4153
      %v4155 = vpop.f32.mrb[0].mxu0
      %4156 = vmatprep.mubr.bf16.mxu0 0
      %4157 = vmatmul.mubr.bf16.gmra.mrb[0].mxu0 %v3939
      %v4158 = vpop.f32.mrb[0].mxu0
      %v4159 = vadd.f32 0.0, %v4158
      %v4160 = vpop.f32.mrb[0].mxu0
      %v4161 = vpop.f32.mrb[0].mxu0
      %v4162 = vadd.f32 0.0, %v4161
      %v4163 = vpop.f32.mrb[0].mxu0
      %4164 = vmatprep.mubr.bf16.mxu0 0
      %4165 = vmatmul.mubr.bf16.gmra.mrb[0].mxu0 %v3941
      %v4166 = vpop.f32.mrb[0].mxu0
      %v4167 = vadd.f32 0.0, %v4166
      %v4168 = vpop.f32.mrb[0].mxu0
      %v4169 = vpop.f32.mrb[0].mxu0
      %v4170 = vadd.f32 0.0, %v4169
      %v4171 = vpop.f32.mrb[0].mxu0
      %4172 = vmatprep.mubr.bf16.mxu0 0
      %4173 = vmatmul.mubr.bf16.gmra.mrb[0].mxu0 %v3943
      %v4174 = vpop.f32.mrb[0].mxu0
      %v4175 = vadd.f32 0.0, %v4174
      %v4176 = vpop.f32.mrb[0].mxu0
      %v4177 = vpop.f32.mrb[0].mxu0
      %v4178 = vadd.f32 0.0, %v4177
      %v4179 = vpop.f32.mrb[0].mxu0
      %4180 = vmatprep.mubr.bf16.mxu0 0
      %4181 = vmatmul.mubr.bf16.gmra.mrb[0].mxu0 %v3945
      %v4182 = vpop.f32.mrb[0].mxu0
      %v4183 = vadd.f32 0.0, %v4182
      %v4184 = vpop.f32.mrb[0].mxu0
      %v4185 = vpop.f32.mrb[0].mxu0
      %v4186 = vadd.f32 0.0, %v4185
      %v4187 = vpop.f32.mrb[0].mxu0
      %4188 = vdwg.mxu0
      %v4189 = vadd.f32 %v3851, %v4047
      %v4190 = vadd.f32 %v3852, %v4050
      %v4191 = vadd.f32 %v3853, %v4055
      %v4192 = vadd.f32 %v3854, %v4058
      %v4193 = vadd.f32 %v3855, %v4063
      %v4194 = vadd.f32 %v3856, %v4066
      %v4195 = vadd.f32 %v3857, %v4071
      %v4196 = vadd.f32 %v3858, %v4074
      %v4197 = vadd.f32 %v3859, %v4079
      %v4198 = vadd.f32 %v3860, %v4082
      %v4199 = vadd.f32 %v3861, %v4087
      %v4200 = vadd.f32 %v3862, %v4090
      %v4201 = vadd.f32 %v3863, %v4095
      %v4202 = vadd.f32 %v3864, %v4098
      %v4203 = vadd.f32 %v3865, %v4103
      %v4204 = vadd.f32 %v3866, %v4106
      %v4205 = vadd.f32 %v3867, %v4111
      %v4206 = vadd.f32 %v3868, %v4114
      %v4207 = vadd.f32 %v3869, %v4119
      %v4208 = vadd.f32 %v3870, %v4122
      %v4209 = vadd.f32 %v3871, %v4127
      %v4210 = vadd.f32 %v3872, %v4130
      %v4211 = vadd.f32 %v3873, %v4135
      %v4212 = vadd.f32 %v3874, %v4138
      %v4213 = vadd.f32 %v3875, %v4143
      %v4214 = vadd.f32 %v3876, %v4146
      %v4215 = vadd.f32 %v3877, %v4151
      %v4216 = vadd.f32 %v3878, %v4154
      %v4217 = vadd.f32 %v3879, %v4159
      %v4218 = vadd.f32 %v3880, %v4162
      %v4219 = vadd.f32 %v3881, %v4167
      %v4220 = vadd.f32 %v3882, %v4170
      %v4221 = vadd.f32 %v3883, %v4175
      %v4222 = vadd.f32 %v3884, %v4178
      %v4223 = vadd.f32 %v3885, %v4183
      %v4224 = vadd.f32 %v3886, %v4186
      %v4225 = vld [vmem:[#allocation2 + $0x10] sm:$0xc]
      %v4226 = vld [vmem:[#allocation2 + $0x14] sm:$0xf]
      %v4227 = vld [vmem:[#allocation2 + $0x18] sm:$0xf]
      %v4228 = vld [vmem:[#allocation2 + $0x1c] sm:$0xf]
      %v4229 = vld [vmem:[#allocation2 + $0x20] sm:$0xf]
      %v4230 = vld [vmem:[#allocation2 + $0x24] sm:$0xf]
      %v4231 = vld [vmem:[#allocation2 + $0x28] sm:$0xf]
      %v4232 = vld [vmem:[#allocation2 + $0x2c] sm:$0xf]
      %v4233 = vld [vmem:[#allocation2 + $0x30] sm:$0xf]
      %v4234 = vld [vmem:[#allocation2 + $0x34] sm:$0xf]
      %v4235 = vld [vmem:[#allocation2 + $0x38] sm:$0xf]
      %v4236 = vld [vmem:[#allocation2 + $0x3c] sm:$0xf]
      %v4237 = vld [vmem:[#allocation2 + $0x40] sm:$0xf]
      %v4238 = vld [vmem:[#allocation2 + $0x44] sm:$0xf]
      %v4239 = vld [vmem:[#allocation2 + $0x48] sm:$0xf]
      %v4240 = vld [vmem:[#allocation2 + $0x4c] sm:$0xf]
      %v4241 = vld [vmem:[#allocation2 + $0x50] sm:$0xf]
      %v4242 = vld [vmem:[#allocation2 + $0x54] sm:$0xf]
      %v4243 = vld [vmem:[#allocation2 + $0x58] sm:$0xf]
      %v4244 = vld [vmem:[#allocation2 + $0x5c] sm:$0xf]
      %v4245 = vld [vmem:[#allocation2 + $0x60] sm:$0xf]
      %v4246 = vld [vmem:[#allocation2 + $0x64] sm:$0xf]
      %v4247 = vld [vmem:[#allocation2 + $0x68] sm:$0xf]
      %v4248 = vld [vmem:[#allocation2 + $0x6c] sm:$0xf]
      %v4249 = vld [vmem:[#allocation2 + $0x70] sm:$0xf]
      %v4250 = vld [vmem:[#allocation2 + $0x74] sm:$0xf]
      %v4251 = vld [vmem:[#allocation2 + $0x78] sm:$0xf]
      %v4252 = vld [vmem:[#allocation2 + $0x7c] sm:$0xf]
      %v4253 = vld [vmem:[#allocation2 + $0x80] sm:$0xf]
      %v4254 = vld [vmem:[#allocation2 + $0x84] sm:$0xf]
      %v4255 = vld [vmem:[#allocation2 + $0x88] sm:$0xf]
      %v4256 = vld [vmem:[#allocation2 + $0x8c] sm:$0xf]
      %v4257 = vld [vmem:[#allocation2 + $0x90] sm:$0xf]
      %v4258 = vld [vmem:[#allocation2 + $0x94] sm:$0xf]
      %v4259 = vld [vmem:[#allocation2 + $0x98] sm:$0xf]
      %v4260 = vld [vmem:[#allocation2 + $0x9c] sm:$0xf]
      %v4261 = vld [vmem:[#allocation2 + $0xa0] sm:$0x3]
      %s4262 = scalar_lea.vmem %s426, 384
      %v4263 = vld [vmem:[%s4262] sm:$0xf]
      %v4264 = vld [vmem:[%s4262 + $0x4] sm:$0xf]
      %v4265 = vld [vmem:[%s4262 + $0x8] sm:$0xf]
      %v4266 = vld [vmem:[%s4262 + $0xc] sm:$0xf]
      %v4267 = vld [vmem:[%s4262 + $0x10] sm:$0xf]
      %v4268 = vld [vmem:[%s4262 + $0x14] sm:$0xf]
      %v4269 = vld [vmem:[%s4262 + $0x18] sm:$0xf]
      %v4270 = vld [vmem:[%s4262 + $0x1c] sm:$0xf]
      %v4271 = vld [vmem:[%s4262 + $0x20] sm:$0xf]
      %v4272 = vld [vmem:[%s4262 + $0x24] sm:$0xf]
      %v4273 = vld [vmem:[%s4262 + $0x28] sm:$0xf]
      %v4274 = vld [vmem:[%s4262 + $0x2c] sm:$0xf]
      %v4275 = vld [vmem:[%s4262 + $0x30] sm:$0xf]
      %v4276 = vld [vmem:[%s4262 + $0x34] sm:$0xf]
      %v4277 = vld [vmem:[%s4262 + $0x38] sm:$0xf]
      %v4278 = vld [vmem:[%s4262 + $0x3c] sm:$0xf]
      %v4316 = vunpack.c.l.b16 %v4225
      %v4317 = vunpack.c.l.b16 %v4226
      %v4318 = vunpack.c.l.b16 %v4227
      %v4319 = vunpack.c.l.b16 %v4228
      %v4320 = vunpack.c.l.b16 %v4229
      %v4321 = vunpack.c.l.b16 %v4230
      %v4322 = vunpack.c.l.b16 %v4231
      %v4323 = vunpack.c.l.b16 %v4232
      %v4324 = vunpack.c.l.b16 %v4233
      %v4325 = vunpack.c.l.b16 %v4234
      %v4326 = vunpack.c.l.b16 %v4235
      %v4327 = vunpack.c.l.b16 %v4236
      %v4328 = vunpack.c.l.b16 %v4237
      %v4329 = vunpack.c.l.b16 %v4238
      %v4330 = vunpack.c.l.b16 %v4239
      %v4331 = vunpack.c.l.b16 %v4240
      %v4332 = vunpack.c.l.b16 %v4241
      %v4333 = vunpack.c.l.b16 %v4242
      %v4334 = vunpack.c.l.b16 %v4243
      %v4335 = vunpack.c.l.b16 %v4244
      %v4336 = vunpack.c.l.b16 %v4245
      %v4337 = vunpack.c.l.b16 %v4246
      %v4338 = vunpack.c.l.b16 %v4247
      %v4339 = vunpack.c.l.b16 %v4248
      %v4340 = vunpack.c.l.b16 %v4249
      %v4341 = vunpack.c.l.b16 %v4250
      %v4342 = vunpack.c.l.b16 %v4251
      %v4343 = vunpack.c.l.b16 %v4252
      %v4344 = vunpack.c.l.b16 %v4253
      %v4345 = vunpack.c.l.b16 %v4254
      %v4346 = vunpack.c.l.b16 %v4255
      %v4347 = vunpack.c.l.b16 %v4256
      %v4348 = vunpack.c.l.b16 %v4257
      %v4349 = vunpack.c.l.b16 %v4258
      %v4350 = vunpack.c.l.b16 %v4259
      %v4351 = vunpack.c.l.b16 %v4260
      %v4352 = vunpack.c.l.b16 %v4261
      %v4353 = vpack.c.b16 %v4317, %v4316
      %v4354 = vpack.c.b16 %v4319, %v4318
      %v4355 = vpack.c.b16 %v4321, %v4320
      %v4356 = vpack.c.b16 %v4323, %v4322
      %v4357 = vpack.c.b16 %v4325, %v4324
      %v4358 = vpack.c.b16 %v4327, %v4326
      %v4359 = vpack.c.b16 %v4329, %v4328
      %v4360 = vpack.c.b16 %v4331, %v4330
      %v4361 = vpack.c.b16 %v4333, %v4332
      %v4362 = vpack.c.b16 %v4335, %v4334
      %v4363 = vpack.c.b16 %v4337, %v4336
      %v4364 = vpack.c.b16 %v4339, %v4338
      %v4365 = vpack.c.b16 %v4341, %v4340
      %v4366 = vpack.c.b16 %v4343, %v4342
      %v4367 = vpack.c.b16 %v4345, %v4344
      %v4368 = vpack.c.b16 %v4347, %v4346
      %v4369 = vpack.c.b16 %v4349, %v4348
      %v4370 = vpack.c.b16 %v4351, %v4350
      %v4371 = vpack.c.b16 %v4352, %v4352
      %v4372 = vrot.slane %v4353, 2
      %v4373 = vrot.slane %v4354, 2
      %v4374 = vsel %vm3908, %v4372, %v4373
      %v4375 = vrot.slane %v4355, 2
      %v4376 = vsel %vm3908, %v4373, %v4375
      %v4377 = vrot.slane %v4356, 2
      %v4378 = vsel %vm3908, %v4375, %v4377
      %v4379 = vrot.slane %v4357, 2
      %v4380 = vsel %vm3908, %v4377, %v4379
      %v4381 = vrot.slane %v4358, 2
      %v4382 = vsel %vm3908, %v4379, %v4381
      %v4383 = vrot.slane %v4359, 2
      %v4384 = vsel %vm3908, %v4381, %v4383
      %v4385 = vrot.slane %v4360, 2
      %v4386 = vsel %vm3908, %v4383, %v4385
      %v4387 = vrot.slane %v4361, 2
      %v4388 = vsel %vm3908, %v4385, %v4387
      %v4389 = vrot.slane %v4362, 2
      %v4390 = vsel %vm3908, %v4387, %v4389
      %v4391 = vrot.slane %v4363, 2
      %v4392 = vsel %vm3908, %v4389, %v4391
      %v4393 = vrot.slane %v4364, 2
      %v4394 = vsel %vm3908, %v4391, %v4393
      %v4395 = vrot.slane %v4365, 2
      %v4396 = vsel %vm3908, %v4393, %v4395
      %v4397 = vrot.slane %v4366, 2
      %v4398 = vsel %vm3908, %v4395, %v4397
      %v4399 = vrot.slane %v4367, 2
      %v4400 = vsel %vm3908, %v4397, %v4399
      %v4401 = vrot.slane %v4368, 2
      %v4402 = vsel %vm3908, %v4399, %v4401
      %v4403 = vrot.slane %v4369, 2
      %v4404 = vsel %vm3908, %v4401, %v4403
      %v4405 = vrot.slane %v4370, 2
      %v4406 = vsel %vm3908, %v4403, %v4405
      %v4407 = vrot.slane %v4371, 2
      %v4408 = vsel %vm3908, %v4405, %v4407
      %v4443 = vunpack.c.l.b16 %v4263
      %v4444 = vunpack.c.l.b16 %v4264
      %v4445 = vunpack.c.l.b16 %v4265
      %v4446 = vunpack.c.l.b16 %v4266
      %v4447 = vunpack.c.l.b16 %v4267
      %v4448 = vunpack.c.l.b16 %v4268
      %v4449 = vunpack.c.l.b16 %v4269
      %v4450 = vunpack.c.l.b16 %v4270
      %v4451 = vunpack.c.l.b16 %v4271
      %v4452 = vunpack.c.l.b16 %v4272
      %v4453 = vunpack.c.l.b16 %v4273
      %v4454 = vunpack.c.l.b16 %v4274
      %v4455 = vunpack.c.l.b16 %v4275
      %v4456 = vunpack.c.l.b16 %v4276
      %v4457 = vunpack.c.l.b16 %v4277
      %v4458 = vunpack.c.l.b16 %v4278
      %v4459 = vpack.c.b16 %v4444, %v4443
      %v4460 = vpack.c.b16 %v4446, %v4445
      %v4461 = vpack.c.b16 %v4448, %v4447
      %v4462 = vpack.c.b16 %v4450, %v4449
      %v4463 = vpack.c.b16 %v4452, %v4451
      %v4464 = vpack.c.b16 %v4454, %v4453
      %v4465 = vpack.c.b16 %v4456, %v4455
      %v4466 = vpack.c.b16 %v4458, %v4457
      %4475 = vmatprep.subr.bf16.mxu0 0
      %4476 = vmatpush1.bf16.msra.mxu0 %v4459
      %4477 = vmatprep.subr.bf16.mxu0 0
      %4478 = vmatpush1.bf16.msra.mxu0 %v4460
      %4479 = vmatprep.subr.bf16.mxu0 0
      %4480 = vmatpush1.bf16.msra.mxu0 %v4461
      %4481 = vmatprep.subr.bf16.mxu0 0
      %4482 = vmatpush1.bf16.msra.mxu0 %v4462
      %4483 = vmatprep.subr.bf16.mxu0 0
      %4484 = vmatpush1.bf16.msra.mxu0 %v4463
      %4485 = vmatprep.subr.bf16.mxu0 0
      %4486 = vmatpush1.bf16.msra.mxu0 %v4464
      %4487 = vmatprep.subr.bf16.mxu0 0
      %4488 = vmatpush1.bf16.msra.mxu0 %v4465
      %4489 = vmatprep.subr.bf16.mxu0 0
      %4490 = vmatpush1.bf16.msra.mxu0 %v4466
      %4491 = vmatprep.subr.bf16.mxu0 0
      %4492 = vmatpush1.bf16.msra.mxu0 0
      %4493 = vmatprep.subr.bf16.mxu0 0
      %4494 = vmatpush1.bf16.msra.mxu0 0
      %4495 = vmatprep.subr.bf16.mxu0 0
      %4496 = vmatpush1.bf16.msra.mxu0 0
      %4497 = vmatprep.subr.bf16.mxu0 0
      %4498 = vmatpush1.bf16.msra.mxu0 0
      %4499 = vmatprep.subr.bf16.mxu0 0
      %4500 = vmatpush1.bf16.msra.mxu0 0
      %4501 = vmatprep.subr.bf16.mxu0 0
      %4502 = vmatpush1.bf16.msra.mxu0 0
      %4503 = vmatprep.subr.bf16.mxu0 0
      %4504 = vmatpush1.bf16.msra.mxu0 0
      %4505 = vmatprep.subr.bf16.mxu0 0
      %4506 = vmatpush1.bf16.msra.mxu0 0
      %4507 = vmatprep.mubr.bf16.mxu0 0
      %4508 = vmatmul.mubr.bf16.gmra.mrb[0].mxu0 %v4374
      %v4509 = vpop.f32.mrb[0].mxu0
      %v4510 = vadd.f32 0.0, %v4509
      %v4511 = vpop.f32.mrb[0].mxu0
      %v4512 = vpop.f32.mrb[0].mxu0
      %v4513 = vadd.f32 0.0, %v4512
      %v4514 = vpop.f32.mrb[0].mxu0
      %4515 = vmatprep.mubr.bf16.mxu0 0
      %4516 = vmatmul.mubr.bf16.gmra.mrb[0].mxu0 %v4376
      %v4517 = vpop.f32.mrb[0].mxu0
      %v4518 = vadd.f32 0.0, %v4517
      %v4519 = vpop.f32.mrb[0].mxu0
      %v4520 = vpop.f32.mrb[0].mxu0
      %v4521 = vadd.f32 0.0, %v4520
      %v4522 = vpop.f32.mrb[0].mxu0
      %4523 = vmatprep.mubr.bf16.mxu0 0
      %4524 = vmatmul.mubr.bf16.gmra.mrb[0].mxu0 %v4378
      %v4525 = vpop.f32.mrb[0].mxu0
      %v4526 = vadd.f32 0.0, %v4525
      %v4527 = vpop.f32.mrb[0].mxu0
      %v4528 = vpop.f32.mrb[0].mxu0
      %v4529 = vadd.f32 0.0, %v4528
      %v4530 = vpop.f32.mrb[0].mxu0
      %4531 = vmatprep.mubr.bf16.mxu0 0
      %4532 = vmatmul.mubr.bf16.gmra.mrb[0].mxu0 %v4380
      %v4533 = vpop.f32.mrb[0].mxu0
      %v4534 = vadd.f32 0.0, %v4533
      %v4535 = vpop.f32.mrb[0].mxu0
      %v4536 = vpop.f32.mrb[0].mxu0
      %v4537 = vadd.f32 0.0, %v4536
      %v4538 = vpop.f32.mrb[0].mxu0
      %4539 = vmatprep.mubr.bf16.mxu0 0
      %4540 = vmatmul.mubr.bf16.gmra.mrb[0].mxu0 %v4382
      %v4541 = vpop.f32.mrb[0].mxu0
      %v4542 = vadd.f32 0.0, %v4541
      %v4543 = vpop.f32.mrb[0].mxu0
      %v4544 = vpop.f32.mrb[0].mxu0
      %v4545 = vadd.f32 0.0, %v4544
      %v4546 = vpop.f32.mrb[0].mxu0
      %4547 = vmatprep.mubr.bf16.mxu0 0
      %4548 = vmatmul.mubr.bf16.gmra.mrb[0].mxu0 %v4384
      %v4549 = vpop.f32.mrb[0].mxu0
      %v4550 = vadd.f32 0.0, %v4549
      %v4551 = vpop.f32.mrb[0].mxu0
      %v4552 = vpop.f32.mrb[0].mxu0
      %v4553 = vadd.f32 0.0, %v4552
      %v4554 = vpop.f32.mrb[0].mxu0
      %4555 = vmatprep.mubr.bf16.mxu0 0
      %4556 = vmatmul.mubr.bf16.gmra.mrb[0].mxu0 %v4386
      %v4557 = vpop.f32.mrb[0].mxu0
      %v4558 = vadd.f32 0.0, %v4557
      %v4559 = vpop.f32.mrb[0].mxu0
      %v4560 = vpop.f32.mrb[0].mxu0
      %v4561 = vadd.f32 0.0, %v4560
      %v4562 = vpop.f32.mrb[0].mxu0
      %4563 = vmatprep.mubr.bf16.mxu0 0
      %4564 = vmatmul.mubr.bf16.gmra.mrb[0].mxu0 %v4388
      %v4565 = vpop.f32.mrb[0].mxu0
      %v4566 = vadd.f32 0.0, %v4565
      %v4567 = vpop.f32.mrb[0].mxu0
      %v4568 = vpop.f32.mrb[0].mxu0
      %v4569 = vadd.f32 0.0, %v4568
      %v4570 = vpop.f32.mrb[0].mxu0
      %4571 = vmatprep.mubr.bf16.mxu0 0
      %4572 = vmatmul.mubr.bf16.gmra.mrb[0].mxu0 %v4390
      %v4573 = vpop.f32.mrb[0].mxu0
      %v4574 = vadd.f32 0.0, %v4573
      %v4575 = vpop.f32.mrb[0].mxu0
      %v4576 = vpop.f32.mrb[0].mxu0
      %v4577 = vadd.f32 0.0, %v4576
      %v4578 = vpop.f32.mrb[0].mxu0
      %4579 = vmatprep.mubr.bf16.mxu0 0
      %4580 = vmatmul.mubr.bf16.gmra.mrb[0].mxu0 %v4392
      %v4581 = vpop.f32.mrb[0].mxu0
      %v4582 = vadd.f32 0.0, %v4581
      %v4583 = vpop.f32.mrb[0].mxu0
      %v4584 = vpop.f32.mrb[0].mxu0
      %v4585 = vadd.f32 0.0, %v4584
      %v4586 = vpop.f32.mrb[0].mxu0
      %4587 = vmatprep.mubr.bf16.mxu0 0
      %4588 = vmatmul.mubr.bf16.gmra.mrb[0].mxu0 %v4394
      %v4589 = vpop.f32.mrb[0].mxu0
      %v4590 = vadd.f32 0.0, %v4589
      %v4591 = vpop.f32.mrb[0].mxu0
      %v4592 = vpop.f32.mrb[0].mxu0
      %v4593 = vadd.f32 0.0, %v4592
      %v4594 = vpop.f32.mrb[0].mxu0
      %4595 = vmatprep.mubr.bf16.mxu0 0
      %4596 = vmatmul.mubr.bf16.gmra.mrb[0].mxu0 %v4396
      %v4597 = vpop.f32.mrb[0].mxu0
      %v4598 = vadd.f32 0.0, %v4597
      %v4599 = vpop.f32.mrb[0].mxu0
      %v4600 = vpop.f32.mrb[0].mxu0
      %v4601 = vadd.f32 0.0, %v4600
      %v4602 = vpop.f32.mrb[0].mxu0
      %4603 = vmatprep.mubr.bf16.mxu0 0
      %4604 = vmatmul.mubr.bf16.gmra.mrb[0].mxu0 %v4398
      %v4605 = vpop.f32.mrb[0].mxu0
      %v4606 = vadd.f32 0.0, %v4605
      %v4607 = vpop.f32.mrb[0].mxu0
      %v4608 = vpop.f32.mrb[0].mxu0
      %v4609 = vadd.f32 0.0, %v4608
      %v4610 = vpop.f32.mrb[0].mxu0
      %4611 = vmatprep.mubr.bf16.mxu0 0
      %4612 = vmatmul.mubr.bf16.gmra.mrb[0].mxu0 %v4400
      %v4613 = vpop.f32.mrb[0].mxu0
      %v4614 = vadd.f32 0.0, %v4613
      %v4615 = vpop.f32.mrb[0].mxu0
      %v4616 = vpop.f32.mrb[0].mxu0
      %v4617 = vadd.f32 0.0, %v4616
      %v4618 = vpop.f32.mrb[0].mxu0
      %4619 = vmatprep.mubr.bf16.mxu0 0
      %4620 = vmatmul.mubr.bf16.gmra.mrb[0].mxu0 %v4402
      %v4621 = vpop.f32.mrb[0].mxu0
      %v4622 = vadd.f32 0.0, %v4621
      %v4623 = vpop.f32.mrb[0].mxu0
      %v4624 = vpop.f32.mrb[0].mxu0
      %v4625 = vadd.f32 0.0, %v4624
      %v4626 = vpop.f32.mrb[0].mxu0
      %4627 = vmatprep.mubr.bf16.mxu0 0
      %4628 = vmatmul.mubr.bf16.gmra.mrb[0].mxu0 %v4404
      %v4629 = vpop.f32.mrb[0].mxu0
      %v4630 = vadd.f32 0.0, %v4629
      %v4631 = vpop.f32.mrb[0].mxu0
      %v4632 = vpop.f32.mrb[0].mxu0
      %v4633 = vadd.f32 0.0, %v4632
      %v4634 = vpop.f32.mrb[0].mxu0
      %4635 = vmatprep.mubr.bf16.mxu0 0
      %4636 = vmatmul.mubr.bf16.gmra.mrb[0].mxu0 %v4406
      %v4637 = vpop.f32.mrb[0].mxu0
      %v4638 = vadd.f32 0.0, %v4637
      %v4639 = vpop.f32.mrb[0].mxu0
      %v4640 = vpop.f32.mrb[0].mxu0
      %v4641 = vadd.f32 0.0, %v4640
      %v4642 = vpop.f32.mrb[0].mxu0
      %4643 = vmatprep.mubr.bf16.mxu0 0
      %4644 = vmatmul.mubr.bf16.gmra.mrb[0].mxu0 %v4408
      %v4645 = vpop.f32.mrb[0].mxu0
      %v4646 = vadd.f32 0.0, %v4645
      %v4647 = vpop.f32.mrb[0].mxu0
      %v4648 = vpop.f32.mrb[0].mxu0
      %v4649 = vadd.f32 0.0, %v4648
      %v4650 = vpop.f32.mrb[0].mxu0
      %4651 = vdwg.mxu0
      %v4652 = vadd.f32 %v4189, %v4510
      %v4653 = vadd.f32 %v4190, %v4513
      %v4654 = vadd.f32 %v4191, %v4518
      %v4655 = vadd.f32 %v4192, %v4521
      %v4656 = vadd.f32 %v4193, %v4526
      %v4657 = vadd.f32 %v4194, %v4529
      %v4658 = vadd.f32 %v4195, %v4534
      %v4659 = vadd.f32 %v4196, %v4537
      %v4660 = vadd.f32 %v4197, %v4542
      %v4661 = vadd.f32 %v4198, %v4545
      %v4662 = vadd.f32 %v4199, %v4550
      %v4663 = vadd.f32 %v4200, %v4553
      %v4664 = vadd.f32 %v4201, %v4558
      %v4665 = vadd.f32 %v4202, %v4561
      %v4666 = vadd.f32 %v4203, %v4566
      %v4667 = vadd.f32 %v4204, %v4569
      %v4668 = vadd.f32 %v4205, %v4574
      %v4669 = vadd.f32 %v4206, %v4577
      %v4670 = vadd.f32 %v4207, %v4582
      %v4671 = vadd.f32 %v4208, %v4585
      %v4672 = vadd.f32 %v4209, %v4590
      %v4673 = vadd.f32 %v4210, %v4593
      %v4674 = vadd.f32 %v4211, %v4598
      %v4675 = vadd.f32 %v4212, %v4601
      %v4676 = vadd.f32 %v4213, %v4606
      %v4677 = vadd.f32 %v4214, %v4609
      %v4678 = vadd.f32 %v4215, %v4614
      %v4679 = vadd.f32 %v4216, %v4617
      %v4680 = vadd.f32 %v4217, %v4622
      %v4681 = vadd.f32 %v4218, %v4625
      %v4682 = vadd.f32 %v4219, %v4630
      %v4683 = vadd.f32 %v4220, %v4633
      %v4684 = vadd.f32 %v4221, %v4638
      %v4685 = vadd.f32 %v4222, %v4641
      %v4686 = vadd.f32 %v4223, %v4646
      %v4687 = vadd.f32 %v4224, %v4649
      %v4688 = vld [vmem:[#allocation2 + $0xa0] sm:$0x7]
      %s4689 = scalar_lea.vmem %s426, 448
      %v4690 = vld [vmem:[%s4689] sm:$0xf]
      %v4691 = vld [vmem:[%s4689 + $0x4] sm:$0xf]
      %v4692 = vld [vmem:[%s4689 + $0x8] sm:$0xf]
      %v4693 = vld [vmem:[%s4689 + $0xc] sm:$0xf]
      %v4694 = vld [vmem:[%s4689 + $0x10] sm:$0xf]
      %v4695 = vld [vmem:[%s4689 + $0x14] sm:$0xf]
      %v4696 = vld [vmem:[%s4689 + $0x18] sm:$0xf]
      %v4697 = vld [vmem:[%s4689 + $0x1c] sm:$0xf]
      %v4698 = vld [vmem:[%s4689 + $0x20] sm:$0xf]
      %v4699 = vld [vmem:[%s4689 + $0x24] sm:$0xf]
      %v4700 = vld [vmem:[%s4689 + $0x28] sm:$0xf]
      %v4701 = vld [vmem:[%s4689 + $0x2c] sm:$0xf]
      %v4702 = vld [vmem:[%s4689 + $0x30] sm:$0xf]
      %v4703 = vld [vmem:[%s4689 + $0x34] sm:$0xf]
      %v4704 = vld [vmem:[%s4689 + $0x38] sm:$0xf]
      %v4705 = vld [vmem:[%s4689 + $0x3c] sm:$0xf]
      %v4707 = vunpack.c.l.b16 %v4688
      %v4708 = vpack.c.b16 %v4707, %v4707
      %vm4709 = vsmask.f32 5376
      %v4711 = vshrl.u32 %v4353, 16
      %v4713 = vrot.slane %v4711, 2
      %v4714 = vshll.u32 %v4353, 16
      %v4716 = vrot.slane %v4714, 3
      %v4717 = vor.u32 %v4713, %v4716
      %v4719 = vshrl.u32 %v4354, 16
      %v4721 = vrot.slane %v4719, 2
      %v4722 = vshll.u32 %v4354, 16
      %v4724 = vrot.slane %v4722, 3
      %v4725 = vor.u32 %v4721, %v4724
      %v4726 = vsel %vm4709, %v4717, %v4725
      %v4728 = vshrl.u32 %v4355, 16
      %v4730 = vrot.slane %v4728, 2
      %v4731 = vshll.u32 %v4355, 16
      %v4733 = vrot.slane %v4731, 3
      %v4734 = vor.u32 %v4730, %v4733
      %v4735 = vsel %vm4709, %v4725, %v4734
      %v4737 = vshrl.u32 %v4356, 16
      %v4739 = vrot.slane %v4737, 2
      %v4740 = vshll.u32 %v4356, 16
      %v4742 = vrot.slane %v4740, 3
      %v4743 = vor.u32 %v4739, %v4742
      %v4744 = vsel %vm4709, %v4734, %v4743
      %v4746 = vshrl.u32 %v4357, 16
      %v4748 = vrot.slane %v4746, 2
      %v4749 = vshll.u32 %v4357, 16
      %v4751 = vrot.slane %v4749, 3
      %v4752 = vor.u32 %v4748, %v4751
      %v4753 = vsel %vm4709, %v4743, %v4752
      %v4755 = vshrl.u32 %v4358, 16
      %v4757 = vrot.slane %v4755, 2
      %v4758 = vshll.u32 %v4358, 16
      %v4760 = vrot.slane %v4758, 3
      %v4761 = vor.u32 %v4757, %v4760
      %v4762 = vsel %vm4709, %v4752, %v4761
      %v4764 = vshrl.u32 %v4359, 16
      %v4766 = vrot.slane %v4764, 2
      %v4767 = vshll.u32 %v4359, 16
      %v4769 = vrot.slane %v4767, 3
      %v4770 = vor.u32 %v4766, %v4769
      %v4771 = vsel %vm4709, %v4761, %v4770
      %v4773 = vshrl.u32 %v4360, 16
      %v4775 = vrot.slane %v4773, 2
      %v4776 = vshll.u32 %v4360, 16
      %v4778 = vrot.slane %v4776, 3
      %v4779 = vor.u32 %v4775, %v4778
      %v4780 = vsel %vm4709, %v4770, %v4779
      %v4782 = vshrl.u32 %v4361, 16
      %v4784 = vrot.slane %v4782, 2
      %v4785 = vshll.u32 %v4361, 16
      %v4787 = vrot.slane %v4785, 3
      %v4788 = vor.u32 %v4784, %v4787
      %v4789 = vsel %vm4709, %v4779, %v4788
      %v4791 = vshrl.u32 %v4362, 16
      %v4793 = vrot.slane %v4791, 2
      %v4794 = vshll.u32 %v4362, 16
      %v4796 = vrot.slane %v4794, 3
      %v4797 = vor.u32 %v4793, %v4796
      %v4798 = vsel %vm4709, %v4788, %v4797
      %v4800 = vshrl.u32 %v4363, 16
      %v4802 = vrot.slane %v4800, 2
      %v4803 = vshll.u32 %v4363, 16
      %v4805 = vrot.slane %v4803, 3
      %v4806 = vor.u32 %v4802, %v4805
      %v4807 = vsel %vm4709, %v4797, %v4806
      %v4809 = vshrl.u32 %v4364, 16
      %v4811 = vrot.slane %v4809, 2
      %v4812 = vshll.u32 %v4364, 16
      %v4814 = vrot.slane %v4812, 3
      %v4815 = vor.u32 %v4811, %v4814
      %v4816 = vsel %vm4709, %v4806, %v4815
      %v4818 = vshrl.u32 %v4365, 16
      %v4820 = vrot.slane %v4818, 2
      %v4821 = vshll.u32 %v4365, 16
      %v4823 = vrot.slane %v4821, 3
      %v4824 = vor.u32 %v4820, %v4823
      %v4825 = vsel %vm4709, %v4815, %v4824
      %v4827 = vshrl.u32 %v4366, 16
      %v4829 = vrot.slane %v4827, 2
      %v4830 = vshll.u32 %v4366, 16
      %v4832 = vrot.slane %v4830, 3
      %v4833 = vor.u32 %v4829, %v4832
      %v4834 = vsel %vm4709, %v4824, %v4833
      %v4836 = vshrl.u32 %v4367, 16
      %v4838 = vrot.slane %v4836, 2
      %v4839 = vshll.u32 %v4367, 16
      %v4841 = vrot.slane %v4839, 3
      %v4842 = vor.u32 %v4838, %v4841
      %v4843 = vsel %vm4709, %v4833, %v4842
      %v4845 = vshrl.u32 %v4368, 16
      %v4847 = vrot.slane %v4845, 2
      %v4848 = vshll.u32 %v4368, 16
      %v4850 = vrot.slane %v4848, 3
      %v4851 = vor.u32 %v4847, %v4850
      %v4852 = vsel %vm4709, %v4842, %v4851
      %v4854 = vshrl.u32 %v4369, 16
      %v4856 = vrot.slane %v4854, 2
      %v4857 = vshll.u32 %v4369, 16
      %v4859 = vrot.slane %v4857, 3
      %v4860 = vor.u32 %v4856, %v4859
      %v4861 = vsel %vm4709, %v4851, %v4860
      %v4863 = vshrl.u32 %v4370, 16
      %v4865 = vrot.slane %v4863, 2
      %v4866 = vshll.u32 %v4370, 16
      %v4868 = vrot.slane %v4866, 3
      %v4869 = vor.u32 %v4865, %v4868
      %v4870 = vsel %vm4709, %v4860, %v4869
      %v4872 = vshrl.u32 %v4708, 16
      %v4874 = vrot.slane %v4872, 2
      %v4875 = vshll.u32 %v4708, 16
      %v4877 = vrot.slane %v4875, 3
      %v4878 = vor.u32 %v4874, %v4877
      %v4879 = vsel %vm4709, %v4869, %v4878
      %v4914 = vunpack.c.l.b16 %v4690
      %v4915 = vunpack.c.l.b16 %v4691
      %v4916 = vunpack.c.l.b16 %v4692
      %v4917 = vunpack.c.l.b16 %v4693
      %v4918 = vunpack.c.l.b16 %v4694
      %v4919 = vunpack.c.l.b16 %v4695
      %v4920 = vunpack.c.l.b16 %v4696
      %v4921 = vunpack.c.l.b16 %v4697
      %v4922 = vunpack.c.l.b16 %v4698
      %v4923 = vunpack.c.l.b16 %v4699
      %v4924 = vunpack.c.l.b16 %v4700
      %v4925 = vunpack.c.l.b16 %v4701
      %v4926 = vunpack.c.l.b16 %v4702
      %v4927 = vunpack.c.l.b16 %v4703
      %v4928 = vunpack.c.l.b16 %v4704
      %v4929 = vunpack.c.l.b16 %v4705
      %v4930 = vpack.c.b16 %v4915, %v4914
      %v4931 = vpack.c.b16 %v4917, %v4916
      %v4932 = vpack.c.b16 %v4919, %v4918
      %v4933 = vpack.c.b16 %v4921, %v4920
      %v4934 = vpack.c.b16 %v4923, %v4922
      %v4935 = vpack.c.b16 %v4925, %v4924
      %v4936 = vpack.c.b16 %v4927, %v4926
      %v4937 = vpack.c.b16 %v4929, %v4928
      %4946 = vmatprep.subr.bf16.mxu0 0
      %4947 = vmatpush1.bf16.msra.mxu0 %v4930
      %4948 = vmatprep.subr.bf16.mxu0 0
      %4949 = vmatpush1.bf16.msra.mxu0 %v4931
      %4950 = vmatprep.subr.bf16.mxu0 0
      %4951 = vmatpush1.bf16.msra.mxu0 %v4932
      %4952 = vmatprep.subr.bf16.mxu0 0
      %4953 = vmatpush1.bf16.msra.mxu0 %v4933
      %4954 = vmatprep.subr.bf16.mxu0 0
      %4955 = vmatpush1.bf16.msra.mxu0 %v4934
      %4956 = vmatprep.subr.bf16.mxu0 0
      %4957 = vmatpush1.bf16.msra.mxu0 %v4935
      %4958 = vmatprep.subr.bf16.mxu0 0
      %4959 = vmatpush1.bf16.msra.mxu0 %v4936
      %4960 = vmatprep.subr.bf16.mxu0 0
      %4961 = vmatpush1.bf16.msra.mxu0 %v4937
      %4962 = vmatprep.subr.bf16.mxu0 0
      %4963 = vmatpush1.bf16.msra.mxu0 0
      %4964 = vmatprep.subr.bf16.mxu0 0
      %4965 = vmatpush1.bf16.msra.mxu0 0
      %4966 = vmatprep.subr.bf16.mxu0 0
      %4967 = vmatpush1.bf16.msra.mxu0 0
      %4968 = vmatprep.subr.bf16.mxu0 0
      %4969 = vmatpush1.bf16.msra.mxu0 0
      %4970 = vmatprep.subr.bf16.mxu0 0
      %4971 = vmatpush1.bf16.msra.mxu0 0
      %4972 = vmatprep.subr.bf16.mxu0 0
      %4973 = vmatpush1.bf16.msra.mxu0 0
      %4974 = vmatprep.subr.bf16.mxu0 0
      %4975 = vmatpush1.bf16.msra.mxu0 0
      %4976 = vmatprep.subr.bf16.mxu0 0
      %4977 = vmatpush1.bf16.msra.mxu0 0
      %4978 = vmatprep.mubr.bf16.mxu0 0
      %4979 = vmatmul.mubr.bf16.gmra.mrb[0].mxu0 %v4726
      %v4980 = vpop.f32.mrb[0].mxu0
      %v4981 = vadd.f32 0.0, %v4980
      %v4982 = vpop.f32.mrb[0].mxu0
      %v4983 = vpop.f32.mrb[0].mxu0
      %v4984 = vadd.f32 0.0, %v4983
      %v4985 = vpop.f32.mrb[0].mxu0
      %4986 = vmatprep.mubr.bf16.mxu0 0
      %4987 = vmatmul.mubr.bf16.gmra.mrb[0].mxu0 %v4735
      %v4988 = vpop.f32.mrb[0].mxu0
      %v4989 = vadd.f32 0.0, %v4988
      %v4990 = vpop.f32.mrb[0].mxu0
      %v4991 = vpop.f32.mrb[0].mxu0
      %v4992 = vadd.f32 0.0, %v4991
      %v4993 = vpop.f32.mrb[0].mxu0
      %4994 = vmatprep.mubr.bf16.mxu0 0
      %4995 = vmatmul.mubr.bf16.gmra.mrb[0].mxu0 %v4744
      %v4996 = vpop.f32.mrb[0].mxu0
      %v4997 = vadd.f32 0.0, %v4996
      %v4998 = vpop.f32.mrb[0].mxu0
      %v4999 = vpop.f32.mrb[0].mxu0
      %v5000 = vadd.f32 0.0, %v4999
      %v5001 = vpop.f32.mrb[0].mxu0
      %5002 = vmatprep.mubr.bf16.mxu0 0
      %5003 = vmatmul.mubr.bf16.gmra.mrb[0].mxu0 %v4753
      %v5004 = vpop.f32.mrb[0].mxu0
      %v5005 = vadd.f32 0.0, %v5004
      %v5006 = vpop.f32.mrb[0].mxu0
      %v5007 = vpop.f32.mrb[0].mxu0
      %v5008 = vadd.f32 0.0, %v5007
      %v5009 = vpop.f32.mrb[0].mxu0
      %5010 = vmatprep.mubr.bf16.mxu0 0
      %5011 = vmatmul.mubr.bf16.gmra.mrb[0].mxu0 %v4762
      %v5012 = vpop.f32.mrb[0].mxu0
      %v5013 = vadd.f32 0.0, %v5012
      %v5014 = vpop.f32.mrb[0].mxu0
      %v5015 = vpop.f32.mrb[0].mxu0
      %v5016 = vadd.f32 0.0, %v5015
      %v5017 = vpop.f32.mrb[0].mxu0
      %5018 = vmatprep.mubr.bf16.mxu0 0
      %5019 = vmatmul.mubr.bf16.gmra.mrb[0].mxu0 %v4771
      %v5020 = vpop.f32.mrb[0].mxu0
      %v5021 = vadd.f32 0.0, %v5020
      %v5022 = vpop.f32.mrb[0].mxu0
      %v5023 = vpop.f32.mrb[0].mxu0
      %v5024 = vadd.f32 0.0, %v5023
      %v5025 = vpop.f32.mrb[0].mxu0
      %5026 = vmatprep.mubr.bf16.mxu0 0
      %5027 = vmatmul.mubr.bf16.gmra.mrb[0].mxu0 %v4780
      %v5028 = vpop.f32.mrb[0].mxu0
      %v5029 = vadd.f32 0.0, %v5028
      %v5030 = vpop.f32.mrb[0].mxu0
      %v5031 = vpop.f32.mrb[0].mxu0
      %v5032 = vadd.f32 0.0, %v5031
      %v5033 = vpop.f32.mrb[0].mxu0
      %5034 = vmatprep.mubr.bf16.mxu0 0
      %5035 = vmatmul.mubr.bf16.gmra.mrb[0].mxu0 %v4789
      %v5036 = vpop.f32.mrb[0].mxu0
      %v5037 = vadd.f32 0.0, %v5036
      %v5038 = vpop.f32.mrb[0].mxu0
      %v5039 = vpop.f32.mrb[0].mxu0
      %v5040 = vadd.f32 0.0, %v5039
      %v5041 = vpop.f32.mrb[0].mxu0
      %5042 = vmatprep.mubr.bf16.mxu0 0
      %5043 = vmatmul.mubr.bf16.gmra.mrb[0].mxu0 %v4798
      %v5044 = vpop.f32.mrb[0].mxu0
      %v5045 = vadd.f32 0.0, %v5044
      %v5046 = vpop.f32.mrb[0].mxu0
      %v5047 = vpop.f32.mrb[0].mxu0
      %v5048 = vadd.f32 0.0, %v5047
      %v5049 = vpop.f32.mrb[0].mxu0
      %5050 = vmatprep.mubr.bf16.mxu0 0
      %5051 = vmatmul.mubr.bf16.gmra.mrb[0].mxu0 %v4807
      %v5052 = vpop.f32.mrb[0].mxu0
      %v5053 = vadd.f32 0.0, %v5052
      %v5054 = vpop.f32.mrb[0].mxu0
      %v5055 = vpop.f32.mrb[0].mxu0
      %v5056 = vadd.f32 0.0, %v5055
      %v5057 = vpop.f32.mrb[0].mxu0
      %5058 = vmatprep.mubr.bf16.mxu0 0
      %5059 = vmatmul.mubr.bf16.gmra.mrb[0].mxu0 %v4816
      %v5060 = vpop.f32.mrb[0].mxu0
      %v5061 = vadd.f32 0.0, %v5060
      %v5062 = vpop.f32.mrb[0].mxu0
      %v5063 = vpop.f32.mrb[0].mxu0
      %v5064 = vadd.f32 0.0, %v5063
      %v5065 = vpop.f32.mrb[0].mxu0
      %5066 = vmatprep.mubr.bf16.mxu0 0
      %5067 = vmatmul.mubr.bf16.gmra.mrb[0].mxu0 %v4825
      %v5068 = vpop.f32.mrb[0].mxu0
      %v5069 = vadd.f32 0.0, %v5068
      %v5070 = vpop.f32.mrb[0].mxu0
      %v5071 = vpop.f32.mrb[0].mxu0
      %v5072 = vadd.f32 0.0, %v5071
      %v5073 = vpop.f32.mrb[0].mxu0
      %5074 = vmatprep.mubr.bf16.mxu0 0
      %5075 = vmatmul.mubr.bf16.gmra.mrb[0].mxu0 %v4834
      %v5076 = vpop.f32.mrb[0].mxu0
      %v5077 = vadd.f32 0.0, %v5076
      %v5078 = vpop.f32.mrb[0].mxu0
      %v5079 = vpop.f32.mrb[0].mxu0
      %v5080 = vadd.f32 0.0, %v5079
      %v5081 = vpop.f32.mrb[0].mxu0
      %5082 = vmatprep.mubr.bf16.mxu0 0
      %5083 = vmatmul.mubr.bf16.gmra.mrb[0].mxu0 %v4843
      %v5084 = vpop.f32.mrb[0].mxu0
      %v5085 = vadd.f32 0.0, %v5084
      %v5086 = vpop.f32.mrb[0].mxu0
      %v5087 = vpop.f32.mrb[0].mxu0
      %v5088 = vadd.f32 0.0, %v5087
      %v5089 = vpop.f32.mrb[0].mxu0
      %5090 = vmatprep.mubr.bf16.mxu0 0
      %5091 = vmatmul.mubr.bf16.gmra.mrb[0].mxu0 %v4852
      %v5092 = vpop.f32.mrb[0].mxu0
      %v5093 = vadd.f32 0.0, %v5092
      %v5094 = vpop.f32.mrb[0].mxu0
      %v5095 = vpop.f32.mrb[0].mxu0
      %v5096 = vadd.f32 0.0, %v5095
      %v5097 = vpop.f32.mrb[0].mxu0
      %5098 = vmatprep.mubr.bf16.mxu0 0
      %5099 = vmatmul.mubr.bf16.gmra.mrb[0].mxu0 %v4861
      %v5100 = vpop.f32.mrb[0].mxu0
      %v5101 = vadd.f32 0.0, %v5100
      %v5102 = vpop.f32.mrb[0].mxu0
      %v5103 = vpop.f32.mrb[0].mxu0
      %v5104 = vadd.f32 0.0, %v5103
      %v5105 = vpop.f32.mrb[0].mxu0
      %5106 = vmatprep.mubr.bf16.mxu0 0
      %5107 = vmatmul.mubr.bf16.gmra.mrb[0].mxu0 %v4870
      %v5108 = vpop.f32.mrb[0].mxu0
      %v5109 = vadd.f32 0.0, %v5108
      %v5110 = vpop.f32.mrb[0].mxu0
      %v5111 = vpop.f32.mrb[0].mxu0
      %v5112 = vadd.f32 0.0, %v5111
      %v5113 = vpop.f32.mrb[0].mxu0
      %5114 = vmatprep.mubr.bf16.mxu0 0
      %5115 = vmatmul.mubr.bf16.gmra.mrb[0].mxu0 %v4879
      %v5116 = vpop.f32.mrb[0].mxu0
      %v5117 = vadd.f32 0.0, %v5116
      %v5118 = vpop.f32.mrb[0].mxu0
      %v5119 = vpop.f32.mrb[0].mxu0
      %v5120 = vadd.f32 0.0, %v5119
      %v5121 = vpop.f32.mrb[0].mxu0
      %5122 = vdwg.mxu0
      %v5123 = vadd.f32 %v4652, %v4981
      %v5124 = vadd.f32 %v4653, %v4984
      %v5125 = vadd.f32 %v4654, %v4989
      %v5126 = vadd.f32 %v4655, %v4992
      %v5127 = vadd.f32 %v4656, %v4997
      %v5128 = vadd.f32 %v4657, %v5000
      %v5129 = vadd.f32 %v4658, %v5005
      %v5130 = vadd.f32 %v4659, %v5008
      %v5131 = vadd.f32 %v4660, %v5013
      %v5132 = vadd.f32 %v4661, %v5016
      %v5133 = vadd.f32 %v4662, %v5021
      %v5134 = vadd.f32 %v4663, %v5024
      %v5135 = vadd.f32 %v4664, %v5029
      %v5136 = vadd.f32 %v4665, %v5032
      %v5137 = vadd.f32 %v4666, %v5037
      %v5138 = vadd.f32 %v4667, %v5040
      %v5139 = vadd.f32 %v4668, %v5045
      %v5140 = vadd.f32 %v4669, %v5048
      %v5141 = vadd.f32 %v4670, %v5053
      %v5142 = vadd.f32 %v4671, %v5056
      %v5143 = vadd.f32 %v4672, %v5061
      %v5144 = vadd.f32 %v4673, %v5064
      %v5145 = vadd.f32 %v4674, %v5069
      %v5146 = vadd.f32 %v4675, %v5072
      %v5147 = vadd.f32 %v4676, %v5077
      %v5148 = vadd.f32 %v4677, %v5080
      %v5149 = vadd.f32 %v4678, %v5085
      %v5150 = vadd.f32 %v4679, %v5088
      %v5151 = vadd.f32 %v4680, %v5093
      %v5152 = vadd.f32 %v4681, %v5096
      %v5153 = vadd.f32 %v4682, %v5101
      %v5154 = vadd.f32 %v4683, %v5104
      %v5155 = vadd.f32 %v4684, %v5109
      %v5156 = vadd.f32 %v4685, %v5112
      %v5157 = vadd.f32 %v4686, %v5117
      %v5158 = vadd.f32 %v4687, %v5120
      %v5159 = vld [vmem:[#allocation2 + $0x10] sm:$0x8]
      %s5160 = scalar_lea.vmem %s426, 512
      %v5161 = vld [vmem:[%s5160] sm:$0xf]
      %v5162 = vld [vmem:[%s5160 + $0x4] sm:$0xf]
      %v5163 = vld [vmem:[%s5160 + $0x8] sm:$0xf]
      %v5164 = vld [vmem:[%s5160 + $0xc] sm:$0xf]
      %v5165 = vld [vmem:[%s5160 + $0x10] sm:$0xf]
      %v5166 = vld [vmem:[%s5160 + $0x14] sm:$0xf]
      %v5167 = vld [vmem:[%s5160 + $0x18] sm:$0xf]
      %v5168 = vld [vmem:[%s5160 + $0x1c] sm:$0xf]
      %v5169 = vld [vmem:[%s5160 + $0x20] sm:$0xf]
      %v5170 = vld [vmem:[%s5160 + $0x24] sm:$0xf]
      %v5171 = vld [vmem:[%s5160 + $0x28] sm:$0xf]
      %v5172 = vld [vmem:[%s5160 + $0x2c] sm:$0xf]
      %v5173 = vld [vmem:[%s5160 + $0x30] sm:$0xf]
      %v5174 = vld [vmem:[%s5160 + $0x34] sm:$0xf]
      %v5175 = vld [vmem:[%s5160 + $0x38] sm:$0xf]
      %v5176 = vld [vmem:[%s5160 + $0x3c] sm:$0xf]
      %v5178 = vunpack.c.l.b16 %v5159
      %v5179 = vpack.c.b16 %v4317, %v5178
      %vm5180 = vcmask 1044480
      %v5181 = vrot.slane %v5179, 3
      %v5182 = vrot.slane %v4354, 3
      %v5183 = vsel %vm5180, %v5181, %v5182
      %v5184 = vrot.slane %v4355, 3
      %v5185 = vsel %vm5180, %v5182, %v5184
      %v5186 = vrot.slane %v4356, 3
      %v5187 = vsel %vm5180, %v5184, %v5186
      %v5188 = vrot.slane %v4357, 3
      %v5189 = vsel %vm5180, %v5186, %v5188
      %v5190 = vrot.slane %v4358, 3
      %v5191 = vsel %vm5180, %v5188, %v5190
      %v5192 = vrot.slane %v4359, 3
      %v5193 = vsel %vm5180, %v5190, %v5192
      %v5194 = vrot.slane %v4360, 3
      %v5195 = vsel %vm5180, %v5192, %v5194
      %v5196 = vrot.slane %v4361, 3
      %v5197 = vsel %vm5180, %v5194, %v5196
      %v5198 = vrot.slane %v4362, 3
      %v5199 = vsel %vm5180, %v5196, %v5198
      %v5200 = vrot.slane %v4363, 3
      %v5201 = vsel %vm5180, %v5198, %v5200
      %v5202 = vrot.slane %v4364, 3
      %v5203 = vsel %vm5180, %v5200, %v5202
      %v5204 = vrot.slane %v4365, 3
      %v5205 = vsel %vm5180, %v5202, %v5204
      %v5206 = vrot.slane %v4366, 3
      %v5207 = vsel %vm5180, %v5204, %v5206
      %v5208 = vrot.slane %v4367, 3
      %v5209 = vsel %vm5180, %v5206, %v5208
      %v5210 = vrot.slane %v4368, 3
      %v5211 = vsel %vm5180, %v5208, %v5210
      %v5212 = vrot.slane %v4369, 3
      %v5213 = vsel %vm5180, %v5210, %v5212
      %v5214 = vrot.slane %v4370, 3
      %v5215 = vsel %vm5180, %v5212, %v5214
      %v5216 = vrot.slane %v4708, 3
      %v5217 = vsel %vm5180, %v5214, %v5216
      %v5252 = vunpack.c.l.b16 %v5161
      %v5253 = vunpack.c.l.b16 %v5162
      %v5254 = vunpack.c.l.b16 %v5163
      %v5255 = vunpack.c.l.b16 %v5164
      %v5256 = vunpack.c.l.b16 %v5165
      %v5257 = vunpack.c.l.b16 %v5166
      %v5258 = vunpack.c.l.b16 %v5167
      %v5259 = vunpack.c.l.b16 %v5168
      %v5260 = vunpack.c.l.b16 %v5169
      %v5261 = vunpack.c.l.b16 %v5170
      %v5262 = vunpack.c.l.b16 %v5171
      %v5263 = vunpack.c.l.b16 %v5172
      %v5264 = vunpack.c.l.b16 %v5173
      %v5265 = vunpack.c.l.b16 %v5174
      %v5266 = vunpack.c.l.b16 %v5175
      %v5267 = vunpack.c.l.b16 %v5176
      %v5268 = vpack.c.b16 %v5253, %v5252
      %v5269 = vpack.c.b16 %v5255, %v5254
      %v5270 = vpack.c.b16 %v5257, %v5256
      %v5271 = vpack.c.b16 %v5259, %v5258
      %v5272 = vpack.c.b16 %v5261, %v5260
      %v5273 = vpack.c.b16 %v5263, %v5262
      %v5274 = vpack.c.b16 %v5265, %v5264
      %v5275 = vpack.c.b16 %v5267, %v5266
      %5284 = vmatprep.subr.bf16.mxu0 0
      %5285 = vmatpush1.bf16.msra.mxu0 %v5268
      %5286 = vmatprep.subr.bf16.mxu0 0
      %5287 = vmatpush1.bf16.msra.mxu0 %v5269
      %5288 = vmatprep.subr.bf16.mxu0 0
      %5289 = vmatpush1.bf16.msra.mxu0 %v5270
      %5290 = vmatprep.subr.bf16.mxu0 0
      %5291 = vmatpush1.bf16.msra.mxu0 %v5271
      %5292 = vmatprep.subr.bf16.mxu0 0
      %5293 = vmatpush1.bf16.msra.mxu0 %v5272
      %5294 = vmatprep.subr.bf16.mxu0 0
      %5295 = vmatpush1.bf16.msra.mxu0 %v5273
      %5296 = vmatprep.subr.bf16.mxu0 0
      %5297 = vmatpush1.bf16.msra.mxu0 %v5274
      %5298 = vmatprep.subr.bf16.mxu0 0
      %5299 = vmatpush1.bf16.msra.mxu0 %v5275
      %5300 = vmatprep.subr.bf16.mxu0 0
      %5301 = vmatpush1.bf16.msra.mxu0 0
      %5302 = vmatprep.subr.bf16.mxu0 0
      %5303 = vmatpush1.bf16.msra.mxu0 0
      %5304 = vmatprep.subr.bf16.mxu0 0
      %5305 = vmatpush1.bf16.msra.mxu0 0
      %5306 = vmatprep.subr.bf16.mxu0 0
      %5307 = vmatpush1.bf16.msra.mxu0 0
      %5308 = vmatprep.subr.bf16.mxu0 0
      %5309 = vmatpush1.bf16.msra.mxu0 0
      %5310 = vmatprep.subr.bf16.mxu0 0
      %5311 = vmatpush1.bf16.msra.mxu0 0
      %5312 = vmatprep.subr.bf16.mxu0 0
      %5313 = vmatpush1.bf16.msra.mxu0 0
      %5314 = vmatprep.subr.bf16.mxu0 0
      %5315 = vmatpush1.bf16.msra.mxu0 0
      %5316 = vmatprep.mubr.bf16.mxu0 0
      %5317 = vmatmul.mubr.bf16.gmra.mrb[0].mxu0 %v5183
      %v5318 = vpop.f32.mrb[0].mxu0
      %v5319 = vadd.f32 0.0, %v5318
      %v5320 = vpop.f32.mrb[0].mxu0
      %v5321 = vpop.f32.mrb[0].mxu0
      %v5322 = vadd.f32 0.0, %v5321
      %v5323 = vpop.f32.mrb[0].mxu0
      %5324 = vmatprep.mubr.bf16.mxu0 0
      %5325 = vmatmul.mubr.bf16.gmra.mrb[0].mxu0 %v5185
      %v5326 = vpop.f32.mrb[0].mxu0
      %v5327 = vadd.f32 0.0, %v5326
      %v5328 = vpop.f32.mrb[0].mxu0
      %v5329 = vpop.f32.mrb[0].mxu0
      %v5330 = vadd.f32 0.0, %v5329
      %v5331 = vpop.f32.mrb[0].mxu0
      %5332 = vmatprep.mubr.bf16.mxu0 0
      %5333 = vmatmul.mubr.bf16.gmra.mrb[0].mxu0 %v5187
      %v5334 = vpop.f32.mrb[0].mxu0
      %v5335 = vadd.f32 0.0, %v5334
      %v5336 = vpop.f32.mrb[0].mxu0
      %v5337 = vpop.f32.mrb[0].mxu0
      %v5338 = vadd.f32 0.0, %v5337
      %v5339 = vpop.f32.mrb[0].mxu0
      %5340 = vmatprep.mubr.bf16.mxu0 0
      %5341 = vmatmul.mubr.bf16.gmra.mrb[0].mxu0 %v5189
      %v5342 = vpop.f32.mrb[0].mxu0
      %v5343 = vadd.f32 0.0, %v5342
      %v5344 = vpop.f32.mrb[0].mxu0
      %v5345 = vpop.f32.mrb[0].mxu0
      %v5346 = vadd.f32 0.0, %v5345
      %v5347 = vpop.f32.mrb[0].mxu0
      %5348 = vmatprep.mubr.bf16.mxu0 0
      %5349 = vmatmul.mubr.bf16.gmra.mrb[0].mxu0 %v5191
      %v5350 = vpop.f32.mrb[0].mxu0
      %v5351 = vadd.f32 0.0, %v5350
      %v5352 = vpop.f32.mrb[0].mxu0
      %v5353 = vpop.f32.mrb[0].mxu0
      %v5354 = vadd.f32 0.0, %v5353
      %v5355 = vpop.f32.mrb[0].mxu0
      %5356 = vmatprep.mubr.bf16.mxu0 0
      %5357 = vmatmul.mubr.bf16.gmra.mrb[0].mxu0 %v5193
      %v5358 = vpop.f32.mrb[0].mxu0
      %v5359 = vadd.f32 0.0, %v5358
      %v5360 = vpop.f32.mrb[0].mxu0
      %v5361 = vpop.f32.mrb[0].mxu0
      %v5362 = vadd.f32 0.0, %v5361
      %v5363 = vpop.f32.mrb[0].mxu0
      %5364 = vmatprep.mubr.bf16.mxu0 0
      %5365 = vmatmul.mubr.bf16.gmra.mrb[0].mxu0 %v5195
      %v5366 = vpop.f32.mrb[0].mxu0
      %v5367 = vadd.f32 0.0, %v5366
      %v5368 = vpop.f32.mrb[0].mxu0
      %v5369 = vpop.f32.mrb[0].mxu0
      %v5370 = vadd.f32 0.0, %v5369
      %v5371 = vpop.f32.mrb[0].mxu0
      %5372 = vmatprep.mubr.bf16.mxu0 0
      %5373 = vmatmul.mubr.bf16.gmra.mrb[0].mxu0 %v5197
      %v5374 = vpop.f32.mrb[0].mxu0
      %v5375 = vadd.f32 0.0, %v5374
      %v5376 = vpop.f32.mrb[0].mxu0
      %v5377 = vpop.f32.mrb[0].mxu0
      %v5378 = vadd.f32 0.0, %v5377
      %v5379 = vpop.f32.mrb[0].mxu0
      %5380 = vmatprep.mubr.bf16.mxu0 0
      %5381 = vmatmul.mubr.bf16.gmra.mrb[0].mxu0 %v5199
      %v5382 = vpop.f32.mrb[0].mxu0
      %v5383 = vadd.f32 0.0, %v5382
      %v5384 = vpop.f32.mrb[0].mxu0
      %v5385 = vpop.f32.mrb[0].mxu0
      %v5386 = vadd.f32 0.0, %v5385
      %v5387 = vpop.f32.mrb[0].mxu0
      %5388 = vmatprep.mubr.bf16.mxu0 0
      %5389 = vmatmul.mubr.bf16.gmra.mrb[0].mxu0 %v5201
      %v5390 = vpop.f32.mrb[0].mxu0
      %v5391 = vadd.f32 0.0, %v5390
      %v5392 = vpop.f32.mrb[0].mxu0
      %v5393 = vpop.f32.mrb[0].mxu0
      %v5394 = vadd.f32 0.0, %v5393
      %v5395 = vpop.f32.mrb[0].mxu0
      %5396 = vmatprep.mubr.bf16.mxu0 0
      %5397 = vmatmul.mubr.bf16.gmra.mrb[0].mxu0 %v5203
      %v5398 = vpop.f32.mrb[0].mxu0
      %v5399 = vadd.f32 0.0, %v5398
      %v5400 = vpop.f32.mrb[0].mxu0
      %v5401 = vpop.f32.mrb[0].mxu0
      %v5402 = vadd.f32 0.0, %v5401
      %v5403 = vpop.f32.mrb[0].mxu0
      %5404 = vmatprep.mubr.bf16.mxu0 0
      %5405 = vmatmul.mubr.bf16.gmra.mrb[0].mxu0 %v5205
      %v5406 = vpop.f32.mrb[0].mxu0
      %v5407 = vadd.f32 0.0, %v5406
      %v5408 = vpop.f32.mrb[0].mxu0
      %v5409 = vpop.f32.mrb[0].mxu0
      %v5410 = vadd.f32 0.0, %v5409
      %v5411 = vpop.f32.mrb[0].mxu0
      %5412 = vmatprep.mubr.bf16.mxu0 0
      %5413 = vmatmul.mubr.bf16.gmra.mrb[0].mxu0 %v5207
      %v5414 = vpop.f32.mrb[0].mxu0
      %v5415 = vadd.f32 0.0, %v5414
      %v5416 = vpop.f32.mrb[0].mxu0
      %v5417 = vpop.f32.mrb[0].mxu0
      %v5418 = vadd.f32 0.0, %v5417
      %v5419 = vpop.f32.mrb[0].mxu0
      %5420 = vmatprep.mubr.bf16.mxu0 0
      %5421 = vmatmul.mubr.bf16.gmra.mrb[0].mxu0 %v5209
      %v5422 = vpop.f32.mrb[0].mxu0
      %v5423 = vadd.f32 0.0, %v5422
      %v5424 = vpop.f32.mrb[0].mxu0
      %v5425 = vpop.f32.mrb[0].mxu0
      %v5426 = vadd.f32 0.0, %v5425
      %v5427 = vpop.f32.mrb[0].mxu0
      %5428 = vmatprep.mubr.bf16.mxu0 0
      %5429 = vmatmul.mubr.bf16.gmra.mrb[0].mxu0 %v5211
      %v5430 = vpop.f32.mrb[0].mxu0
      %v5431 = vadd.f32 0.0, %v5430
      %v5432 = vpop.f32.mrb[0].mxu0
      %v5433 = vpop.f32.mrb[0].mxu0
      %v5434 = vadd.f32 0.0, %v5433
      %v5435 = vpop.f32.mrb[0].mxu0
      %5436 = vmatprep.mubr.bf16.mxu0 0
      %5437 = vmatmul.mubr.bf16.gmra.mrb[0].mxu0 %v5213
      %v5438 = vpop.f32.mrb[0].mxu0
      %v5439 = vadd.f32 0.0, %v5438
      %v5440 = vpop.f32.mrb[0].mxu0
      %v5441 = vpop.f32.mrb[0].mxu0
      %v5442 = vadd.f32 0.0, %v5441
      %v5443 = vpop.f32.mrb[0].mxu0
      %5444 = vmatprep.mubr.bf16.mxu0 0
      %5445 = vmatmul.mubr.bf16.gmra.mrb[0].mxu0 %v5215
      %v5446 = vpop.f32.mrb[0].mxu0
      %v5447 = vadd.f32 0.0, %v5446
      %v5448 = vpop.f32.mrb[0].mxu0
      %v5449 = vpop.f32.mrb[0].mxu0
      %v5450 = vadd.f32 0.0, %v5449
      %v5451 = vpop.f32.mrb[0].mxu0
      %5452 = vmatprep.mubr.bf16.mxu0 0
      %5453 = vmatmul.mubr.bf16.gmra.mrb[0].mxu0 %v5217
      %v5454 = vpop.f32.mrb[0].mxu0
      %v5455 = vadd.f32 0.0, %v5454
      %v5456 = vpop.f32.mrb[0].mxu0
      %v5457 = vpop.f32.mrb[0].mxu0
      %v5458 = vadd.f32 0.0, %v5457
      %v5459 = vpop.f32.mrb[0].mxu0
      %5460 = vdwg.mxu0
      %v5461 = vadd.f32 %v5123, %v5319
      %v5462 = vadd.f32 %v5124, %v5322
      %v5463 = vadd.f32 %v5125, %v5327
      %v5464 = vadd.f32 %v5126, %v5330
      %v5465 = vadd.f32 %v5127, %v5335
      %v5466 = vadd.f32 %v5128, %v5338
      %v5467 = vadd.f32 %v5129, %v5343
      %v5468 = vadd.f32 %v5130, %v5346
      %v5469 = vadd.f32 %v5131, %v5351
      %v5470 = vadd.f32 %v5132, %v5354
      %v5471 = vadd.f32 %v5133, %v5359
      %v5472 = vadd.f32 %v5134, %v5362
      %v5473 = vadd.f32 %v5135, %v5367
      %v5474 = vadd.f32 %v5136, %v5370
      %v5475 = vadd.f32 %v5137, %v5375
      %v5476 = vadd.f32 %v5138, %v5378
      %v5477 = vadd.f32 %v5139, %v5383
      %v5478 = vadd.f32 %v5140, %v5386
      %v5479 = vadd.f32 %v5141, %v5391
      %v5480 = vadd.f32 %v5142, %v5394
      %v5481 = vadd.f32 %v5143, %v5399
      %v5482 = vadd.f32 %v5144, %v5402
      %v5483 = vadd.f32 %v5145, %v5407
      %v5484 = vadd.f32 %v5146, %v5410
      %v5485 = vadd.f32 %v5147, %v5415
      %v5486 = vadd.f32 %v5148, %v5418
      %v5487 = vadd.f32 %v5149, %v5423
      %v5488 = vadd.f32 %v5150, %v5426
      %v5489 = vadd.f32 %v5151, %v5431
      %v5490 = vadd.f32 %v5152, %v5434
      %v5491 = vadd.f32 %v5153, %v5439
      %v5492 = vadd.f32 %v5154, %v5442
      %v5493 = vadd.f32 %v5155, %v5447
      %v5494 = vadd.f32 %v5156, %v5450
      %v5495 = vadd.f32 %v5157, %v5455
      %v5496 = vadd.f32 %v5158, %v5458
      %v5497 = vld [vmem:[%s429] sm:$0x1]
      %v5499 = vlaneseq
      %v5500 = vshrl.u32 %v5499, 7
      %v5501 = vsub.s32 0, %v5500
      %v5502 = vrot.slane %v5497, %v5501
      %v5504 = vmul.f32 %v5461, %v5502
      %v5505 = vmul.f32 %v5462, %v5502
      %v5506 = vmul.f32 %v5463, %v5502
      %v5507 = vmul.f32 %v5464, %v5502
      %v5508 = vmul.f32 %v5465, %v5502
      %v5509 = vmul.f32 %v5466, %v5502
      %v5510 = vmul.f32 %v5467, %v5502
      %v5511 = vmul.f32 %v5468, %v5502
      %v5512 = vmul.f32 %v5469, %v5502
      %v5513 = vmul.f32 %v5470, %v5502
      %v5514 = vmul.f32 %v5471, %v5502
      %v5515 = vmul.f32 %v5472, %v5502
      %v5516 = vmul.f32 %v5473, %v5502
      %v5517 = vmul.f32 %v5474, %v5502
      %v5518 = vmul.f32 %v5475, %v5502
      %v5519 = vmul.f32 %v5476, %v5502
      %v5520 = vmul.f32 %v5477, %v5502
      %v5521 = vmul.f32 %v5478, %v5502
      %v5522 = vmul.f32 %v5479, %v5502
      %v5523 = vmul.f32 %v5480, %v5502
      %v5524 = vmul.f32 %v5481, %v5502
      %v5525 = vmul.f32 %v5482, %v5502
      %v5526 = vmul.f32 %v5483, %v5502
      %v5527 = vmul.f32 %v5484, %v5502
      %v5528 = vmul.f32 %v5485, %v5502
      %v5529 = vmul.f32 %v5486, %v5502
      %v5530 = vmul.f32 %v5487, %v5502
      %v5531 = vmul.f32 %v5488, %v5502
      %v5532 = vmul.f32 %v5489, %v5502
      %v5533 = vmul.f32 %v5490, %v5502
      %v5534 = vmul.f32 %v5491, %v5502
      %v5535 = vmul.f32 %v5492, %v5502
      %v5536 = vmul.f32 %v5493, %v5502
      %v5537 = vmul.f32 %v5494, %v5502
      %v5538 = vmul.f32 %v5495, %v5502
      %v5539 = vmul.f32 %v5496, %v5502
      %v5540 = vld [vmem:[%s432] sm:$0x1]
      %v5542 = vlaneseq
      %v5543 = vshrl.u32 %v5542, 7
      %v5544 = vsub.s32 0, %v5543
      %v5545 = vrot.slane %v5540, %v5544
      %v5547 = vadd.f32 %v5504, %v5545
      %v5548 = vadd.f32 %v5505, %v5545
      %v5549 = vadd.f32 %v5506, %v5545
      %v5550 = vadd.f32 %v5507, %v5545
      %v5551 = vadd.f32 %v5508, %v5545
      %v5552 = vadd.f32 %v5509, %v5545
      %v5553 = vadd.f32 %v5510, %v5545
      %v5554 = vadd.f32 %v5511, %v5545
      %v5555 = vadd.f32 %v5512, %v5545
      %v5556 = vadd.f32 %v5513, %v5545
      %v5557 = vadd.f32 %v5514, %v5545
      %v5558 = vadd.f32 %v5515, %v5545
      %v5559 = vadd.f32 %v5516, %v5545
      %v5560 = vadd.f32 %v5517, %v5545
      %v5561 = vadd.f32 %v5518, %v5545
      %v5562 = vadd.f32 %v5519, %v5545
      %v5563 = vadd.f32 %v5520, %v5545
      %v5564 = vadd.f32 %v5521, %v5545
      %v5565 = vadd.f32 %v5522, %v5545
      %v5566 = vadd.f32 %v5523, %v5545
      %v5567 = vadd.f32 %v5524, %v5545
      %v5568 = vadd.f32 %v5525, %v5545
      %v5569 = vadd.f32 %v5526, %v5545
      %v5570 = vadd.f32 %v5527, %v5545
      %v5571 = vadd.f32 %v5528, %v5545
      %v5572 = vadd.f32 %v5529, %v5545
      %v5573 = vadd.f32 %v5530, %v5545
      %v5574 = vadd.f32 %v5531, %v5545
      %v5575 = vadd.f32 %v5532, %v5545
      %v5576 = vadd.f32 %v5533, %v5545
      %v5577 = vadd.f32 %v5534, %v5545
      %v5578 = vadd.f32 %v5535, %v5545
      %v5579 = vadd.f32 %v5536, %v5545
      %v5580 = vadd.f32 %v5537, %v5545
      %v5581 = vadd.f32 %v5538, %v5545
      %v5582 = vadd.f32 %v5539, %v5545
      %v5583 = vxor.u32 %v5547, 2147483648
      %v5584 = vxor.u32 %v5548, 2147483648
      %v5585 = vxor.u32 %v5549, 2147483648
      %v5586 = vxor.u32 %v5550, 2147483648
      %v5587 = vxor.u32 %v5551, 2147483648
      %v5588 = vxor.u32 %v5552, 2147483648
      %v5589 = vxor.u32 %v5553, 2147483648
      %v5590 = vxor.u32 %v5554, 2147483648
      %v5591 = vxor.u32 %v5555, 2147483648
      %v5592 = vxor.u32 %v5556, 2147483648
      %v5593 = vxor.u32 %v5557, 2147483648
      %v5594 = vxor.u32 %v5558, 2147483648
      %v5595 = vxor.u32 %v5559, 2147483648
      %v5596 = vxor.u32 %v5560, 2147483648
      %v5597 = vxor.u32 %v5561, 2147483648
      %v5598 = vxor.u32 %v5562, 2147483648
      %v5599 = vxor.u32 %v5563, 2147483648
      %v5600 = vxor.u32 %v5564, 2147483648
      %v5601 = vxor.u32 %v5565, 2147483648
      %v5602 = vxor.u32 %v5566, 2147483648
      %v5603 = vxor.u32 %v5567, 2147483648
      %v5604 = vxor.u32 %v5568, 2147483648
      %v5605 = vxor.u32 %v5569, 2147483648
      %v5606 = vxor.u32 %v5570, 2147483648
      %v5607 = vxor.u32 %v5571, 2147483648
      %v5608 = vxor.u32 %v5572, 2147483648
      %v5609 = vxor.u32 %v5573, 2147483648
      %v5610 = vxor.u32 %v5574, 2147483648
      %v5611 = vxor.u32 %v5575, 2147483648
      %v5612 = vxor.u32 %v5576, 2147483648
      %v5613 = vxor.u32 %v5577, 2147483648
      %v5614 = vxor.u32 %v5578, 2147483648
      %v5615 = vxor.u32 %v5579, 2147483648
      %v5616 = vxor.u32 %v5580, 2147483648
      %v5617 = vxor.u32 %v5581, 2147483648
      %v5618 = vxor.u32 %v5582, 2147483648
      %v5619 = vmul.f32 %v5583, 1.442695
      %v5620 = vpow.pop %v5619
      %v5621 = vmul.f32 %v5584, 1.442695
      %v5622 = vpow.pop %v5621
      %v5623 = vmul.f32 %v5585, 1.442695
      %v5624 = vpow.pop %v5623
      %v5625 = vmul.f32 %v5586, 1.442695
      %v5626 = vpow.pop %v5625
      %v5627 = vmul.f32 %v5587, 1.442695
      %v5628 = vpow.pop %v5627
      %v5629 = vmul.f32 %v5588, 1.442695
      %v5630 = vpow.pop %v5629
      %v5631 = vmul.f32 %v5589, 1.442695
      %v5632 = vpow.pop %v5631
      %v5633 = vmul.f32 %v5590, 1.442695
      %v5634 = vpow.pop %v5633
      %v5635 = vmul.f32 %v5591, 1.442695
      %v5636 = vpow.pop %v5635
      %v5637 = vmul.f32 %v5592, 1.442695
      %v5638 = vpow.pop %v5637
      %v5639 = vmul.f32 %v5593, 1.442695
      %v5640 = vpow.pop %v5639
      %v5641 = vmul.f32 %v5594, 1.442695
      %v5642 = vpow.pop %v5641
      %v5643 = vmul.f32 %v5595, 1.442695
      %v5644 = vpow.pop %v5643
      %v5645 = vmul.f32 %v5596, 1.442695
      %v5646 = vpow.pop %v5645
      %v5647 = vmul.f32 %v5597, 1.442695
      %v5648 = vpow.pop %v5647
      %v5649 = vmul.f32 %v5598, 1.442695
      %v5650 = vpow.pop %v5649
      %v5651 = vmul.f32 %v5599, 1.442695
      %v5652 = vpow.pop %v5651
      %v5653 = vmul.f32 %v5600, 1.442695
      %v5654 = vpow.pop %v5653
      %v5655 = vmul.f32 %v5601, 1.442695
      %v5656 = vpow.pop %v5655
      %v5657 = vmul.f32 %v5602, 1.442695
      %v5658 = vpow.pop %v5657
      %v5659 = vmul.f32 %v5603, 1.442695
      %v5660 = vpow.pop %v5659
      %v5661 = vmul.f32 %v5604, 1.442695
      %v5662 = vpow.pop %v5661
      %v5663 = vmul.f32 %v5605, 1.442695
      %v5664 = vpow.pop %v5663
      %v5665 = vmul.f32 %v5606, 1.442695
      %v5666 = vpow.pop %v5665
      %v5667 = vmul.f32 %v5607, 1.442695
      %v5668 = vpow.pop %v5667
      %v5669 = vmul.f32 %v5608, 1.442695
      %v5670 = vpow.pop %v5669
      %v5671 = vmul.f32 %v5609, 1.442695
      %v5672 = vpow.pop %v5671
      %v5673 = vmul.f32 %v5610, 1.442695
      %v5674 = vpow.pop %v5673
      %v5675 = vmul.f32 %v5611, 1.442695
      %v5676 = vpow.pop %v5675
      %v5677 = vmul.f32 %v5612, 1.442695
      %v5678 = vpow.pop %v5677
      %v5679 = vmul.f32 %v5613, 1.442695
      %v5680 = vpow.pop %v5679
      %v5681 = vmul.f32 %v5614, 1.442695
      %v5682 = vpow.pop %v5681
      %v5683 = vmul.f32 %v5615, 1.442695
      %v5684 = vpow.pop %v5683
      %v5685 = vmul.f32 %v5616, 1.442695
      %v5686 = vpow.pop %v5685
      %v5687 = vmul.f32 %v5617, 1.442695
      %v5688 = vpow.pop %v5687
      %v5689 = vmul.f32 %v5618, 1.442695
      %v5690 = vpow.pop %v5689
      %v5691 = vadd.f32 %v5620, 1.0
      %v5692 = vadd.f32 %v5622, 1.0
      %v5693 = vadd.f32 %v5624, 1.0
      %v5694 = vadd.f32 %v5626, 1.0
      %v5695 = vadd.f32 %v5628, 1.0
      %v5696 = vadd.f32 %v5630, 1.0
      %v5697 = vadd.f32 %v5632, 1.0
      %v5698 = vadd.f32 %v5634, 1.0
      %v5699 = vadd.f32 %v5636, 1.0
      %v5700 = vadd.f32 %v5638, 1.0
      %v5701 = vadd.f32 %v5640, 1.0
      %v5702 = vadd.f32 %v5642, 1.0
      %v5703 = vadd.f32 %v5644, 1.0
      %v5704 = vadd.f32 %v5646, 1.0
      %v5705 = vadd.f32 %v5648, 1.0
      %v5706 = vadd.f32 %v5650, 1.0
      %v5707 = vadd.f32 %v5652, 1.0
      %v5708 = vadd.f32 %v5654, 1.0
      %v5709 = vadd.f32 %v5656, 1.0
      %v5710 = vadd.f32 %v5658, 1.0
      %v5711 = vadd.f32 %v5660, 1.0
      %v5712 = vadd.f32 %v5662, 1.0
      %v5713 = vadd.f32 %v5664, 1.0
      %v5714 = vadd.f32 %v5666, 1.0
      %v5715 = vadd.f32 %v5668, 1.0
      %v5716 = vadd.f32 %v5670, 1.0
      %v5717 = vadd.f32 %v5672, 1.0
      %v5718 = vadd.f32 %v5674, 1.0
      %v5719 = vadd.f32 %v5676, 1.0
      %v5720 = vadd.f32 %v5678, 1.0
      %v5721 = vadd.f32 %v5680, 1.0
      %v5722 = vadd.f32 %v5682, 1.0
      %v5723 = vadd.f32 %v5684, 1.0
      %v5724 = vadd.f32 %v5686, 1.0
      %v5725 = vadd.f32 %v5688, 1.0
      %v5726 = vadd.f32 %v5690, 1.0
      %v5727 = vrcp.pop %v5691
      %v5728 = vmul.f32 1.0, %v5727
      %v5729 = vrcp.pop %v5692
      %v5730 = vmul.f32 1.0, %v5729
      %v5731 = vrcp.pop %v5693
      %v5732 = vmul.f32 1.0, %v5731
      %v5733 = vrcp.pop %v5694
      %v5734 = vmul.f32 1.0, %v5733
      %v5735 = vrcp.pop %v5695
      %v5736 = vmul.f32 1.0, %v5735
      %v5737 = vrcp.pop %v5696
      %v5738 = vmul.f32 1.0, %v5737
      %v5739 = vrcp.pop %v5697
      %v5740 = vmul.f32 1.0, %v5739
      %v5741 = vrcp.pop %v5698
      %v5742 = vmul.f32 1.0, %v5741
      %v5743 = vrcp.pop %v5699
      %v5744 = vmul.f32 1.0, %v5743
      %v5745 = vrcp.pop %v5700
      %v5746 = vmul.f32 1.0, %v5745
      %v5747 = vrcp.pop %v5701
      %v5748 = vmul.f32 1.0, %v5747
      %v5749 = vrcp.pop %v5702
      %v5750 = vmul.f32 1.0, %v5749
      %v5751 = vrcp.pop %v5703
      %v5752 = vmul.f32 1.0, %v5751
      %v5753 = vrcp.pop %v5704
      %v5754 = vmul.f32 1.0, %v5753
      %v5755 = vrcp.pop %v5705
      %v5756 = vmul.f32 1.0, %v5755
      %v5757 = vrcp.pop %v5706
      %v5758 = vmul.f32 1.0, %v5757
      %v5759 = vrcp.pop %v5707
      %v5760 = vmul.f32 1.0, %v5759
      %v5761 = vrcp.pop %v5708
      %v5762 = vmul.f32 1.0, %v5761
      %v5763 = vrcp.pop %v5709
      %v5764 = vmul.f32 1.0, %v5763
      %v5765 = vrcp.pop %v5710
      %v5766 = vmul.f32 1.0, %v5765
      %v5767 = vrcp.pop %v5711
      %v5768 = vmul.f32 1.0, %v5767
      %v5769 = vrcp.pop %v5712
      %v5770 = vmul.f32 1.0, %v5769
      %v5771 = vrcp.pop %v5713
      %v5772 = vmul.f32 1.0, %v5771
      %v5773 = vrcp.pop %v5714
      %v5774 = vmul.f32 1.0, %v5773
      %v5775 = vrcp.pop %v5715
      %v5776 = vmul.f32 1.0, %v5775
      %v5777 = vrcp.pop %v5716
      %v5778 = vmul.f32 1.0, %v5777
      %v5779 = vrcp.pop %v5717
      %v5780 = vmul.f32 1.0, %v5779
      %v5781 = vrcp.pop %v5718
      %v5782 = vmul.f32 1.0, %v5781
      %v5783 = vrcp.pop %v5719
      %v5784 = vmul.f32 1.0, %v5783
      %v5785 = vrcp.pop %v5720
      %v5786 = vmul.f32 1.0, %v5785
      %v5787 = vrcp.pop %v5721
      %v5788 = vmul.f32 1.0, %v5787
      %v5789 = vrcp.pop %v5722
      %v5790 = vmul.f32 1.0, %v5789
      %v5791 = vrcp.pop %v5723
      %v5792 = vmul.f32 1.0, %v5791
      %v5793 = vrcp.pop %v5724
      %v5794 = vmul.f32 1.0, %v5793
      %v5795 = vrcp.pop %v5725
      %v5796 = vmul.f32 1.0, %v5795
      %v5797 = vrcp.pop %v5726
      %v5798 = vmul.f32 1.0, %v5797
      %v5799 = vmul.f32 %v5547, %v5728
      %v5800 = vmul.f32 %v5548, %v5730
      %v5801 = vmul.f32 %v5549, %v5732
      %v5802 = vmul.f32 %v5550, %v5734
      %v5803 = vmul.f32 %v5551, %v5736
      %v5804 = vmul.f32 %v5552, %v5738
      %v5805 = vmul.f32 %v5553, %v5740
      %v5806 = vmul.f32 %v5554, %v5742
      %v5807 = vmul.f32 %v5555, %v5744
      %v5808 = vmul.f32 %v5556, %v5746
      %v5809 = vmul.f32 %v5557, %v5748
      %v5810 = vmul.f32 %v5558, %v5750
      %v5811 = vmul.f32 %v5559, %v5752
      %v5812 = vmul.f32 %v5560, %v5754
      %v5813 = vmul.f32 %v5561, %v5756
      %v5814 = vmul.f32 %v5562, %v5758
      %v5815 = vmul.f32 %v5563, %v5760
      %v5816 = vmul.f32 %v5564, %v5762
      %v5817 = vmul.f32 %v5565, %v5764
      %v5818 = vmul.f32 %v5566, %v5766
      %v5819 = vmul.f32 %v5567, %v5768
      %v5820 = vmul.f32 %v5568, %v5770
      %v5821 = vmul.f32 %v5569, %v5772
      %v5822 = vmul.f32 %v5570, %v5774
      %v5823 = vmul.f32 %v5571, %v5776
      %v5824 = vmul.f32 %v5572, %v5778
      %v5825 = vmul.f32 %v5573, %v5780
      %v5826 = vmul.f32 %v5574, %v5782
      %v5827 = vmul.f32 %v5575, %v5784
      %v5828 = vmul.f32 %v5576, %v5786
      %v5829 = vmul.f32 %v5577, %v5788
      %v5830 = vmul.f32 %v5578, %v5790
      %v5831 = vmul.f32 %v5579, %v5792
      %v5832 = vmul.f32 %v5580, %v5794
      %v5833 = vmul.f32 %v5581, %v5796
      %v5834 = vmul.f32 %v5582, %v5798
      %v5835 = vld [vmem:[%s440] sm:$0xff]
      %v5836 = vld [vmem:[%s440 + $0x8] sm:$0xff]
      %v5837 = vld [vmem:[%s440 + $0x10] sm:$0xff]
      %v5838 = vld [vmem:[%s440 + $0x18] sm:$0xff]
      %v5839 = vld [vmem:[%s440 + $0x20] sm:$0xff]
      %v5840 = vld [vmem:[%s440 + $0x28] sm:$0xff]
      %v5841 = vld [vmem:[%s440 + $0x30] sm:$0xff]
      %v5842 = vld [vmem:[%s440 + $0x38] sm:$0xff]
      %v5843 = vld [vmem:[%s440 + $0x40] sm:$0xff]
      %v5844 = vld [vmem:[%s440 + $0x48] sm:$0xff]
      %v5845 = vld [vmem:[%s440 + $0x50] sm:$0xff]
      %v5846 = vld [vmem:[%s440 + $0x58] sm:$0xff]
      %v5847 = vld [vmem:[%s440 + $0x60] sm:$0xff]
      %v5848 = vld [vmem:[%s440 + $0x68] sm:$0xff]
      %v5849 = vld [vmem:[%s440 + $0x70] sm:$0xff]
      %v5850 = vld [vmem:[%s440 + $0x78] sm:$0xff]
      %v5851 = vld [vmem:[%s440 + $0x80] sm:$0xff]
      %v5852 = vld [vmem:[%s440 + $0x88] sm:$0xff]
      %v5853 = vld [vmem:[%s440 + $0x90] sm:$0xff]
      %v5854 = vld [vmem:[%s440 + $0x98] sm:$0xff]
      %v5855 = vld [vmem:[%s440 + $0xa0] sm:$0xff]
      %v5856 = vld [vmem:[%s440 + $0xa8] sm:$0xff]
      %v5857 = vld [vmem:[%s440 + $0xb0] sm:$0xff]
      %v5858 = vld [vmem:[%s440 + $0xb8] sm:$0xff]
      %v5859 = vld [vmem:[%s440 + $0xc0] sm:$0xff]
      %v5860 = vld [vmem:[%s440 + $0xc8] sm:$0xff]
      %v5861 = vld [vmem:[%s440 + $0xd0] sm:$0xff]
      %v5862 = vld [vmem:[%s440 + $0xd8] sm:$0xff]
      %v5863 = vld [vmem:[%s440 + $0xe0] sm:$0xff]
      %v5864 = vld [vmem:[%s440 + $0xe8] sm:$0xff]
      %v5865 = vld [vmem:[%s440 + $0xf0] sm:$0xff]
      %v5866 = vld [vmem:[%s440 + $0xf8] sm:$0xff]
      %v5867 = vld [vmem:[%s440 + $0x100] sm:$0xff]
      %v5868 = vld [vmem:[%s440 + $0x108] sm:$0xff]
      %v5869 = vld [vmem:[%s440 + $0x110] sm:$0xff]
      %v5870 = vld [vmem:[%s440 + $0x118] sm:$0xff]
      %v5871 = vadd.f32 %v5799, %v5835
      %v5872 = vadd.f32 %v5800, %v5836
      %v5873 = vadd.f32 %v5801, %v5837
      %v5874 = vadd.f32 %v5802, %v5838
      %v5875 = vadd.f32 %v5803, %v5839
      %v5876 = vadd.f32 %v5804, %v5840
      %v5877 = vadd.f32 %v5805, %v5841
      %v5878 = vadd.f32 %v5806, %v5842
      %v5879 = vadd.f32 %v5807, %v5843
      %v5880 = vadd.f32 %v5808, %v5844
      %v5881 = vadd.f32 %v5809, %v5845
      %v5882 = vadd.f32 %v5810, %v5846
      %v5883 = vadd.f32 %v5811, %v5847
      %v5884 = vadd.f32 %v5812, %v5848
      %v5885 = vadd.f32 %v5813, %v5849
      %v5886 = vadd.f32 %v5814, %v5850
      %v5887 = vadd.f32 %v5815, %v5851
      %v5888 = vadd.f32 %v5816, %v5852
      %v5889 = vadd.f32 %v5817, %v5853
      %v5890 = vadd.f32 %v5818, %v5854
      %v5891 = vadd.f32 %v5819, %v5855
      %v5892 = vadd.f32 %v5820, %v5856
      %v5893 = vadd.f32 %v5821, %v5857
      %v5894 = vadd.f32 %v5822, %v5858
      %v5895 = vadd.f32 %v5823, %v5859
      %v5896 = vadd.f32 %v5824, %v5860
      %v5897 = vadd.f32 %v5825, %v5861
      %v5898 = vadd.f32 %v5826, %v5862
      %v5899 = vadd.f32 %v5827, %v5863
      %v5900 = vadd.f32 %v5828, %v5864
      %v5901 = vadd.f32 %v5829, %v5865
      %v5902 = vadd.f32 %v5830, %v5866
      %v5903 = vadd.f32 %v5831, %v5867
      %v5904 = vadd.f32 %v5832, %v5868
      %v5905 = vadd.f32 %v5833, %v5869
      %v5906 = vadd.f32 %v5834, %v5870
      %v5907 = vpack.c.bf16 %v5872, %v5871
      %v5908 = vpack.c.bf16 %v5874, %v5873
      %v5909 = vpack.c.bf16 %v5876, %v5875
      %v5910 = vpack.c.bf16 %v5878, %v5877
      %v5911 = vpack.c.bf16 %v5880, %v5879
      %v5912 = vpack.c.bf16 %v5882, %v5881
      %v5913 = vpack.c.bf16 %v5884, %v5883
      %v5914 = vpack.c.bf16 %v5886, %v5885
      %v5915 = vpack.c.bf16 %v5888, %v5887
      %v5916 = vpack.c.bf16 %v5890, %v5889
      %v5917 = vpack.c.bf16 %v5892, %v5891
      %v5918 = vpack.c.bf16 %v5894, %v5893
      %v5919 = vpack.c.bf16 %v5896, %v5895
      %v5920 = vpack.c.bf16 %v5898, %v5897
      %v5921 = vpack.c.bf16 %v5900, %v5899
      %v5922 = vpack.c.bf16 %v5902, %v5901
      %v5923 = vpack.c.bf16 %v5904, %v5903
      %v5924 = vpack.c.bf16 %v5906, %v5905
      %v5943 = vunpack.c.l.b16 %v5907
      %v5944 = vunpack.c.h.b16 %v5907
      %v5945 = vunpack.c.l.b16 %v5908
      %v5946 = vunpack.c.h.b16 %v5908
      %v5947 = vunpack.c.l.b16 %v5909
      %v5948 = vunpack.c.h.b16 %v5909
      %v5949 = vunpack.c.l.b16 %v5910
      %v5950 = vunpack.c.h.b16 %v5910
      %v5951 = vunpack.c.l.b16 %v5911
      %v5952 = vunpack.c.h.b16 %v5911
      %v5953 = vunpack.c.l.b16 %v5912
      %v5954 = vunpack.c.h.b16 %v5912
      %v5955 = vunpack.c.l.b16 %v5913
      %v5956 = vunpack.c.h.b16 %v5913
      %v5957 = vunpack.c.l.b16 %v5914
      %v5958 = vunpack.c.h.b16 %v5914
      %v5959 = vunpack.c.l.b16 %v5915
      %v5960 = vunpack.c.h.b16 %v5915
      %v5961 = vunpack.c.l.b16 %v5916
      %v5962 = vunpack.c.h.b16 %v5916
      %v5963 = vunpack.c.l.b16 %v5917
      %v5964 = vunpack.c.h.b16 %v5917
      %v5965 = vunpack.c.l.b16 %v5918
      %v5966 = vunpack.c.h.b16 %v5918
      %v5967 = vunpack.c.l.b16 %v5919
      %v5968 = vunpack.c.h.b16 %v5919
      %v5969 = vunpack.c.l.b16 %v5920
      %v5970 = vunpack.c.h.b16 %v5920
      %v5971 = vunpack.c.l.b16 %v5921
      %v5972 = vunpack.c.h.b16 %v5921
      %v5973 = vunpack.c.l.b16 %v5922
      %v5974 = vunpack.c.h.b16 %v5922
      %v5975 = vunpack.c.l.b16 %v5923
      %v5976 = vunpack.c.h.b16 %v5923
      %v5977 = vunpack.c.l.b16 %v5924
      %v5978 = vunpack.c.h.b16 %v5924
      %v5979 = vpack.c.b16 %v5943, %v5943
      %v5980 = vpack.c.b16 %v5944, %v5944
      %v5981 = vpack.c.b16 %v5945, %v5945
      %v5982 = vpack.c.b16 %v5946, %v5946
      %v5983 = vpack.c.b16 %v5947, %v5947
      %v5984 = vpack.c.b16 %v5948, %v5948
      %v5985 = vpack.c.b16 %v5949, %v5949
      %v5986 = vpack.c.b16 %v5950, %v5950
      %v5987 = vpack.c.b16 %v5951, %v5951
      %v5988 = vpack.c.b16 %v5952, %v5952
      %v5989 = vpack.c.b16 %v5953, %v5953
      %v5990 = vpack.c.b16 %v5954, %v5954
      %v5991 = vpack.c.b16 %v5955, %v5955
      %v5992 = vpack.c.b16 %v5956, %v5956
      %v5993 = vpack.c.b16 %v5957, %v5957
      %v5994 = vpack.c.b16 %v5958, %v5958
      %v5995 = vpack.c.b16 %v5959, %v5959
      %v5996 = vpack.c.b16 %v5960, %v5960
      %v5997 = vpack.c.b16 %v5961, %v5961
      %v5998 = vpack.c.b16 %v5962, %v5962
      %v5999 = vpack.c.b16 %v5963, %v5963
      %v6000 = vpack.c.b16 %v5964, %v5964
      %v6001 = vpack.c.b16 %v5965, %v5965
      %v6002 = vpack.c.b16 %v5966, %v5966
      %v6003 = vpack.c.b16 %v5967, %v5967
      %v6004 = vpack.c.b16 %v5968, %v5968
      %v6005 = vpack.c.b16 %v5969, %v5969
      %v6006 = vpack.c.b16 %v5970, %v5970
      %v6007 = vpack.c.b16 %v5971, %v5971
      %v6008 = vpack.c.b16 %v5972, %v5972
      %v6009 = vpack.c.b16 %v5973, %v5973
      %v6010 = vpack.c.b16 %v5974, %v5974
      %v6011 = vpack.c.b16 %v5975, %v5975
      %v6012 = vpack.c.b16 %v5976, %v5976
      %v6013 = vpack.c.b16 %v5977, %v5977
      %v6014 = vpack.c.b16 %v5978, %v5978
      %6051 = vst [vmem:[%s448] sm:$0xf] %v5979
      %6052 = vst [vmem:[%s448 + $0x4] sm:$0xf] %v5980
      %6053 = vst [vmem:[%s448 + $0x8] sm:$0xf] %v5981
      %6054 = vst [vmem:[%s448 + $0xc] sm:$0xf] %v5982
      %6055 = vst [vmem:[%s448 + $0x10] sm:$0xf] %v5983
      %6056 = vst [vmem:[%s448 + $0x14] sm:$0xf] %v5984
      %6057 = vst [vmem:[%s448 + $0x18] sm:$0xf] %v5985
      %6058 = vst [vmem:[%s448 + $0x1c] sm:$0xf] %v5986
      %6059 = vst [vmem:[%s448 + $0x20] sm:$0xf] %v5987
      %6060 = vst [vmem:[%s448 + $0x24] sm:$0xf] %v5988
      %6061 = vst [vmem:[%s448 + $0x28] sm:$0xf] %v5989
      %6062 = vst [vmem:[%s448 + $0x2c] sm:$0xf] %v5990
      %6063 = vst [vmem:[%s448 + $0x30] sm:$0xf] %v5991
      %6064 = vst [vmem:[%s448 + $0x34] sm:$0xf] %v5992
      %6065 = vst [vmem:[%s448 + $0x38] sm:$0xf] %v5993
      %6066 = vst [vmem:[%s448 + $0x3c] sm:$0xf] %v5994
      %6067 = vst [vmem:[%s448 + $0x40] sm:$0xf] %v5995
      %6068 = vst [vmem:[%s448 + $0x44] sm:$0xf] %v5996
      %6069 = vst [vmem:[%s448 + $0x48] sm:$0xf] %v5997
      %6070 = vst [vmem:[%s448 + $0x4c] sm:$0xf] %v5998
      %6071 = vst [vmem:[%s448 + $0x50] sm:$0xf] %v5999
      %6072 = vst [vmem:[%s448 + $0x54] sm:$0xf] %v6000
      %6073 = vst [vmem:[%s448 + $0x58] sm:$0xf] %v6001
      %6074 = vst [vmem:[%s448 + $0x5c] sm:$0xf] %v6002
      %6075 = vst [vmem:[%s448 + $0x60] sm:$0xf] %v6003
      %6076 = vst [vmem:[%s448 + $0x64] sm:$0xf] %v6004
      %6077 = vst [vmem:[%s448 + $0x68] sm:$0xf] %v6005
      %6078 = vst [vmem:[%s448 + $0x6c] sm:$0xf] %v6006
      %6079 = vst [vmem:[%s448 + $0x70] sm:$0xf] %v6007
      %6080 = vst [vmem:[%s448 + $0x74] sm:$0xf] %v6008
      %6081 = vst [vmem:[%s448 + $0x78] sm:$0xf] %v6009
      %6082 = vst [vmem:[%s448 + $0x7c] sm:$0xf] %v6010
      %6083 = vst [vmem:[%s448 + $0x80] sm:$0xf] %v6011
      %6084 = vst [vmem:[%s448 + $0x84] sm:$0xf] %v6012
      %6085 = vst [vmem:[%s448 + $0x88] sm:$0xf] %v6013
      %6086 = vst [vmem:[%s448 + $0x8c] sm:$0xf] %v6014
      %p6087 = scmp.lt.s32.totalorder %s24, 1
      %s6088 = scalar_select %p6087, %s24, 1
      %p6089 = scmp.lt.s32.totalorder %s25, 0
      %s6090 = scalar_select %p6089, %s25, 0
      %s6091 = smul.addr %s6088, 36
      %s6092 = sadd.s32 %s6090, %s6091
      %s6093 = smul.addr %s6092, 4
      %s6094 = scalar_lea.vmem %s9, %s6093
      // Predicated region
      $region61: #{bottleneck_forward.1} parent=55 // pred_check
        %p6095 = pneg %p273
      $region62: #{bottleneck_forward.1} parent=55 // pred_check_branch
        %6097 = sbr.rel (%p6095) target = $region64
      $region63: #{bottleneck_forward.1} parent=55 // pred_region
        _
      $region64: #{bottleneck_forward.1} parent=55 // pred_fallthru
        _
    $region56: #{bottleneck_forward.1} parent=5 // pred_fallthru
      _
    %p6098 = scmp.le.s32.totalorder 2, %s15
    // Predicated region
    $region65: #{bottleneck_forward.1} parent=5 // pred_check
      %p6099 = pneg %p6098
    $region66: #{bottleneck_forward.1} parent=5 // pred_check_branch
      %6101 = sbr.rel (%p6099) target = $region68
    $region67: #{bottleneck_forward.1} parent=5 // pred_region
      %s6102 = ssub.s32 %s15, 2
      // Predicated region
      $region69: #{bottleneck_forward.1} parent=67 // pred_check
        %p6103 = pneg %p279
      $region70: #{bottleneck_forward.1} parent=67 // pred_check_branch
        %6105 = sbr.rel (%p6103) target = $region72
      $region71: #{bottleneck_forward.1} parent=67 // pred_region
        %p6106 = scmp.lt.s32.totalorder %s26, 1
        %s6107 = scalar_select %p6106, %s26, 1
        %p6108 = scmp.lt.s32.totalorder %s27, 0
        %s6109 = scalar_select %p6108, %s27, 0
        %s6110 = smul.addr %s6107, 36
        %s6111 = sadd.s32 %s6109, %s6110
        %s6112 = smul.addr %s6111, 4
        %s6113 = scalar_lea.vmem %s9, %s6112
      $region72: #{bottleneck_forward.1} parent=67 // pred_fallthru
        _
    $region68: #{bottleneck_forward.1} parent=5 // pred_fallthru
      _
  $region6: #{bottleneck_forward.1} parent=0 // loop_footer
    %s19 = sadd.s32 1, %s15
  $region7: #{bottleneck_forward.1} parent=0 // loop_footer_branch
    %14 = sbr.rel target = $region3
  $region8: #{bottleneck_forward.1} parent=0 // loop_exit
    _

</llo_original>
